<compile_context>
chip_gen: v7x
topology: tpu7x:2x2x1
jax: 0.10.0
libtpu: 0.0.40
codegen_flags: <defaults>
</compile_context>

<pallas_src>
import functools
import math

import jax
import jax.numpy as jnp
from jax.experimental import pallas as pl
from jax.experimental.pallas import tpu as pltpu

NEG_SLOPE = 0.01   # nn.LeakyReLU default
BN_EPS = 1e-5      # nn.BatchNorm2d default
_TILE_CAP = 512    # ~85% of HBM roofline per measured Pallas tiling data


# ---------------------------------------------------------------------------
# Kernels
# ---------------------------------------------------------------------------
def _lrelu(y):
    return jnp.where(y > 0, y, NEG_SLOPE * y)


def matmul_bias_kernel(x_ref, w_ref, b_ref, o_ref):
    # x: (TM, K) bf16, w: (K, N) bf16, b: (1, N) f32 -> o: (TM, N) o_ref.dtype
    y = jnp.dot(x_ref[...], w_ref[...],
                preferred_element_type=jnp.float32) + b_ref[...]
    o_ref[...] = y.astype(o_ref.dtype)


def matmul_bias_lrelu_kernel(x_ref, w_ref, b_ref, o_ref):
    y = jnp.dot(x_ref[...], w_ref[...],
                preferred_element_type=jnp.float32) + b_ref[...]
    o_ref[...] = _lrelu(y).astype(o_ref.dtype)


def conv_stats_kernel(x_ref, w_ref, raw_ref, stats_ref):
    # Pass 1 of conv3x3+BN: tiled deep-K matmul; writes raw conv output (bf16)
    # and accumulates global per-channel sum / sum-of-squares into a resident
    # (2, Cout) output block (same block index for every grid step).
    @pl.when(pl.program_id(0) == 0)
    def _():
        stats_ref[...] = jnp.zeros_like(stats_ref)

    acc = jnp.dot(x_ref[...], w_ref[...], preferred_element_type=jnp.float32)
    raw_ref[...] = acc.astype(raw_ref.dtype)
    s = jnp.sum(acc, axis=0, keepdims=True)
    q = jnp.sum(acc * acc, axis=0, keepdims=True)
    stats_ref[...] = stats_ref[...] + jnp.concatenate([s, q], axis=0)


def bn_apply_lrelu_kernel(x_ref, stats_ref, g_ref, b_ref, o_ref, *, inv_m):
    # Pass 2: apply BatchNorm (global batch stats, biased var) + LeakyReLU.
    # inv_m = 1 / (true M) is baked in (zero-padded rows contributed 0 to sums).
    st = stats_ref[...]
    mu = st[0:1, :] * inv_m
    var = jnp.maximum(st[1:2, :] * inv_m - mu * mu, 0.0)
    scale = jax.lax.rsqrt(var + BN_EPS) * g_ref[...]
    shift = b_ref[...] - mu * scale
    y = x_ref[...].astype(jnp.float32) * scale + shift
    o_ref[...] = _lrelu(y).astype(o_ref.dtype)


# ---------------------------------------------------------------------------
# Tiling / VMEM helpers
# ---------------------------------------------------------------------------
def _round_up(x, m):
    return (x + m - 1) // m * m


def _choose_tile(m):
    """Pick a row tile <= _TILE_CAP (multiple of 8) and the padded extent."""
    if m <= _TILE_CAP:
        t = _round_up(m, 8)
        return t, t
    nt = pl.cdiv(m, _TILE_CAP)
    t = _round_up(pl.cdiv(m, nt), 8)
    return t, nt * t


def _pad_rows(x, mp):
    if x.shape[0] == mp:
        return x
    return jnp.pad(x, ((0, mp - x.shape[0]), (0, 0)))


def _vmem_limit(*specs):
    """2x per-step block bytes (double buffering) + headroom, clamped < 64MiB."""
    nbytes = sum(math.prod(s) * jnp.dtype(d).itemsize for s, d in specs)
    return int(min(max(2 * nbytes + (4 << 20), 16 << 20), 48 << 20))


# ---------------------------------------------------------------------------
# pallas_call wrappers
# ---------------------------------------------------------------------------
def run_matmul_bias(x, w, b, *, lrelu, out_dtype):
    m, k = x.shape
    n = w.shape[1]
    tm, mp = _choose_tile(m)
    xp = _pad_rows(x, mp)
    kernel = matmul_bias_lrelu_kernel if lrelu else matmul_bias_kernel
    out = pl.pallas_call(
        kernel,
        out_shape=jax.ShapeDtypeStruct((mp, n), out_dtype),
        grid=(mp // tm,),
        in_specs=[pl.BlockSpec((tm, k), lambda i: (i, 0)),
                  pl.BlockSpec((k, n), lambda i: (0, 0)),
                  pl.BlockSpec((1, n), lambda i: (0, 0))],
        out_specs=pl.BlockSpec((tm, n), lambda i: (i, 0)),
        compiler_params=pltpu.CompilerParams(
            dimension_semantics=("parallel",),
            vmem_limit_bytes=_vmem_limit(((tm, k), x.dtype), ((k, n), w.dtype),
                                         ((1, n), b.dtype),
                                         ((tm, n), out_dtype))),
    )(xp, w, b)
    return out[:m]


def _im2col_3x3(x_nhwc):
    # TODO(synk): replace with in-kernel halo'd row-block DMA to cut the 9x HBM
    # materialization; at these sizes XLA fuses the pad/concat reasonably.
    b, h, w, c = x_nhwc.shape
    xp = jnp.pad(x_nhwc, ((0, 0), (1, 1), (1, 1), (0, 0)))
    cols = [xp[:, dy:dy + h, dx:dx + w, :] for dy in range(3) for dx in range(3)]
    return jnp.concatenate(cols, axis=-1).reshape(b * h * w, 9 * c)


def conv3x3_bn_lrelu(x_nhwc, wm, gamma, beta):
    """3x3 conv (padding=1, no bias) + BatchNorm (batch stats) + LeakyReLU."""
    b, h, w, cin = x_nhwc.shape
    cout = wm.shape[1]
    m = b * h * w
    k = 9 * cin
    tm, mp = _choose_tile(m)
    xcol = _pad_rows(_im2col_3x3(x_nhwc).astype(jnp.bfloat16), mp)

    # Pass 1: tiled conv matmul + global sum/sumsq accumulation.
    raw, stats = pl.pallas_call(
        conv_stats_kernel,
        out_shape=(jax.ShapeDtypeStruct((mp, cout), jnp.bfloat16),
                   jax.ShapeDtypeStruct((2, cout), jnp.float32)),
        grid=(mp // tm,),
        in_specs=[pl.BlockSpec((tm, k), lambda i: (i, 0)),
                  pl.BlockSpec((k, cout), lambda i: (0, 0))],
        out_specs=(pl.BlockSpec((tm, cout), lambda i: (i, 0)),
                   pl.BlockSpec((2, cout), lambda i: (0, 0))),
        compiler_params=pltpu.CompilerParams(
            dimension_semantics=("arbitrary",),
            vmem_limit_bytes=_vmem_limit(((tm, k), jnp.bfloat16),
                                         ((k, cout), jnp.bfloat16),
                                         ((tm, cout), jnp.bfloat16),
                                         ((2, cout), jnp.float32))),
    )(xcol, wm)

    # Pass 2: apply BN + LeakyReLU (parallel over M tiles; megacore on v7x).
    y = pl.pallas_call(
        functools.partial(bn_apply_lrelu_kernel, inv_m=1.0 / m),
        out_shape=jax.ShapeDtypeStruct((mp, cout), jnp.bfloat16),
        grid=(mp // tm,),
        in_specs=[pl.BlockSpec((tm, cout), lambda i: (i, 0)),
                  pl.BlockSpec((2, cout), lambda i: (0, 0)),
                  pl.BlockSpec((1, cout), lambda i: (0, 0)),
                  pl.BlockSpec((1, cout), lambda i: (0, 0))],
        out_specs=pl.BlockSpec((tm, cout), lambda i: (i, 0)),
        compiler_params=pltpu.CompilerParams(
            dimension_semantics=("parallel",),
            vmem_limit_bytes=_vmem_limit(((tm, cout), jnp.bfloat16),
                                         ((2, cout), jnp.float32),
                                         ((tm, cout), jnp.bfloat16))),
    )(raw, stats, gamma, beta)
    return y[:m].reshape(b, h, w, cout)


def convtranspose2x2_lrelu(x_nhwc, wm, bm):
    """ConvTranspose2d(k=2, s=2) + LeakyReLU as one matmul + depth-to-space."""
    b, h, w, cin = x_nhwc.shape
    cout = wm.shape[1] // 4
    xm = x_nhwc.reshape(b * h * w, cin).astype(jnp.bfloat16)
    ym = run_matmul_bias(xm, wm, bm, lrelu=True, out_dtype=jnp.bfloat16)
    y = ym.reshape(b, h, w, 2, 2, cout)
    y = jnp.transpose(y, (0, 1, 3, 2, 4, 5)).reshape(b, 2 * h, 2 * w, cout)
    return y


def up3_out(x_nhwc, w_up, b_up, w_out, b_out):
    """up3 (ConvTranspose k=2,s=2 + LeakyReLU) followed by the 1x1 `out` conv.

    The 1x1 conv is applied BEFORE the depth-to-space rearrangement (they
    commute), using the free row-major (M, 4*C) -> (4*M, C) reshape between the
    two pallas_calls and a dense (C, OC) weight (no block-diagonal zeros)."""
    b, h, w, cin = x_nhwc.shape
    c = w_up.shape[1] // 4
    oc = w_out.shape[1]
    m = b * h * w
    xm = x_nhwc.reshape(m, cin).astype(jnp.bfloat16)
    hcols = run_matmul_bias(xm, w_up, b_up, lrelu=True,
                            out_dtype=jnp.bfloat16)          # (M, 4*C)
    hrows = hcols.reshape(m * 4, c)                            # free view
    # TODO(synk): lane-dense (..., 128)-viewed output for the OC=1 store; the
    # final tensor is tiny so masked stores are negligible here.
    y = run_matmul_bias(hrows, w_out, b_out, lrelu=False,
                        out_dtype=jnp.float32)                 # (4*M, OC)
    y = y.reshape(b, h, w, 2, 2, oc)
    y = jnp.transpose(y, (0, 1, 3, 2, 4, 5)).reshape(b, 2 * h, 2 * w, oc)
    return y


# ---------------------------------------------------------------------------
# Decoder forward (jitted)
# ---------------------------------------------------------------------------
@functools.partial(jax.jit, static_argnames=("features", "in_shape"))
def decoder_forward(params, x, features, in_shape):
    h8, w8 = in_shape[0] // 8, in_shape[1] // 8
    b = x.shape[0]

    # fc (weight columns pre-permuted to (h, w, f) -> output is NHWC directly).
    y = run_matmul_bias(x.astype(jnp.bfloat16),
                        params["fc_w"], params["fc_b"],
                        lrelu=False, out_dtype=jnp.bfloat16)
    y = y.reshape(b, h8, w8, features)

    # up1 + decoder1
    y = convtranspose2x2_lrelu(y, params["up1_w"], params["up1_b"])
    y = conv3x3_bn_lrelu(y, params["d1c1_w"], params["d1n1_g"], params["d1n1_b"])
    y = conv3x3_bn_lrelu(y, params["d1c2_w"], params["d1n2_g"], params["d1n2_b"])

    # up2 + decoder2
    y = convtranspose2x2_lrelu(y, params["up2_w"], params["up2_b"])
    y = conv3x3_bn_lrelu(y, params["d2c1_w"], params["d2n1_g"], params["d2n1_b"])
    y = conv3x3_bn_lrelu(y, params["d2c2_w"], params["d2n2_g"], params["d2n2_b"])

    # up3 + out (1x1 conv)
    y = up3_out(y, params["up3_w"], params["up3_b"],
                params["out_w"], params["out_b"])

    return jnp.transpose(y, (0, 3, 1, 2)).astype(jnp.float32)   # NCHW, f32


# ---------------------------------------------------------------------------
# Parameter init (PyTorch shapes, synthetic values) + one-time packing
# ---------------------------------------------------------------------------
def init_params(key, features, in_shape, out_channels):
    f = features
    h8, w8 = in_shape[0] // 8, in_shape[1] // 8
    shapes = {
        "fc_w":  (h8 * w8 * f, f), "fc_b": (h8 * w8 * f,),
        "up1_w": (f, f, 2, 2),     "up1_b": (f,),
        "d1c1_w": (f // 2, f, 3, 3),
        "d1n1_g": (f // 2,), "d1n1_b": (f // 2,),
        "d1c2_w": (f // 2, f // 2, 3, 3),
        "d1n2_g": (f // 2,), "d1n2_b": (f // 2,),
        "up2_w": (f // 2, f // 2, 2, 2), "up2_b": (f // 2,),
        "d2c1_w": (f // 4, f // 2, 3, 3),
        "d2n1_g": (f // 4,), "d2n1_b": (f // 4,),
        "d2c2_w": (f // 4, f // 4, 3, 3),
        "d2n2_g": (f // 4,), "d2n2_b": (f // 4,),
        "up3_w": (f // 4, f // 4, 2, 2), "up3_b": (f // 4,),
        "out_w": (out_channels, f // 4, 1, 1), "out_b": (out_channels,),
    }
    params = {}
    keys = jax.random.split(key, len(shapes))
    for (name, shp), k in zip(sorted(shapes.items()), keys):
        if name.endswith("_g"):        # BN gamma ~ 1
            params[name] = 1.0 + 0.1 * jax.random.normal(k, shp, jnp.float32)
        else:
            params[name] = 0.05 * jax.random.normal(k, shp, jnp.float32)
    return params


def pack_params(raw, features, in_shape):
    """One-time packing of PyTorch-shaped weights into kernel-ready layouts."""
    f = features
    h8, w8 = in_shape[0] // 8, in_shape[1] // 8
    p = {}

    # fc: Linear weight (out=F*H8*W8 ordered (f,h,w), in=F).  Permute the output
    # columns to (h, w, f) so the kernel emits NHWC directly, then transpose.
    w = raw["fc_w"].reshape(f, h8, w8, f)            # (f_out, h, w, f_in)
    w = jnp.transpose(w, (1, 2, 0, 3)).reshape(h8 * w8 * f, f)
    p["fc_w"] = w.T.astype(jnp.bfloat16)             # (F_in, H8*W8*F) cols (h,w,f)
    bfc = jnp.transpose(raw["fc_b"].reshape(f, h8, w8), (1, 2, 0))
    p["fc_b"] = bfc.reshape(1, -1).astype(jnp.float32)

    # ConvTranspose2d(k=2,s=2): (Cin, Cout, 2, 2) -> (Cin, 4*Cout), cols (dy,dx,co).
    for up in ("up1", "up2", "up3"):
        w = raw[up + "_w"]
        cin, cout = w.shape[0], w.shape[1]
        p[up + "_w"] = jnp.transpose(w, (0, 2, 3, 1)).reshape(
            cin, 4 * cout).astype(jnp.bfloat16)
        p[up + "_b"] = jnp.tile(raw[up + "_b"], 4).reshape(
            1, 4 * cout).astype(jnp.float32)

    # Conv2d 3x3 no-bias: (Cout, Cin, 3, 3) -> (9*Cin, Cout), rows (dy,dx,cin).
    for conv, norm in (("d1c1", "d1n1"), ("d1c2", "d1n2"),
                       ("d2c1", "d2n1"), ("d2c2", "d2n2")):
        w = raw[conv + "_w"]
        cout, cin = w.shape[0], w.shape[1]
        p[conv + "_w"] = jnp.transpose(w, (2, 3, 1, 0)).reshape(
            9 * cin, cout).astype(jnp.bfloat16)
        p[norm + "_g"] = raw[norm + "_g"].reshape(1, -1).astype(jnp.float32)
        p[norm + "_b"] = raw[norm + "_b"].reshape(1, -1).astype(jnp.float32)

    # 1x1 out conv: dense (C, OC) weight (no block-diagonal zero padding).
    w = raw["out_w"]
    oc, c = w.shape[0], w.shape[1]
    p["out_w"] = w.reshape(oc, c).T.astype(jnp.bfloat16)       # (C, OC)
    p["out_b"] = raw["out_b"].reshape(1, oc).astype(jnp.float32)
    return p


# ---------------------------------------------------------------------------
if __name__ == "__main__":
    B = 2
    features = 32
    in_shape = (16, 16)
    out_channels = 1

    root = jax.random.PRNGKey(0)
    pkey, xkey = jax.random.split(root)
    raw = init_params(pkey, features, in_shape, out_channels)
    params = pack_params(raw, features, in_shape)               # packed once
    x = jax.random.normal(xkey, (B, features), jnp.float32)

    y = decoder_forward(params, x, features, in_shape)
    y = jax.block_until_ready(y)

    assert y.shape == (B, out_channels, in_shape[0], in_shape[1]), y.shape
    assert bool(jnp.all(jnp.isfinite(y)))
    print("KERNEL_OK")
</pallas_src>

<mosaic_0001>
module attributes {stable_mosaic.version = 11 : i64} {
  func.func @matmul_bias_kernel(%arg0: i32, %arg1: memref<8x32xbf16, #tpu.memory_space<vmem>>, %arg2: memref<32x128xbf16, #tpu.memory_space<vmem>>, %arg3: memref<1x128xf32, #tpu.memory_space<vmem>>, %arg4: memref<8x128xbf16, #tpu.memory_space<vmem>>) attributes {dimension_semantics = [#tpu.dimension_semantics<parallel>], iteration_bounds = array<i64: 1>, scalar_prefetch = 0 : i64, scratch_operands = 0 : i64, tpu.core_type = #tpu.core_type<tc>, window_params = [{transform_indices = @transform_0, window_bounds = array<i64: 8, 32>}, {pipeline_mode = #tpu.pipeline_mode<synchronous>, transform_indices = @transform_1, window_bounds = array<i64: 32, 128>}, {pipeline_mode = #tpu.pipeline_mode<synchronous>, transform_indices = @transform_2, window_bounds = array<i64: 1, 128>}, {transform_indices = @transform_3, window_bounds = array<i64: 8, 128>}]} {
    %c0 = arith.constant 0 : index
    %c0_0 = arith.constant 0 : index
    %0 = vector.load %arg1[%c0, %c0_0] : memref<8x32xbf16, #tpu.memory_space<vmem>>, vector<8x32xbf16>
    %c0_1 = arith.constant 0 : index
    %c0_2 = arith.constant 0 : index
    %1 = vector.load %arg2[%c0_1, %c0_2] : memref<32x128xbf16, #tpu.memory_space<vmem>>, vector<32x128xbf16>
    %cst = arith.constant dense<0.000000e+00> : vector<8x128xf32>
    %2 = tpu.matmul %0, %1, %cst {dimension_numbers = #tpu.dot_dimension_numbers<[1], [0], [0], [1], [0, 0, 1, 1], [], []>} : vector<8x32xbf16>, vector<32x128xbf16>, vector<8x128xf32> -> vector<8x128xf32>
    %c0_3 = arith.constant 0 : index
    %c0_4 = arith.constant 0 : index
    %3 = vector.load %arg3[%c0_3, %c0_4] : memref<1x128xf32, #tpu.memory_space<vmem>>, vector<1x128xf32>
    %4 = vector.broadcast %3 : vector<1x128xf32> to vector<8x128xf32>
    %5 = arith.addf %2, %4 : vector<8x128xf32>
    %6 = arith.truncf %5 : vector<8x128xf32> to vector<8x128xbf16>
    %c0_5 = arith.constant 0 : index
    %c0_6 = arith.constant 0 : index
    %7 = vector.load %arg4[%c0_5, %c0_6] : memref<8x128xbf16, #tpu.memory_space<vmem>>, vector<8x128xbf16>
    tpu.vector_store %arg4[%c0_5, %c0_6], %6 {strides = array<i32>} : memref<8x128xbf16, #tpu.memory_space<vmem>>, vector<8x128xbf16>,
    return
  }
  func.func @transform_0(%arg0: i32) -> (i32, i32) {
    %c0_i32 = arith.constant 0 : i32
    %c0_i32_0 = arith.constant 0 : i32
    return %arg0, %c0_i32 : i32, i32
  }
  func.func @transform_1(%arg0: i32) -> (i32, i32) {
    %c0_i32 = arith.constant 0 : i32
    %c0_i32_0 = arith.constant 0 : i32
    %c0_i32_1 = arith.constant 0 : i32
    return %c0_i32, %c0_i32_0 : i32, i32
  }
  func.func @transform_2(%arg0: i32) -> (i32, i32) {
    %c0_i32 = arith.constant 0 : i32
    %c0_i32_0 = arith.constant 0 : i32
    %c0_i32_1 = arith.constant 0 : i32
    return %c0_i32, %c0_i32_0 : i32, i32
  }
  func.func @transform_3(%arg0: i32) -> (i32, i32) {
    %c0_i32 = arith.constant 0 : i32
    %c0_i32_0 = arith.constant 0 : i32
    return %arg0, %c0_i32 : i32, i32
  }
}

module attributes {stable_mosaic.version = 11 : i64} {
  func.func @matmul_bias_lrelu_kernel(%arg0: i32, %arg1: memref<8x32xbf16, #tpu.memory_space<vmem>>, %arg2: memref<32x128xbf16, #tpu.memory_space<vmem>>, %arg3: memref<1x128xf32, #tpu.memory_space<vmem>>, %arg4: memref<8x128xbf16, #tpu.memory_space<vmem>>) attributes {dimension_semantics = [#tpu.dimension_semantics<parallel>], iteration_bounds = array<i64: 1>, scalar_prefetch = 0 : i64, scratch_operands = 0 : i64, tpu.core_type = #tpu.core_type<tc>, window_params = [{transform_indices = @transform_0, window_bounds = array<i64: 8, 32>}, {pipeline_mode = #tpu.pipeline_mode<synchronous>, transform_indices = @transform_1, window_bounds = array<i64: 32, 128>}, {pipeline_mode = #tpu.pipeline_mode<synchronous>, transform_indices = @transform_2, window_bounds = array<i64: 1, 128>}, {transform_indices = @transform_3, window_bounds = array<i64: 8, 128>}]} {
    %c0 = arith.constant 0 : index
    %c0_0 = arith.constant 0 : index
    %0 = vector.load %arg1[%c0, %c0_0] : memref<8x32xbf16, #tpu.memory_space<vmem>>, vector<8x32xbf16>
    %c0_1 = arith.constant 0 : index
    %c0_2 = arith.constant 0 : index
    %1 = vector.load %arg2[%c0_1, %c0_2] : memref<32x128xbf16, #tpu.memory_space<vmem>>, vector<32x128xbf16>
    %cst = arith.constant dense<0.000000e+00> : vector<8x128xf32>
    %2 = tpu.matmul %0, %1, %cst {dimension_numbers = #tpu.dot_dimension_numbers<[1], [0], [0], [1], [0, 0, 1, 1], [], []>} : vector<8x32xbf16>, vector<32x128xbf16>, vector<8x128xf32> -> vector<8x128xf32>
    %c0_3 = arith.constant 0 : index
    %c0_4 = arith.constant 0 : index
    %3 = vector.load %arg3[%c0_3, %c0_4] : memref<1x128xf32, #tpu.memory_space<vmem>>, vector<1x128xf32>
    %4 = vector.broadcast %3 : vector<1x128xf32> to vector<8x128xf32>
    %5 = arith.addf %2, %4 : vector<8x128xf32>
    %cst_5 = arith.constant 0.000000e+00 : f32
    %6 = vector.broadcast %cst_5 : f32 to vector<8x128xf32>
    %7 = arith.cmpf ogt, %5, %6 : vector<8x128xf32>
    %cst_6 = arith.constant 0.00999999977 : f32
    %8 = vector.broadcast %cst_6 : f32 to vector<8x128xf32>
    %9 = arith.mulf %8, %5 : vector<8x128xf32>
    %10 = arith.select %7, %5, %9 : vector<8x128xi1>, vector<8x128xf32>
    %11 = arith.truncf %10 : vector<8x128xf32> to vector<8x128xbf16>
    %c0_7 = arith.constant 0 : index
    %c0_8 = arith.constant 0 : index
    %12 = vector.load %arg4[%c0_7, %c0_8] : memref<8x128xbf16, #tpu.memory_space<vmem>>, vector<8x128xbf16>
    tpu.vector_store %arg4[%c0_7, %c0_8], %11 {strides = array<i32>} : memref<8x128xbf16, #tpu.memory_space<vmem>>, vector<8x128xbf16>,
    return
  }
  func.func @transform_0(%arg0: i32) -> (i32, i32) {
    %c0_i32 = arith.constant 0 : i32
    %c0_i32_0 = arith.constant 0 : i32
    return %arg0, %c0_i32 : i32, i32
  }
  func.func @transform_1(%arg0: i32) -> (i32, i32) {
    %c0_i32 = arith.constant 0 : i32
    %c0_i32_0 = arith.constant 0 : i32
    %c0_i32_1 = arith.constant 0 : i32
    return %c0_i32, %c0_i32_0 : i32, i32
  }
  func.func @transform_2(%arg0: i32) -> (i32, i32) {
    %c0_i32 = arith.constant 0 : i32
    %c0_i32_0 = arith.constant 0 : i32
    %c0_i32_1 = arith.constant 0 : i32
    return %c0_i32, %c0_i32_0 : i32, i32
  }
  func.func @transform_3(%arg0: i32) -> (i32, i32) {
    %c0_i32 = arith.constant 0 : i32
    %c0_i32_0 = arith.constant 0 : i32
    return %arg0, %c0_i32 : i32, i32
  }
}

module attributes {stable_mosaic.version = 11 : i64} {
  func.func @bn_apply_lrelu_kernel(%arg0: i32, %arg1: memref<32x16xbf16, #tpu.memory_space<vmem>>, %arg2: memref<2x16xf32, #tpu.memory_space<vmem>>, %arg3: memref<1x16xf32, #tpu.memory_space<vmem>>, %arg4: memref<1x16xf32, #tpu.memory_space<vmem>>, %arg5: memref<32x16xbf16, #tpu.memory_space<vmem>>) attributes {dimension_semantics = [#tpu.dimension_semantics<parallel>], iteration_bounds = array<i64: 1>, scalar_prefetch = 0 : i64, scratch_operands = 0 : i64, tpu.core_type = #tpu.core_type<tc>, window_params = [{transform_indices = @transform_0, window_bounds = array<i64: 32, 16>}, {pipeline_mode = #tpu.pipeline_mode<synchronous>, transform_indices = @transform_1, window_bounds = array<i64: 2, 16>}, {pipeline_mode = #tpu.pipeline_mode<synchronous>, transform_indices = @transform_2, window_bounds = array<i64: 1, 16>}, {pipeline_mode = #tpu.pipeline_mode<synchronous>, transform_indices = @transform_3, window_bounds = array<i64: 1, 16>}, {transform_indices = @transform_4, window_bounds = array<i64: 32, 16>}]} {
    %c0 = arith.constant 0 : index
    %c0_0 = arith.constant 0 : index
    %0 = vector.load %arg2[%c0, %c0_0] : memref<2x16xf32, #tpu.memory_space<vmem>>, vector<2x16xf32>
    %1 = vector.extract_strided_slice %0 {offsets = [0, 0], sizes = [1, 16], strides = [1, 1]} : vector<2x16xf32> to vector<1x16xf32>
    %cst = arith.constant 3.125000e-02 : f32
    %2 = vector.broadcast %cst : f32 to vector<1x16xf32>
    %3 = arith.mulf %1, %2 : vector<1x16xf32>
    %4 = vector.extract_strided_slice %0 {offsets = [1, 0], sizes = [1, 16], strides = [1, 1]} : vector<2x16xf32> to vector<1x16xf32>
    %cst_1 = arith.constant 3.125000e-02 : f32
    %5 = vector.broadcast %cst_1 : f32 to vector<1x16xf32>
    %6 = arith.mulf %4, %5 : vector<1x16xf32>
    %7 = arith.mulf %3, %3 : vector<1x16xf32>
    %8 = arith.subf %6, %7 : vector<1x16xf32>
    %cst_2 = arith.constant 0.000000e+00 : f32
    %9 = vector.broadcast %cst_2 : f32 to vector<1x16xf32>
    %10 = arith.maximumf %8, %9 : vector<1x16xf32>
    %cst_3 = arith.constant 9.99999974E-6 : f32
    %11 = vector.broadcast %cst_3 : f32 to vector<1x16xf32>
    %12 = arith.addf %10, %11 : vector<1x16xf32>
    %13 = math.rsqrt %12 : vector<1x16xf32>
    %c0_4 = arith.constant 0 : index
    %c0_5 = arith.constant 0 : index
    %14 = vector.load %arg3[%c0_4, %c0_5] : memref<1x16xf32, #tpu.memory_space<vmem>>, vector<1x16xf32>
    %15 = arith.mulf %13, %14 : vector<1x16xf32>
    %c0_6 = arith.constant 0 : index
    %c0_7 = arith.constant 0 : index
    %16 = vector.load %arg4[%c0_6, %c0_7] : memref<1x16xf32, #tpu.memory_space<vmem>>, vector<1x16xf32>
    %17 = arith.mulf %3, %15 : vector<1x16xf32>
    %18 = arith.subf %16, %17 : vector<1x16xf32>
    %c0_8 = arith.constant 0 : index
    %c0_9 = arith.constant 0 : index
    %19 = vector.load %arg1[%c0_8, %c0_9] : memref<32x16xbf16, #tpu.memory_space<vmem>>, vector<32x16xbf16>
    %20 = arith.extf %19 : vector<32x16xbf16> to vector<32x16xf32>
    %21 = vector.broadcast %15 : vector<1x16xf32> to vector<32x16xf32>
    %22 = arith.mulf %20, %21 : vector<32x16xf32>
    %23 = vector.broadcast %18 : vector<1x16xf32> to vector<32x16xf32>
    %24 = arith.addf %22, %23 : vector<32x16xf32>
    %cst_10 = arith.constant 0.000000e+00 : f32
    %25 = vector.broadcast %cst_10 : f32 to vector<32x16xf32>
    %26 = arith.cmpf ogt, %24, %25 : vector<32x16xf32>
    %cst_11 = arith.constant 0.00999999977 : f32
    %27 = vector.broadcast %cst_11 : f32 to vector<32x16xf32>
    %28 = arith.mulf %27, %24 : vector<32x16xf32>
    %29 = arith.select %26, %24, %28 : vector<32x16xi1>, vector<32x16xf32>
    %30 = arith.truncf %29 : vector<32x16xf32> to vector<32x16xbf16>
    %c0_12 = arith.constant 0 : index
    %c0_13 = arith.constant 0 : index
    %31 = vector.load %arg5[%c0_12, %c0_13] : memref<32x16xbf16, #tpu.memory_space<vmem>>, vector<32x16xbf16>
    tpu.vector_store %arg5[%c0_12, %c0_13], %30 {strides = array<i32>} : memref<32x16xbf16, #tpu.memory_space<vmem>>, vector<32x16xbf16>,
    return
  }
  func.func @transform_0(%arg0: i32) -> (i32, i32) {
    %c0_i32 = arith.constant 0 : i32
    %c0_i32_0 = arith.constant 0 : i32
    return %arg0, %c0_i32 : i32, i32
  }
  func.func @transform_1(%arg0: i32) -> (i32, i32) {
    %c0_i32 = arith.constant 0 : i32
    %c0_i32_0 = arith.constant 0 : i32
    %c0_i32_1 = arith.constant 0 : i32
    return %c0_i32, %c0_i32_0 : i32, i32
  }
  func.func @transform_2(%arg0: i32) -> (i32, i32) {
    %c0_i32 = arith.constant 0 : i32
    %c0_i32_0 = arith.constant 0 : i32
    %c0_i32_1 = arith.constant 0 : i32
    return %c0_i32, %c0_i32_0 : i32, i32
  }
  func.func @transform_3(%arg0: i32) -> (i32, i32) {
    %c0_i32 = arith.constant 0 : i32
    %c0_i32_0 = arith.constant 0 : i32
    %c0_i32_1 = arith.constant 0 : i32
    return %c0_i32, %c0_i32_0 : i32, i32
  }
  func.func @transform_4(%arg0: i32) -> (i32, i32) {
    %c0_i32 = arith.constant 0 : i32
    %c0_i32_0 = arith.constant 0 : i32
    return %arg0, %c0_i32 : i32, i32
  }
}

module attributes {stable_mosaic.version = 11 : i64} {
  func.func @conv_stats_kernel(%arg0: i32, %arg1: memref<32x288xbf16, #tpu.memory_space<vmem>>, %arg2: memref<288x16xbf16, #tpu.memory_space<vmem>>, %arg3: memref<32x16xbf16, #tpu.memory_space<vmem>>, %arg4: memref<2x16xf32, #tpu.memory_space<vmem>>) attributes {dimension_semantics = [#tpu.dimension_semantics<arbitrary>], iteration_bounds = array<i64: 1>, scalar_prefetch = 0 : i64, scratch_operands = 0 : i64, tpu.core_type = #tpu.core_type<tc>, window_params = [{transform_indices = @transform_0, window_bounds = array<i64: 32, 288>}, {pipeline_mode = #tpu.pipeline_mode<synchronous>, transform_indices = @transform_1, window_bounds = array<i64: 288, 16>}, {transform_indices = @transform_2, window_bounds = array<i64: 32, 16>}, {pipeline_mode = #tpu.pipeline_mode<synchronous>, transform_indices = @transform_3, window_bounds = array<i64: 2, 16>}]} {
    %c0_i32 = arith.constant 0 : i32
    %0 = arith.cmpi eq, %arg0, %c0_i32 : i32
    %1 = arith.extui %0 : i1 to i32
    %c0_i32_0 = arith.constant 0 : i32
    %2 = arith.cmpi ne, %1, %c0_i32_0 : i32
    scf.if %2 {
      %cst_12 = arith.constant 0.000000e+00 : f32
      %17 = vector.broadcast %cst_12 : f32 to vector<2x16xf32>
      %c0_13 = arith.constant 0 : index
      %c0_14 = arith.constant 0 : index
      %18 = vector.load %arg4[%c0_13, %c0_14] : memref<2x16xf32, #tpu.memory_space<vmem>>, vector<2x16xf32>
      tpu.vector_store %arg4[%c0_13, %c0_14], %17 {strides = array<i32>} : memref<2x16xf32, #tpu.memory_space<vmem>>, vector<2x16xf32>,
    } else {
    }
    %c0 = arith.constant 0 : index
    %c0_1 = arith.constant 0 : index
    %3 = vector.load %arg1[%c0, %c0_1] : memref<32x288xbf16, #tpu.memory_space<vmem>>, vector<32x288xbf16>
    %c0_2 = arith.constant 0 : index
    %c0_3 = arith.constant 0 : index
    %4 = vector.load %arg2[%c0_2, %c0_3] : memref<288x16xbf16, #tpu.memory_space<vmem>>, vector<288x16xbf16>
    %cst = arith.constant dense<0.000000e+00> : vector<32x16xf32>
    %5 = tpu.matmul %3, %4, %cst {dimension_numbers = #tpu.dot_dimension_numbers<[1], [0], [0], [1], [0, 0, 1, 1], [], []>} : vector<32x288xbf16>, vector<288x16xbf16>, vector<32x16xf32> -> vector<32x16xf32>
    %6 = arith.truncf %5 : vector<32x16xf32> to vector<32x16xbf16>
    %c0_4 = arith.constant 0 : index
    %c0_5 = arith.constant 0 : index
    %7 = vector.load %arg3[%c0_4, %c0_5] : memref<32x16xbf16, #tpu.memory_space<vmem>>, vector<32x16xbf16>
    tpu.vector_store %arg3[%c0_4, %c0_5], %6 {strides = array<i32>} : memref<32x16xbf16, #tpu.memory_space<vmem>>, vector<32x16xbf16>,
    %cst_6 = arith.constant dense<0.000000e+00> : vector<16xf32>
    %8 = vector.multi_reduction <add>, %5, %cst_6 [0] : vector<32x16xf32> to vector<16xf32>
    %9 = vector.shape_cast %8 : vector<16xf32> to vector<1x16xf32>
    %10 = arith.mulf %5, %5 : vector<32x16xf32>
    %cst_7 = arith.constant dense<0.000000e+00> : vector<16xf32>
    %11 = vector.multi_reduction <add>, %10, %cst_7 [0] : vector<32x16xf32> to vector<16xf32>
    %12 = vector.shape_cast %11 : vector<16xf32> to vector<1x16xf32>
    %c0_8 = arith.constant 0 : index
    %c0_9 = arith.constant 0 : index
    %13 = vector.load %arg4[%c0_8, %c0_9] : memref<2x16xf32, #tpu.memory_space<vmem>>, vector<2x16xf32>
    %14 = tpu.concatenate %9, %12 in 0 : vector<1x16xf32>, vector<1x16xf32> -> vector<2x16xf32>
    %15 = arith.addf %13, %14 : vector<2x16xf32>
    %c0_10 = arith.constant 0 : index
    %c0_11 = arith.constant 0 : index
    %16 = vector.load %arg4[%c0_10, %c0_11] : memref<2x16xf32, #tpu.memory_space<vmem>>, vector<2x16xf32>
    tpu.vector_store %arg4[%c0_10, %c0_11], %15 {strides = array<i32>} : memref<2x16xf32, #tpu.memory_space<vmem>>, vector<2x16xf32>,
    return
  }
  func.func @transform_0(%arg0: i32) -> (i32, i32) {
    %c0_i32 = arith.constant 0 : i32
    %c0_i32_0 = arith.constant 0 : i32
    return %arg0, %c0_i32 : i32, i32
  }
  func.func @transform_1(%arg0: i32) -> (i32, i32) {
    %c0_i32 = arith.constant 0 : i32
    %c0_i32_0 = arith.constant 0 : i32
    %c0_i32_1 = arith.constant 0 : i32
    return %c0_i32, %c0_i32_0 : i32, i32
  }
  func.func @transform_2(%arg0: i32) -> (i32, i32) {
    %c0_i32 = arith.constant 0 : i32
    %c0_i32_0 = arith.constant 0 : i32
    return %arg0, %c0_i32 : i32, i32
  }
  func.func @transform_3(%arg0: i32) -> (i32, i32) {
    %c0_i32 = arith.constant 0 : i32
    %c0_i32_0 = arith.constant 0 : i32
    %c0_i32_1 = arith.constant 0 : i32
    return %c0_i32, %c0_i32_0 : i32, i32
  }
}

module attributes {stable_mosaic.version = 11 : i64} {
  func.func @conv_stats_kernel(%arg0: i32, %arg1: memref<32x144xbf16, #tpu.memory_space<vmem>>, %arg2: memref<144x16xbf16, #tpu.memory_space<vmem>>, %arg3: memref<32x16xbf16, #tpu.memory_space<vmem>>, %arg4: memref<2x16xf32, #tpu.memory_space<vmem>>) attributes {dimension_semantics = [#tpu.dimension_semantics<arbitrary>], iteration_bounds = array<i64: 1>, scalar_prefetch = 0 : i64, scratch_operands = 0 : i64, tpu.core_type = #tpu.core_type<tc>, window_params = [{transform_indices = @transform_0, window_bounds = array<i64: 32, 144>}, {pipeline_mode = #tpu.pipeline_mode<synchronous>, transform_indices = @transform_1, window_bounds = array<i64: 144, 16>}, {transform_indices = @transform_2, window_bounds = array<i64: 32, 16>}, {pipeline_mode = #tpu.pipeline_mode<synchronous>, transform_indices = @transform_3, window_bounds = array<i64: 2, 16>}]} {
    %c0_i32 = arith.constant 0 : i32
    %0 = arith.cmpi eq, %arg0, %c0_i32 : i32
    %1 = arith.extui %0 : i1 to i32
    %c0_i32_0 = arith.constant 0 : i32
    %2 = arith.cmpi ne, %1, %c0_i32_0 : i32
    scf.if %2 {
      %cst_12 = arith.constant 0.000000e+00 : f32
      %17 = vector.broadcast %cst_12 : f32 to vector<2x16xf32>
      %c0_13 = arith.constant 0 : index
      %c0_14 = arith.constant 0 : index
      %18 = vector.load %arg4[%c0_13, %c0_14] : memref<2x16xf32, #tpu.memory_space<vmem>>, vector<2x16xf32>
      tpu.vector_store %arg4[%c0_13, %c0_14], %17 {strides = array<i32>} : memref<2x16xf32, #tpu.memory_space<vmem>>, vector<2x16xf32>,
    } else {
    }
    %c0 = arith.constant 0 : index
    %c0_1 = arith.constant 0 : index
    %3 = vector.load %arg1[%c0, %c0_1] : memref<32x144xbf16, #tpu.memory_space<vmem>>, vector<32x144xbf16>
    %c0_2 = arith.constant 0 : index
    %c0_3 = arith.constant 0 : index
    %4 = vector.load %arg2[%c0_2, %c0_3] : memref<144x16xbf16, #tpu.memory_space<vmem>>, vector<144x16xbf16>
    %cst = arith.constant dense<0.000000e+00> : vector<32x16xf32>
    %5 = tpu.matmul %3, %4, %cst {dimension_numbers = #tpu.dot_dimension_numbers<[1], [0], [0], [1], [0, 0, 1, 1], [], []>} : vector<32x144xbf16>, vector<144x16xbf16>, vector<32x16xf32> -> vector<32x16xf32>
    %6 = arith.truncf %5 : vector<32x16xf32> to vector<32x16xbf16>
    %c0_4 = arith.constant 0 : index
    %c0_5 = arith.constant 0 : index
    %7 = vector.load %arg3[%c0_4, %c0_5] : memref<32x16xbf16, #tpu.memory_space<vmem>>, vector<32x16xbf16>
    tpu.vector_store %arg3[%c0_4, %c0_5], %6 {strides = array<i32>} : memref<32x16xbf16, #tpu.memory_space<vmem>>, vector<32x16xbf16>,
    %cst_6 = arith.constant dense<0.000000e+00> : vector<16xf32>
    %8 = vector.multi_reduction <add>, %5, %cst_6 [0] : vector<32x16xf32> to vector<16xf32>
    %9 = vector.shape_cast %8 : vector<16xf32> to vector<1x16xf32>
    %10 = arith.mulf %5, %5 : vector<32x16xf32>
    %cst_7 = arith.constant dense<0.000000e+00> : vector<16xf32>
    %11 = vector.multi_reduction <add>, %10, %cst_7 [0] : vector<32x16xf32> to vector<16xf32>
    %12 = vector.shape_cast %11 : vector<16xf32> to vector<1x16xf32>
    %c0_8 = arith.constant 0 : index
    %c0_9 = arith.constant 0 : index
    %13 = vector.load %arg4[%c0_8, %c0_9] : memref<2x16xf32, #tpu.memory_space<vmem>>, vector<2x16xf32>
    %14 = tpu.concatenate %9, %12 in 0 : vector<1x16xf32>, vector<1x16xf32> -> vector<2x16xf32>
    %15 = arith.addf %13, %14 : vector<2x16xf32>
    %c0_10 = arith.constant 0 : index
    %c0_11 = arith.constant 0 : index
    %16 = vector.load %arg4[%c0_10, %c0_11] : memref<2x16xf32, #tpu.memory_space<vmem>>, vector<2x16xf32>
    tpu.vector_store %arg4[%c0_10, %c0_11], %15 {strides = array<i32>} : memref<2x16xf32, #tpu.memory_space<vmem>>, vector<2x16xf32>,
    return
  }
  func.func @transform_0(%arg0: i32) -> (i32, i32) {
    %c0_i32 = arith.constant 0 : i32
    %c0_i32_0 = arith.constant 0 : i32
    return %arg0, %c0_i32 : i32, i32
  }
  func.func @transform_1(%arg0: i32) -> (i32, i32) {
    %c0_i32 = arith.constant 0 : i32
    %c0_i32_0 = arith.constant 0 : i32
    %c0_i32_1 = arith.constant 0 : i32
    return %c0_i32, %c0_i32_0 : i32, i32
  }
  func.func @transform_2(%arg0: i32) -> (i32, i32) {
    %c0_i32 = arith.constant 0 : i32
    %c0_i32_0 = arith.constant 0 : i32
    return %arg0, %c0_i32 : i32, i32
  }
  func.func @transform_3(%arg0: i32) -> (i32, i32) {
    %c0_i32 = arith.constant 0 : i32
    %c0_i32_0 = arith.constant 0 : i32
    %c0_i32_1 = arith.constant 0 : i32
    return %c0_i32, %c0_i32_0 : i32, i32
  }
}

module attributes {stable_mosaic.version = 11 : i64} {
  func.func @matmul_bias_lrelu_kernel(%arg0: i32, %arg1: memref<32x16xbf16, #tpu.memory_space<vmem>>, %arg2: memref<16x64xbf16, #tpu.memory_space<vmem>>, %arg3: memref<1x64xf32, #tpu.memory_space<vmem>>, %arg4: memref<32x64xbf16, #tpu.memory_space<vmem>>) attributes {dimension_semantics = [#tpu.dimension_semantics<parallel>], iteration_bounds = array<i64: 1>, scalar_prefetch = 0 : i64, scratch_operands = 0 : i64, tpu.core_type = #tpu.core_type<tc>, window_params = [{transform_indices = @transform_0, window_bounds = array<i64: 32, 16>}, {pipeline_mode = #tpu.pipeline_mode<synchronous>, transform_indices = @transform_1, window_bounds = array<i64: 16, 64>}, {pipeline_mode = #tpu.pipeline_mode<synchronous>, transform_indices = @transform_2, window_bounds = array<i64: 1, 64>}, {transform_indices = @transform_3, window_bounds = array<i64: 32, 64>}]} {
    %c0 = arith.constant 0 : index
    %c0_0 = arith.constant 0 : index
    %0 = vector.load %arg1[%c0, %c0_0] : memref<32x16xbf16, #tpu.memory_space<vmem>>, vector<32x16xbf16>
    %c0_1 = arith.constant 0 : index
    %c0_2 = arith.constant 0 : index
    %1 = vector.load %arg2[%c0_1, %c0_2] : memref<16x64xbf16, #tpu.memory_space<vmem>>, vector<16x64xbf16>
    %cst = arith.constant dense<0.000000e+00> : vector<32x64xf32>
    %2 = tpu.matmul %0, %1, %cst {dimension_numbers = #tpu.dot_dimension_numbers<[1], [0], [0], [1], [0, 0, 1, 1], [], []>} : vector<32x16xbf16>, vector<16x64xbf16>, vector<32x64xf32> -> vector<32x64xf32>
    %c0_3 = arith.constant 0 : index
    %c0_4 = arith.constant 0 : index
    %3 = vector.load %arg3[%c0_3, %c0_4] : memref<1x64xf32, #tpu.memory_space<vmem>>, vector<1x64xf32>
    %4 = vector.broadcast %3 : vector<1x64xf32> to vector<32x64xf32>
    %5 = arith.addf %2, %4 : vector<32x64xf32>
    %cst_5 = arith.constant 0.000000e+00 : f32
    %6 = vector.broadcast %cst_5 : f32 to vector<32x64xf32>
    %7 = arith.cmpf ogt, %5, %6 : vector<32x64xf32>
    %cst_6 = arith.constant 0.00999999977 : f32
    %8 = vector.broadcast %cst_6 : f32 to vector<32x64xf32>
    %9 = arith.mulf %8, %5 : vector<32x64xf32>
    %10 = arith.select %7, %5, %9 : vector<32x64xi1>, vector<32x64xf32>
    %11 = arith.truncf %10 : vector<32x64xf32> to vector<32x64xbf16>
    %c0_7 = arith.constant 0 : index
    %c0_8 = arith.constant 0 : index
    %12 = vector.load %arg4[%c0_7, %c0_8] : memref<32x64xbf16, #tpu.memory_space<vmem>>, vector<32x64xbf16>
    tpu.vector_store %arg4[%c0_7, %c0_8], %11 {strides = array<i32>} : memref<32x64xbf16, #tpu.memory_space<vmem>>, vector<32x64xbf16>,
    return
  }
  func.func @transform_0(%arg0: i32) -> (i32, i32) {
    %c0_i32 = arith.constant 0 : i32
    %c0_i32_0 = arith.constant 0 : i32
    return %arg0, %c0_i32 : i32, i32
  }
  func.func @transform_1(%arg0: i32) -> (i32, i32) {
    %c0_i32 = arith.constant 0 : i32
    %c0_i32_0 = arith.constant 0 : i32
    %c0_i32_1 = arith.constant 0 : i32
    return %c0_i32, %c0_i32_0 : i32, i32
  }
  func.func @transform_2(%arg0: i32) -> (i32, i32) {
    %c0_i32 = arith.constant 0 : i32
    %c0_i32_0 = arith.constant 0 : i32
    %c0_i32_1 = arith.constant 0 : i32
    return %c0_i32, %c0_i32_0 : i32, i32
  }
  func.func @transform_3(%arg0: i32) -> (i32, i32) {
    %c0_i32 = arith.constant 0 : i32
    %c0_i32_0 = arith.constant 0 : i32
    return %arg0, %c0_i32 : i32, i32
  }
}

module attributes {stable_mosaic.version = 11 : i64} {
  func.func @conv_stats_kernel(%arg0: i32, %arg1: memref<128x144xbf16, #tpu.memory_space<vmem>>, %arg2: memref<144x8xbf16, #tpu.memory_space<vmem>>, %arg3: memref<128x8xbf16, #tpu.memory_space<vmem>>, %arg4: memref<2x8xf32, #tpu.memory_space<vmem>>) attributes {dimension_semantics = [#tpu.dimension_semantics<arbitrary>], iteration_bounds = array<i64: 1>, scalar_prefetch = 0 : i64, scratch_operands = 0 : i64, tpu.core_type = #tpu.core_type<tc>, window_params = [{transform_indices = @transform_0, window_bounds = array<i64: 128, 144>}, {pipeline_mode = #tpu.pipeline_mode<synchronous>, transform_indices = @transform_1, window_bounds = array<i64: 144, 8>}, {transform_indices = @transform_2, window_bounds = array<i64: 128, 8>}, {pipeline_mode = #tpu.pipeline_mode<synchronous>, transform_indices = @transform_3, window_bounds = array<i64: 2, 8>}]} {
    %c0_i32 = arith.constant 0 : i32
    %0 = arith.cmpi eq, %arg0, %c0_i32 : i32
    %1 = arith.extui %0 : i1 to i32
    %c0_i32_0 = arith.constant 0 : i32
    %2 = arith.cmpi ne, %1, %c0_i32_0 : i32
    scf.if %2 {
      %cst_12 = arith.constant 0.000000e+00 : f32
      %17 = vector.broadcast %cst_12 : f32 to vector<2x8xf32>
      %c0_13 = arith.constant 0 : index
      %c0_14 = arith.constant 0 : index
      %18 = vector.load %arg4[%c0_13, %c0_14] : memref<2x8xf32, #tpu.memory_space<vmem>>, vector<2x8xf32>
      tpu.vector_store %arg4[%c0_13, %c0_14], %17 {strides = array<i32>} : memref<2x8xf32, #tpu.memory_space<vmem>>, vector<2x8xf32>,
    } else {
    }
    %c0 = arith.constant 0 : index
    %c0_1 = arith.constant 0 : index
    %3 = vector.load %arg1[%c0, %c0_1] : memref<128x144xbf16, #tpu.memory_space<vmem>>, vector<128x144xbf16>
    %c0_2 = arith.constant 0 : index
    %c0_3 = arith.constant 0 : index
    %4 = vector.load %arg2[%c0_2, %c0_3] : memref<144x8xbf16, #tpu.memory_space<vmem>>, vector<144x8xbf16>
    %cst = arith.constant dense<0.000000e+00> : vector<128x8xf32>
    %5 = tpu.matmul %3, %4, %cst {dimension_numbers = #tpu.dot_dimension_numbers<[1], [0], [0], [1], [0, 0, 1, 1], [], []>} : vector<128x144xbf16>, vector<144x8xbf16>, vector<128x8xf32> -> vector<128x8xf32>
    %6 = arith.truncf %5 : vector<128x8xf32> to vector<128x8xbf16>
    %c0_4 = arith.constant 0 : index
    %c0_5 = arith.constant 0 : index
    %7 = vector.load %arg3[%c0_4, %c0_5] : memref<128x8xbf16, #tpu.memory_space<vmem>>, vector<128x8xbf16>
    tpu.vector_store %arg3[%c0_4, %c0_5], %6 {strides = array<i32>} : memref<128x8xbf16, #tpu.memory_space<vmem>>, vector<128x8xbf16>,
    %cst_6 = arith.constant dense<0.000000e+00> : vector<8xf32>
    %8 = vector.multi_reduction <add>, %5, %cst_6 [0] : vector<128x8xf32> to vector<8xf32>
    %9 = vector.shape_cast %8 : vector<8xf32> to vector<1x8xf32>
    %10 = arith.mulf %5, %5 : vector<128x8xf32>
    %cst_7 = arith.constant dense<0.000000e+00> : vector<8xf32>
    %11 = vector.multi_reduction <add>, %10, %cst_7 [0] : vector<128x8xf32> to vector<8xf32>
    %12 = vector.shape_cast %11 : vector<8xf32> to vector<1x8xf32>
    %c0_8 = arith.constant 0 : index
    %c0_9 = arith.constant 0 : index
    %13 = vector.load %arg4[%c0_8, %c0_9] : memref<2x8xf32, #tpu.memory_space<vmem>>, vector<2x8xf32>
    %14 = tpu.concatenate %9, %12 in 0 : vector<1x8xf32>, vector<1x8xf32> -> vector<2x8xf32>
    %15 = arith.addf %13, %14 : vector<2x8xf32>
    %c0_10 = arith.constant 0 : index
    %c0_11 = arith.constant 0 : index
    %16 = vector.load %arg4[%c0_10, %c0_11] : memref<2x8xf32, #tpu.memory_space<vmem>>, vector<2x8xf32>
    tpu.vector_store %arg4[%c0_10, %c0_11], %15 {strides = array<i32>} : memref<2x8xf32, #tpu.memory_space<vmem>>, vector<2x8xf32>,
    return
  }
  func.func @transform_0(%arg0: i32) -> (i32, i32) {
    %c0_i32 = arith.constant 0 : i32
    %c0_i32_0 = arith.constant 0 : i32
    return %arg0, %c0_i32 : i32, i32
  }
  func.func @transform_1(%arg0: i32) -> (i32, i32) {
    %c0_i32 = arith.constant 0 : i32
    %c0_i32_0 = arith.constant 0 : i32
    %c0_i32_1 = arith.constant 0 : i32
    return %c0_i32, %c0_i32_0 : i32, i32
  }
  func.func @transform_2(%arg0: i32) -> (i32, i32) {
    %c0_i32 = arith.constant 0 : i32
    %c0_i32_0 = arith.constant 0 : i32
    return %arg0, %c0_i32 : i32, i32
  }
  func.func @transform_3(%arg0: i32) -> (i32, i32) {
    %c0_i32 = arith.constant 0 : i32
    %c0_i32_0 = arith.constant 0 : i32
    %c0_i32_1 = arith.constant 0 : i32
    return %c0_i32, %c0_i32_0 : i32, i32
  }
}

module attributes {stable_mosaic.version = 11 : i64} {
  func.func @bn_apply_lrelu_kernel(%arg0: i32, %arg1: memref<128x8xbf16, #tpu.memory_space<vmem>>, %arg2: memref<2x8xf32, #tpu.memory_space<vmem>>, %arg3: memref<1x8xf32, #tpu.memory_space<vmem>>, %arg4: memref<1x8xf32, #tpu.memory_space<vmem>>, %arg5: memref<128x8xbf16, #tpu.memory_space<vmem>>) attributes {dimension_semantics = [#tpu.dimension_semantics<parallel>], iteration_bounds = array<i64: 1>, scalar_prefetch = 0 : i64, scratch_operands = 0 : i64, tpu.core_type = #tpu.core_type<tc>, window_params = [{transform_indices = @transform_0, window_bounds = array<i64: 128, 8>}, {pipeline_mode = #tpu.pipeline_mode<synchronous>, transform_indices = @transform_1, window_bounds = array<i64: 2, 8>}, {pipeline_mode = #tpu.pipeline_mode<synchronous>, transform_indices = @transform_2, window_bounds = array<i64: 1, 8>}, {pipeline_mode = #tpu.pipeline_mode<synchronous>, transform_indices = @transform_3, window_bounds = array<i64: 1, 8>}, {transform_indices = @transform_4, window_bounds = array<i64: 128, 8>}]} {
    %c0 = arith.constant 0 : index
    %c0_0 = arith.constant 0 : index
    %0 = vector.load %arg2[%c0, %c0_0] : memref<2x8xf32, #tpu.memory_space<vmem>>, vector<2x8xf32>
    %1 = vector.extract_strided_slice %0 {offsets = [0, 0], sizes = [1, 8], strides = [1, 1]} : vector<2x8xf32> to vector<1x8xf32>
    %cst = arith.constant 7.812500e-03 : f32
    %2 = vector.broadcast %cst : f32 to vector<1x8xf32>
    %3 = arith.mulf %1, %2 : vector<1x8xf32>
    %4 = vector.extract_strided_slice %0 {offsets = [1, 0], sizes = [1, 8], strides = [1, 1]} : vector<2x8xf32> to vector<1x8xf32>
    %cst_1 = arith.constant 7.812500e-03 : f32
    %5 = vector.broadcast %cst_1 : f32 to vector<1x8xf32>
    %6 = arith.mulf %4, %5 : vector<1x8xf32>
    %7 = arith.mulf %3, %3 : vector<1x8xf32>
    %8 = arith.subf %6, %7 : vector<1x8xf32>
    %cst_2 = arith.constant 0.000000e+00 : f32
    %9 = vector.broadcast %cst_2 : f32 to vector<1x8xf32>
    %10 = arith.maximumf %8, %9 : vector<1x8xf32>
    %cst_3 = arith.constant 9.99999974E-6 : f32
    %11 = vector.broadcast %cst_3 : f32 to vector<1x8xf32>
    %12 = arith.addf %10, %11 : vector<1x8xf32>
    %13 = math.rsqrt %12 : vector<1x8xf32>
    %c0_4 = arith.constant 0 : index
    %c0_5 = arith.constant 0 : index
    %14 = vector.load %arg3[%c0_4, %c0_5] : memref<1x8xf32, #tpu.memory_space<vmem>>, vector<1x8xf32>
    %15 = arith.mulf %13, %14 : vector<1x8xf32>
    %c0_6 = arith.constant 0 : index
    %c0_7 = arith.constant 0 : index
    %16 = vector.load %arg4[%c0_6, %c0_7] : memref<1x8xf32, #tpu.memory_space<vmem>>, vector<1x8xf32>
    %17 = arith.mulf %3, %15 : vector<1x8xf32>
    %18 = arith.subf %16, %17 : vector<1x8xf32>
    %c0_8 = arith.constant 0 : index
    %c0_9 = arith.constant 0 : index
    %19 = vector.load %arg1[%c0_8, %c0_9] : memref<128x8xbf16, #tpu.memory_space<vmem>>, vector<128x8xbf16>
    %20 = arith.extf %19 : vector<128x8xbf16> to vector<128x8xf32>
    %21 = vector.broadcast %15 : vector<1x8xf32> to vector<128x8xf32>
    %22 = arith.mulf %20, %21 : vector<128x8xf32>
    %23 = vector.broadcast %18 : vector<1x8xf32> to vector<128x8xf32>
    %24 = arith.addf %22, %23 : vector<128x8xf32>
    %cst_10 = arith.constant 0.000000e+00 : f32
    %25 = vector.broadcast %cst_10 : f32 to vector<128x8xf32>
    %26 = arith.cmpf ogt, %24, %25 : vector<128x8xf32>
    %cst_11 = arith.constant 0.00999999977 : f32
    %27 = vector.broadcast %cst_11 : f32 to vector<128x8xf32>
    %28 = arith.mulf %27, %24 : vector<128x8xf32>
    %29 = arith.select %26, %24, %28 : vector<128x8xi1>, vector<128x8xf32>
    %30 = arith.truncf %29 : vector<128x8xf32> to vector<128x8xbf16>
    %c0_12 = arith.constant 0 : index
    %c0_13 = arith.constant 0 : index
    %31 = vector.load %arg5[%c0_12, %c0_13] : memref<128x8xbf16, #tpu.memory_space<vmem>>, vector<128x8xbf16>
    tpu.vector_store %arg5[%c0_12, %c0_13], %30 {strides = array<i32>} : memref<128x8xbf16, #tpu.memory_space<vmem>>, vector<128x8xbf16>,
    return
  }
  func.func @transform_0(%arg0: i32) -> (i32, i32) {
    %c0_i32 = arith.constant 0 : i32
    %c0_i32_0 = arith.constant 0 : i32
    return %arg0, %c0_i32 : i32, i32
  }
  func.func @transform_1(%arg0: i32) -> (i32, i32) {
    %c0_i32 = arith.constant 0 : i32
    %c0_i32_0 = arith.constant 0 : i32
    %c0_i32_1 = arith.constant 0 : i32
    return %c0_i32, %c0_i32_0 : i32, i32
  }
  func.func @transform_2(%arg0: i32) -> (i32, i32) {
    %c0_i32 = arith.constant 0 : i32
    %c0_i32_0 = arith.constant 0 : i32
    %c0_i32_1 = arith.constant 0 : i32
    return %c0_i32, %c0_i32_0 : i32, i32
  }
  func.func @transform_3(%arg0: i32) -> (i32, i32) {
    %c0_i32 = arith.constant 0 : i32
    %c0_i32_0 = arith.constant 0 : i32
    %c0_i32_1 = arith.constant 0 : i32
    return %c0_i32, %c0_i32_0 : i32, i32
  }
  func.func @transform_4(%arg0: i32) -> (i32, i32) {
    %c0_i32 = arith.constant 0 : i32
    %c0_i32_0 = arith.constant 0 : i32
    return %arg0, %c0_i32 : i32, i32
  }
}

module attributes {stable_mosaic.version = 11 : i64} {
  func.func @conv_stats_kernel(%arg0: i32, %arg1: memref<128x72xbf16, #tpu.memory_space<vmem>>, %arg2: memref<72x8xbf16, #tpu.memory_space<vmem>>, %arg3: memref<128x8xbf16, #tpu.memory_space<vmem>>, %arg4: memref<2x8xf32, #tpu.memory_space<vmem>>) attributes {dimension_semantics = [#tpu.dimension_semantics<arbitrary>], iteration_bounds = array<i64: 1>, scalar_prefetch = 0 : i64, scratch_operands = 0 : i64, tpu.core_type = #tpu.core_type<tc>, window_params = [{transform_indices = @transform_0, window_bounds = array<i64: 128, 72>}, {pipeline_mode = #tpu.pipeline_mode<synchronous>, transform_indices = @transform_1, window_bounds = array<i64: 72, 8>}, {transform_indices = @transform_2, window_bounds = array<i64: 128, 8>}, {pipeline_mode = #tpu.pipeline_mode<synchronous>, transform_indices = @transform_3, window_bounds = array<i64: 2, 8>}]} {
    %c0_i32 = arith.constant 0 : i32
    %0 = arith.cmpi eq, %arg0, %c0_i32 : i32
    %1 = arith.extui %0 : i1 to i32
    %c0_i32_0 = arith.constant 0 : i32
    %2 = arith.cmpi ne, %1, %c0_i32_0 : i32
    scf.if %2 {
      %cst_12 = arith.constant 0.000000e+00 : f32
      %17 = vector.broadcast %cst_12 : f32 to vector<2x8xf32>
      %c0_13 = arith.constant 0 : index
      %c0_14 = arith.constant 0 : index
      %18 = vector.load %arg4[%c0_13, %c0_14] : memref<2x8xf32, #tpu.memory_space<vmem>>, vector<2x8xf32>
      tpu.vector_store %arg4[%c0_13, %c0_14], %17 {strides = array<i32>} : memref<2x8xf32, #tpu.memory_space<vmem>>, vector<2x8xf32>,
    } else {
    }
    %c0 = arith.constant 0 : index
    %c0_1 = arith.constant 0 : index
    %3 = vector.load %arg1[%c0, %c0_1] : memref<128x72xbf16, #tpu.memory_space<vmem>>, vector<128x72xbf16>
    %c0_2 = arith.constant 0 : index
    %c0_3 = arith.constant 0 : index
    %4 = vector.load %arg2[%c0_2, %c0_3] : memref<72x8xbf16, #tpu.memory_space<vmem>>, vector<72x8xbf16>
    %cst = arith.constant dense<0.000000e+00> : vector<128x8xf32>
    %5 = tpu.matmul %3, %4, %cst {dimension_numbers = #tpu.dot_dimension_numbers<[1], [0], [0], [1], [0, 0, 1, 1], [], []>} : vector<128x72xbf16>, vector<72x8xbf16>, vector<128x8xf32> -> vector<128x8xf32>
    %6 = arith.truncf %5 : vector<128x8xf32> to vector<128x8xbf16>
    %c0_4 = arith.constant 0 : index
    %c0_5 = arith.constant 0 : index
    %7 = vector.load %arg3[%c0_4, %c0_5] : memref<128x8xbf16, #tpu.memory_space<vmem>>, vector<128x8xbf16>
    tpu.vector_store %arg3[%c0_4, %c0_5], %6 {strides = array<i32>} : memref<128x8xbf16, #tpu.memory_space<vmem>>, vector<128x8xbf16>,
    %cst_6 = arith.constant dense<0.000000e+00> : vector<8xf32>
    %8 = vector.multi_reduction <add>, %5, %cst_6 [0] : vector<128x8xf32> to vector<8xf32>
    %9 = vector.shape_cast %8 : vector<8xf32> to vector<1x8xf32>
    %10 = arith.mulf %5, %5 : vector<128x8xf32>
    %cst_7 = arith.constant dense<0.000000e+00> : vector<8xf32>
    %11 = vector.multi_reduction <add>, %10, %cst_7 [0] : vector<128x8xf32> to vector<8xf32>
    %12 = vector.shape_cast %11 : vector<8xf32> to vector<1x8xf32>
    %c0_8 = arith.constant 0 : index
    %c0_9 = arith.constant 0 : index
    %13 = vector.load %arg4[%c0_8, %c0_9] : memref<2x8xf32, #tpu.memory_space<vmem>>, vector<2x8xf32>
    %14 = tpu.concatenate %9, %12 in 0 : vector<1x8xf32>, vector<1x8xf32> -> vector<2x8xf32>
    %15 = arith.addf %13, %14 : vector<2x8xf32>
    %c0_10 = arith.constant 0 : index
    %c0_11 = arith.constant 0 : index
    %16 = vector.load %arg4[%c0_10, %c0_11] : memref<2x8xf32, #tpu.memory_space<vmem>>, vector<2x8xf32>
    tpu.vector_store %arg4[%c0_10, %c0_11], %15 {strides = array<i32>} : memref<2x8xf32, #tpu.memory_space<vmem>>, vector<2x8xf32>,
    return
  }
  func.func @transform_0(%arg0: i32) -> (i32, i32) {
    %c0_i32 = arith.constant 0 : i32
    %c0_i32_0 = arith.constant 0 : i32
    return %arg0, %c0_i32 : i32, i32
  }
  func.func @transform_1(%arg0: i32) -> (i32, i32) {
    %c0_i32 = arith.constant 0 : i32
    %c0_i32_0 = arith.constant 0 : i32
    %c0_i32_1 = arith.constant 0 : i32
    return %c0_i32, %c0_i32_0 : i32, i32
  }
  func.func @transform_2(%arg0: i32) -> (i32, i32) {
    %c0_i32 = arith.constant 0 : i32
    %c0_i32_0 = arith.constant 0 : i32
    return %arg0, %c0_i32 : i32, i32
  }
  func.func @transform_3(%arg0: i32) -> (i32, i32) {
    %c0_i32 = arith.constant 0 : i32
    %c0_i32_0 = arith.constant 0 : i32
    %c0_i32_1 = arith.constant 0 : i32
    return %c0_i32, %c0_i32_0 : i32, i32
  }
}

module attributes {stable_mosaic.version = 11 : i64} {
  func.func @matmul_bias_lrelu_kernel(%arg0: i32, %arg1: memref<128x8xbf16, #tpu.memory_space<vmem>>, %arg2: memref<8x32xbf16, #tpu.memory_space<vmem>>, %arg3: memref<1x32xf32, #tpu.memory_space<vmem>>, %arg4: memref<128x32xbf16, #tpu.memory_space<vmem>>) attributes {dimension_semantics = [#tpu.dimension_semantics<parallel>], iteration_bounds = array<i64: 1>, scalar_prefetch = 0 : i64, scratch_operands = 0 : i64, tpu.core_type = #tpu.core_type<tc>, window_params = [{transform_indices = @transform_0, window_bounds = array<i64: 128, 8>}, {pipeline_mode = #tpu.pipeline_mode<synchronous>, transform_indices = @transform_1, window_bounds = array<i64: 8, 32>}, {pipeline_mode = #tpu.pipeline_mode<synchronous>, transform_indices = @transform_2, window_bounds = array<i64: 1, 32>}, {transform_indices = @transform_3, window_bounds = array<i64: 128, 32>}]} {
    %c0 = arith.constant 0 : index
    %c0_0 = arith.constant 0 : index
    %0 = vector.load %arg1[%c0, %c0_0] : memref<128x8xbf16, #tpu.memory_space<vmem>>, vector<128x8xbf16>
    %c0_1 = arith.constant 0 : index
    %c0_2 = arith.constant 0 : index
    %1 = vector.load %arg2[%c0_1, %c0_2] : memref<8x32xbf16, #tpu.memory_space<vmem>>, vector<8x32xbf16>
    %cst = arith.constant dense<0.000000e+00> : vector<128x32xf32>
    %2 = tpu.matmul %0, %1, %cst {dimension_numbers = #tpu.dot_dimension_numbers<[1], [0], [0], [1], [0, 0, 1, 1], [], []>} : vector<128x8xbf16>, vector<8x32xbf16>, vector<128x32xf32> -> vector<128x32xf32>
    %c0_3 = arith.constant 0 : index
    %c0_4 = arith.constant 0 : index
    %3 = vector.load %arg3[%c0_3, %c0_4] : memref<1x32xf32, #tpu.memory_space<vmem>>, vector<1x32xf32>
    %4 = vector.broadcast %3 : vector<1x32xf32> to vector<128x32xf32>
    %5 = arith.addf %2, %4 : vector<128x32xf32>
    %cst_5 = arith.constant 0.000000e+00 : f32
    %6 = vector.broadcast %cst_5 : f32 to vector<128x32xf32>
    %7 = arith.cmpf ogt, %5, %6 : vector<128x32xf32>
    %cst_6 = arith.constant 0.00999999977 : f32
    %8 = vector.broadcast %cst_6 : f32 to vector<128x32xf32>
    %9 = arith.mulf %8, %5 : vector<128x32xf32>
    %10 = arith.select %7, %5, %9 : vector<128x32xi1>, vector<128x32xf32>
    %11 = arith.truncf %10 : vector<128x32xf32> to vector<128x32xbf16>
    %c0_7 = arith.constant 0 : index
    %c0_8 = arith.constant 0 : index
    %12 = vector.load %arg4[%c0_7, %c0_8] : memref<128x32xbf16, #tpu.memory_space<vmem>>, vector<128x32xbf16>
    tpu.vector_store %arg4[%c0_7, %c0_8], %11 {strides = array<i32>} : memref<128x32xbf16, #tpu.memory_space<vmem>>, vector<128x32xbf16>,
    return
  }
  func.func @transform_0(%arg0: i32) -> (i32, i32) {
    %c0_i32 = arith.constant 0 : i32
    %c0_i32_0 = arith.constant 0 : i32
    return %arg0, %c0_i32 : i32, i32
  }
  func.func @transform_1(%arg0: i32) -> (i32, i32) {
    %c0_i32 = arith.constant 0 : i32
    %c0_i32_0 = arith.constant 0 : i32
    %c0_i32_1 = arith.constant 0 : i32
    return %c0_i32, %c0_i32_0 : i32, i32
  }
  func.func @transform_2(%arg0: i32) -> (i32, i32) {
    %c0_i32 = arith.constant 0 : i32
    %c0_i32_0 = arith.constant 0 : i32
    %c0_i32_1 = arith.constant 0 : i32
    return %c0_i32, %c0_i32_0 : i32, i32
  }
  func.func @transform_3(%arg0: i32) -> (i32, i32) {
    %c0_i32 = arith.constant 0 : i32
    %c0_i32_0 = arith.constant 0 : i32
    return %arg0, %c0_i32 : i32, i32
  }
}

module attributes {stable_mosaic.version = 11 : i64} {
  func.func @matmul_bias_kernel(%arg0: i32, %arg1: memref<512x8xbf16, #tpu.memory_space<vmem>>, %arg2: memref<8x1xbf16, #tpu.memory_space<vmem>>, %arg3: memref<1x1xf32, #tpu.memory_space<vmem>>, %arg4: memref<512x1xf32, #tpu.memory_space<vmem>>) attributes {dimension_semantics = [#tpu.dimension_semantics<parallel>], iteration_bounds = array<i64: 1>, scalar_prefetch = 0 : i64, scratch_operands = 0 : i64, tpu.core_type = #tpu.core_type<tc>, window_params = [{transform_indices = @transform_0, window_bounds = array<i64: 512, 8>}, {pipeline_mode = #tpu.pipeline_mode<synchronous>, transform_indices = @transform_1, window_bounds = array<i64: 8, 1>}, {pipeline_mode = #tpu.pipeline_mode<synchronous>, transform_indices = @transform_2, window_bounds = array<i64: 1, 1>}, {transform_indices = @transform_3, window_bounds = array<i64: 512, 1>}]} {
    %c0 = arith.constant 0 : index
    %c0_0 = arith.constant 0 : index
    %0 = vector.load %arg1[%c0, %c0_0] : memref<512x8xbf16, #tpu.memory_space<vmem>>, vector<512x8xbf16>
    %c0_1 = arith.constant 0 : index
    %c0_2 = arith.constant 0 : index
    %1 = vector.load %arg2[%c0_1, %c0_2] : memref<8x1xbf16, #tpu.memory_space<vmem>>, vector<8x1xbf16>
    %cst = arith.constant dense<0.000000e+00> : vector<512x1xf32>
    %2 = tpu.matmul %0, %1, %cst {dimension_numbers = #tpu.dot_dimension_numbers<[1], [0], [0], [1], [0, 0, 1, 1], [], []>} : vector<512x8xbf16>, vector<8x1xbf16>, vector<512x1xf32> -> vector<512x1xf32>
    %c0_3 = arith.constant 0 : index
    %c0_4 = arith.constant 0 : index
    %3 = vector.load %arg3[%c0_3, %c0_4] : memref<1x1xf32, #tpu.memory_space<vmem>>, vector<1x1xf32>
    %4 = vector.broadcast %3 : vector<1x1xf32> to vector<512x1xf32>
    %5 = arith.addf %2, %4 : vector<512x1xf32>
    %c0_5 = arith.constant 0 : index
    %c0_6 = arith.constant 0 : index
    %6 = vector.load %arg4[%c0_5, %c0_6] : memref<512x1xf32, #tpu.memory_space<vmem>>, vector<512x1xf32>
    tpu.vector_store %arg4[%c0_5, %c0_6], %5 {strides = array<i32>} : memref<512x1xf32, #tpu.memory_space<vmem>>, vector<512x1xf32>,
    return
  }
  func.func @transform_0(%arg0: i32) -> (i32, i32) {
    %c0_i32 = arith.constant 0 : i32
    %c0_i32_0 = arith.constant 0 : i32
    return %arg0, %c0_i32 : i32, i32
  }
  func.func @transform_1(%arg0: i32) -> (i32, i32) {
    %c0_i32 = arith.constant 0 : i32
    %c0_i32_0 = arith.constant 0 : i32
    %c0_i32_1 = arith.constant 0 : i32
    return %c0_i32, %c0_i32_0 : i32, i32
  }
  func.func @transform_2(%arg0: i32) -> (i32, i32) {
    %c0_i32 = arith.constant 0 : i32
    %c0_i32_0 = arith.constant 0 : i32
    %c0_i32_1 = arith.constant 0 : i32
    return %c0_i32, %c0_i32_0 : i32, i32
  }
  func.func @transform_3(%arg0: i32) -> (i32, i32) {
    %c0_i32 = arith.constant 0 : i32
    %c0_i32_0 = arith.constant 0 : i32
    return %arg0, %c0_i32 : i32, i32
  }
}

</mosaic_0001>

<llo_original>
// kernel: decoder_forward.13
$region0: #{decoder_forward.13}
  #allocation0 [shape = 'u32[]', space=smem, size = 0x4, offset = 0x4, fixed_abs, tag = 'smem constant byte address 0x4 - core index']
  #allocation1 [shape = 'u32[144,128]{1,0:T(1,128)}', space=vmem, size = 0x12000, scoped, tag = 'internal scratch']
  %s0 = inlined_call_operand.vmem [shape: bf16[8,32], index: 0, kind: input, shape index: {}]
  %s1 = inlined_call_operand.vmem [shape: bf16[32,128], index: 1, kind: input, shape index: {}]
  %s2 = inlined_call_operand.vmem [shape: f32[1,128], index: 2, kind: input, shape index: {}]
  %s3 = inlined_call_operand.vmem [shape: bf16[8,128], index: 3, kind: output, shape index: {}]
  %s4 = sld [smem:[#allocation0]]
  $region22: #{decoder_forward.13} parent=0
    _
  %s6 = ssub.s32 1, %s4
  %s7 = scalar_select 0, %s6, %s4
  // Predicated region
  $region2: #{decoder_forward.13} parent=0 // pred_check
    _
  $region3: #{decoder_forward.13} parent=0 // pred_check_branch
    %9 = sbr.rel (0) target = $region5
  $region4: #{decoder_forward.13} parent=0 // pred_region
    _
  $region5: #{decoder_forward.13} parent=0 // pred_fallthru
    _
  // Predicated region
  $region6: #{decoder_forward.13} parent=0 // pred_check
    _
  $region7: #{decoder_forward.13} parent=0 // pred_check_branch
    %11 = sbr.rel (0) target = $region9
  $region8: #{decoder_forward.13} parent=0 // pred_region
    _
  $region9: #{decoder_forward.13} parent=0 // pred_fallthru
    _
  // Predicated region
  $region10: #{decoder_forward.13} parent=0 // pred_check
    _
  $region11: #{decoder_forward.13} parent=0 // pred_check_branch
    %13 = sbr.rel (0) target = $region13
  $region12: #{decoder_forward.13} parent=0 // pred_region
    _
  $region13: #{decoder_forward.13} parent=0 // pred_fallthru
    _
  %v15 = vld [vmem:[%s0] sm:$0xf]
  %v16 = vld [vmem:[%s1] sm:$0xf]
  %v17 = vld [vmem:[%s1 + $0x4] sm:$0xf]
  %v18 = vld [vmem:[%s1 + $0x8] sm:$0xf]
  %v19 = vld [vmem:[%s1 + $0xc] sm:$0xf]
  %v20 = vld [vmem:[%s2] sm:$0x1]
  %v22 = vlaneseq
  %v23 = vshrl.u32 %v22, 7
  %v24 = vsub.s32 0, %v23
  %v25 = vrot.slane %v20, %v24
  %v31 = vunpack.c.l.b16 %v16
  %v32 = vunpack.c.l.b16 %v17
  %v33 = vunpack.c.l.b16 %v18
  %v34 = vunpack.c.l.b16 %v19
  %v35 = vpack.c.b16 %v32, %v31
  %v36 = vpack.c.b16 %v34, %v33
  %vm39 = vcmask 261120
  %v41 = vsel %vm39, %v15, 0
  %43 = vmatprep.subr.bf16.mxu0 0
  %44 = vmatpush1.bf16.msra.mxu0 %v35
  %45 = vmatprep.subr.bf16.mxu0 0
  %46 = vmatpush1.bf16.msra.mxu0 %v36
  %47 = vmatprep.subr.bf16.mxu0 0
  %48 = vmatpush1.bf16.msra.mxu0 0
  %49 = vmatprep.subr.bf16.mxu0 0
  %50 = vmatpush1.bf16.msra.mxu0 0
  %51 = vmatprep.subr.bf16.mxu0 0
  %52 = vmatpush1.bf16.msra.mxu0 0
  %53 = vmatprep.subr.bf16.mxu0 0
  %54 = vmatpush1.bf16.msra.mxu0 0
  %55 = vmatprep.subr.bf16.mxu0 0
  %56 = vmatpush1.bf16.msra.mxu0 0
  %57 = vmatprep.subr.bf16.mxu0 0
  %58 = vmatpush1.bf16.msra.mxu0 0
  %59 = vmatprep.subr.bf16.mxu0 0
  %60 = vmatpush1.bf16.msra.mxu0 0
  %61 = vmatprep.subr.bf16.mxu0 0
  %62 = vmatpush1.bf16.msra.mxu0 0
  %63 = vmatprep.subr.bf16.mxu0 0
  %64 = vmatpush1.bf16.msra.mxu0 0
  %65 = vmatprep.subr.bf16.mxu0 0
  %66 = vmatpush1.bf16.msra.mxu0 0
  %67 = vmatprep.subr.bf16.mxu0 0
  %68 = vmatpush1.bf16.msra.mxu0 0
  %69 = vmatprep.subr.bf16.mxu0 0
  %70 = vmatpush1.bf16.msra.mxu0 0
  %71 = vmatprep.subr.bf16.mxu0 0
  %72 = vmatpush1.bf16.msra.mxu0 0
  %73 = vmatprep.subr.bf16.mxu0 0
  %74 = vmatpush1.bf16.msra.mxu0 0
  %75 = vmatprep.mubr.bf16.mxu0 0
  %76 = vmatmul.mubr.bf16.gmra.mrb[0].mxu0 %v41
  %v77 = vpop.f32.mrb[0].mxu0
  %v78 = vadd.f32 %v25, %v77
  %v79 = vpop.f32.mrb[0].mxu0
  %v80 = vpop.f32.mrb[0].mxu0
  %v81 = vpop.f32.mrb[0].mxu0
  %82 = vdwg.mxu0
  %v83 = vpack.c.bf16 %v78, %v78
  %84 = vst [vmem:[%s3] sm:$0xf] %v83
  // Predicated region
  $region14: #{decoder_forward.13} parent=0 // pred_check
    _
  $region15: #{decoder_forward.13} parent=0 // pred_check_branch
    %86 = sbr.rel (0) target = $region17
  $region16: #{decoder_forward.13} parent=0 // pred_region
    _
  $region17: #{decoder_forward.13} parent=0 // pred_fallthru
    _
  // Predicated region
  $region18: #{decoder_forward.13} parent=0 // pred_check
    _
  $region19: #{decoder_forward.13} parent=0 // pred_check_branch
    %88 = sbr.rel (0) target = $region21
  $region20: #{decoder_forward.13} parent=0 // pred_region
    _
  $region21: #{decoder_forward.13} parent=0 // pred_fallthru
    _

// kernel: decoder_forward.14
$region0: #{decoder_forward.14}
  #allocation0 [shape = 'u32[]', space=smem, size = 0x4, offset = 0x4, fixed_abs, tag = 'smem constant byte address 0x4 - core index']
  #allocation1 [shape = 'u32[144,128]{1,0:T(1,128)}', space=vmem, size = 0x12000, scoped, tag = 'internal scratch']
  %s0 = inlined_call_operand.vmem [shape: bf16[8,32], index: 0, kind: input, shape index: {}]
  %s1 = inlined_call_operand.vmem [shape: bf16[32,128], index: 1, kind: input, shape index: {}]
  %s2 = inlined_call_operand.vmem [shape: f32[1,128], index: 2, kind: input, shape index: {}]
  %s3 = inlined_call_operand.vmem [shape: bf16[8,128], index: 3, kind: output, shape index: {}]
  %s4 = sld [smem:[#allocation0]]
  $region22: #{decoder_forward.14} parent=0
    _
  %s6 = ssub.s32 1, %s4
  %s7 = scalar_select 0, %s6, %s4
  // Predicated region
  $region2: #{decoder_forward.14} parent=0 // pred_check
    _
  $region3: #{decoder_forward.14} parent=0 // pred_check_branch
    %9 = sbr.rel (0) target = $region5
  $region4: #{decoder_forward.14} parent=0 // pred_region
    _
  $region5: #{decoder_forward.14} parent=0 // pred_fallthru
    _
  // Predicated region
  $region6: #{decoder_forward.14} parent=0 // pred_check
    _
  $region7: #{decoder_forward.14} parent=0 // pred_check_branch
    %11 = sbr.rel (0) target = $region9
  $region8: #{decoder_forward.14} parent=0 // pred_region
    _
  $region9: #{decoder_forward.14} parent=0 // pred_fallthru
    _
  // Predicated region
  $region10: #{decoder_forward.14} parent=0 // pred_check
    _
  $region11: #{decoder_forward.14} parent=0 // pred_check_branch
    %13 = sbr.rel (0) target = $region13
  $region12: #{decoder_forward.14} parent=0 // pred_region
    _
  $region13: #{decoder_forward.14} parent=0 // pred_fallthru
    _
  %v15 = vld [vmem:[%s0] sm:$0xf]
  %v16 = vld [vmem:[%s1] sm:$0xf]
  %v17 = vld [vmem:[%s1 + $0x4] sm:$0xf]
  %v18 = vld [vmem:[%s1 + $0x8] sm:$0xf]
  %v19 = vld [vmem:[%s1 + $0xc] sm:$0xf]
  %v20 = vld [vmem:[%s2] sm:$0x1]
  %v22 = vlaneseq
  %v23 = vshrl.u32 %v22, 7
  %v24 = vsub.s32 0, %v23
  %v25 = vrot.slane %v20, %v24
  %v31 = vunpack.c.l.b16 %v16
  %v32 = vunpack.c.l.b16 %v17
  %v33 = vunpack.c.l.b16 %v18
  %v34 = vunpack.c.l.b16 %v19
  %v35 = vpack.c.b16 %v32, %v31
  %v36 = vpack.c.b16 %v34, %v33
  %vm39 = vcmask 261120
  %v41 = vsel %vm39, %v15, 0
  %43 = vmatprep.subr.bf16.mxu0 0
  %44 = vmatpush1.bf16.msra.mxu0 %v35
  %45 = vmatprep.subr.bf16.mxu0 0
  %46 = vmatpush1.bf16.msra.mxu0 %v36
  %47 = vmatprep.subr.bf16.mxu0 0
  %48 = vmatpush1.bf16.msra.mxu0 0
  %49 = vmatprep.subr.bf16.mxu0 0
  %50 = vmatpush1.bf16.msra.mxu0 0
  %51 = vmatprep.subr.bf16.mxu0 0
  %52 = vmatpush1.bf16.msra.mxu0 0
  %53 = vmatprep.subr.bf16.mxu0 0
  %54 = vmatpush1.bf16.msra.mxu0 0
  %55 = vmatprep.subr.bf16.mxu0 0
  %56 = vmatpush1.bf16.msra.mxu0 0
  %57 = vmatprep.subr.bf16.mxu0 0
  %58 = vmatpush1.bf16.msra.mxu0 0
  %59 = vmatprep.subr.bf16.mxu0 0
  %60 = vmatpush1.bf16.msra.mxu0 0
  %61 = vmatprep.subr.bf16.mxu0 0
  %62 = vmatpush1.bf16.msra.mxu0 0
  %63 = vmatprep.subr.bf16.mxu0 0
  %64 = vmatpush1.bf16.msra.mxu0 0
  %65 = vmatprep.subr.bf16.mxu0 0
  %66 = vmatpush1.bf16.msra.mxu0 0
  %67 = vmatprep.subr.bf16.mxu0 0
  %68 = vmatpush1.bf16.msra.mxu0 0
  %69 = vmatprep.subr.bf16.mxu0 0
  %70 = vmatpush1.bf16.msra.mxu0 0
  %71 = vmatprep.subr.bf16.mxu0 0
  %72 = vmatpush1.bf16.msra.mxu0 0
  %73 = vmatprep.subr.bf16.mxu0 0
  %74 = vmatpush1.bf16.msra.mxu0 0
  %75 = vmatprep.mubr.bf16.mxu0 0
  %76 = vmatmul.mubr.bf16.gmra.mrb[0].mxu0 %v41
  %v77 = vpop.f32.mrb[0].mxu0
  %v78 = vadd.f32 %v25, %v77
  %v79 = vpop.f32.mrb[0].mxu0
  %v80 = vpop.f32.mrb[0].mxu0
  %v81 = vpop.f32.mrb[0].mxu0
  %82 = vdwg.mxu0
  %vm83 = vcmp.gt.f32.partialorder %v78, 0.0
  %v84 = vmul.f32 %v78, 0.01
  %v85 = vsel %vm83, %v78, %v84
  %v86 = vpack.c.bf16 %v85, %v85
  %87 = vst [vmem:[%s3] sm:$0xf] %v86
  // Predicated region
  $region14: #{decoder_forward.14} parent=0 // pred_check
    _
  $region15: #{decoder_forward.14} parent=0 // pred_check_branch
    %89 = sbr.rel (0) target = $region17
  $region16: #{decoder_forward.14} parent=0 // pred_region
    _
  $region17: #{decoder_forward.14} parent=0 // pred_fallthru
    _
  // Predicated region
  $region18: #{decoder_forward.14} parent=0 // pred_check
    _
  $region19: #{decoder_forward.14} parent=0 // pred_check_branch
    %91 = sbr.rel (0) target = $region21
  $region20: #{decoder_forward.14} parent=0 // pred_region
    _
  $region21: #{decoder_forward.14} parent=0 // pred_fallthru
    _

// kernel: decoder_forward.16
$region0: #{decoder_forward.16}
  #allocation0 [shape = 'u32[]', space=smem, size = 0x4, offset = 0x4, fixed_abs, tag = 'smem constant byte address 0x4 - core index']
  #allocation1 [shape = 'u32[144,128]{1,0:T(1,128)}', space=vmem, size = 0x12000, scoped, tag = 'internal scratch']
  %s0 = inlined_call_operand.vmem [shape: bf16[32,16], index: 0, kind: input, shape index: {}]
  %s1 = inlined_call_operand.vmem [shape: f32[2,16], index: 1, kind: input, shape index: {}]
  %s2 = inlined_call_operand.vmem [shape: f32[1,16], index: 2, kind: input, shape index: {}]
  %s3 = inlined_call_operand.vmem [shape: f32[1,16], index: 3, kind: input, shape index: {}]
  %s4 = inlined_call_operand.vmem [shape: bf16[32,16], index: 4, kind: output, shape index: {}]
  %s5 = sld [smem:[#allocation0]]
  $region26: #{decoder_forward.16} parent=0
    _
  %s7 = ssub.s32 1, %s5
  %s8 = scalar_select 0, %s7, %s5
  // Predicated region
  $region2: #{decoder_forward.16} parent=0 // pred_check
    _
  $region3: #{decoder_forward.16} parent=0 // pred_check_branch
    %10 = sbr.rel (0) target = $region5
  $region4: #{decoder_forward.16} parent=0 // pred_region
    _
  $region5: #{decoder_forward.16} parent=0 // pred_fallthru
    _
  // Predicated region
  $region6: #{decoder_forward.16} parent=0 // pred_check
    _
  $region7: #{decoder_forward.16} parent=0 // pred_check_branch
    %12 = sbr.rel (0) target = $region9
  $region8: #{decoder_forward.16} parent=0 // pred_region
    _
  $region9: #{decoder_forward.16} parent=0 // pred_fallthru
    _
  // Predicated region
  $region10: #{decoder_forward.16} parent=0 // pred_check
    _
  $region11: #{decoder_forward.16} parent=0 // pred_check_branch
    %14 = sbr.rel (0) target = $region13
  $region12: #{decoder_forward.16} parent=0 // pred_region
    _
  $region13: #{decoder_forward.16} parent=0 // pred_fallthru
    _
  // Predicated region
  $region14: #{decoder_forward.16} parent=0 // pred_check
    _
  $region15: #{decoder_forward.16} parent=0 // pred_check_branch
    %16 = sbr.rel (0) target = $region17
  $region16: #{decoder_forward.16} parent=0 // pred_region
    _
  $region17: #{decoder_forward.16} parent=0 // pred_fallthru
    _
  %v17 = vld [vmem:[%s1] sm:$0x3]
  %v18 = vmul.f32 %v17, 0.03125
  %v19 = vmul.f32 %v18, %v18
  %v21 = vrot.slane %v19, 7
  %v23 = vsub.f32 %v18, %v21
  %v24 = vmax.f32 %v23, 0.0
  %v25 = vadd.f32 %v24, 1e-05
  %v26 = vrsqrt.pop %v25
  %v27 = vld [vmem:[%s2] sm:$0x1]
  %v29 = vlaneseq
  %v30 = vshrl.u32 %v29, 7
  %v31 = vsub.s32 0, %v30
  %v32 = vrot.slane %v27, %v31
  %v34 = vmul.f32 %v26, %v32
  %v35 = vld [vmem:[%s3] sm:$0x1]
  %v37 = vrot.slane %v34, 1
  %v39 = vmul.f32 %v18, %v37
  %v40 = vsub.f32 %v35, %v39
  %v41 = vld [vmem:[%s0] sm:$0xf]
  %v42 = vld [vmem:[%s0 + $0x4] sm:$0xf]
  %v43 = vld [vmem:[%s0 + $0x8] sm:$0xf]
  %v44 = vld [vmem:[%s0 + $0xc] sm:$0xf]
  %v45 = vunpack.c.l.bf16 %v41
  %v46 = vunpack.c.l.bf16 %v42
  %v47 = vunpack.c.l.bf16 %v43
  %v48 = vunpack.c.l.bf16 %v44
  %v49 = vlaneseq
  %v50 = vshrl.u32 %v49, 7
  %v51 = vsub.s32 1, %v50
  %v52 = vrot.slane %v34, %v51
  %v53 = vmul.f32 %v45, %v52
  %v54 = vmul.f32 %v46, %v52
  %v55 = vmul.f32 %v47, %v52
  %v56 = vmul.f32 %v48, %v52
  %v58 = vlaneseq
  %v59 = vshrl.u32 %v58, 7
  %v60 = vsub.s32 0, %v59
  %v61 = vrot.slane %v40, %v60
  %v63 = vadd.f32 %v53, %v61
  %v64 = vadd.f32 %v54, %v61
  %v65 = vadd.f32 %v55, %v61
  %v66 = vadd.f32 %v56, %v61
  %vm67 = vcmp.gt.f32.partialorder %v63, 0.0
  %vm68 = vcmp.gt.f32.partialorder %v64, 0.0
  %vm69 = vcmp.gt.f32.partialorder %v65, 0.0
  %vm70 = vcmp.gt.f32.partialorder %v66, 0.0
  %v71 = vmul.f32 %v63, 0.01
  %v72 = vmul.f32 %v64, 0.01
  %v73 = vmul.f32 %v65, 0.01
  %v74 = vmul.f32 %v66, 0.01
  %v75 = vsel %vm67, %v63, %v71
  %v76 = vsel %vm68, %v64, %v72
  %v77 = vsel %vm69, %v65, %v73
  %v78 = vsel %vm70, %v66, %v74
  %v79 = vpack.c.bf16 %v76, %v75
  %v80 = vpack.c.bf16 %v78, %v77
  %v83 = vunpack.c.l.b16 %v79
  %v84 = vunpack.c.h.b16 %v79
  %v85 = vunpack.c.l.b16 %v80
  %v86 = vunpack.c.h.b16 %v80
  %v87 = vpack.c.b16 %v83, %v83
  %v88 = vpack.c.b16 %v84, %v84
  %v89 = vpack.c.b16 %v85, %v85
  %v90 = vpack.c.b16 %v86, %v86
  %vm95 = vcmask 125952
  %96 = vst.msk [vmem:[%s4] sm:$0xf] %vm95, %v87
  %97 = vst.msk [vmem:[%s4 + $0x4] sm:$0xf] %vm95, %v88
  %98 = vst.msk [vmem:[%s4 + $0x8] sm:$0xf] %vm95, %v89
  %99 = vst.msk [vmem:[%s4 + $0xc] sm:$0xf] %vm95, %v90
  // Predicated region
  $region18: #{decoder_forward.16} parent=0 // pred_check
    _
  $region19: #{decoder_forward.16} parent=0 // pred_check_branch
    %101 = sbr.rel (0) target = $region21
  $region20: #{decoder_forward.16} parent=0 // pred_region
    _
  $region21: #{decoder_forward.16} parent=0 // pred_fallthru
    _
  // Predicated region
  $region22: #{decoder_forward.16} parent=0 // pred_check
    _
  $region23: #{decoder_forward.16} parent=0 // pred_check_branch
    %103 = sbr.rel (0) target = $region25
  $region24: #{decoder_forward.16} parent=0 // pred_region
    _
  $region25: #{decoder_forward.16} parent=0 // pred_fallthru
    _

// kernel: decoder_forward.15
$region0: #{decoder_forward.15}
  #allocation0 [shape = 'u32[]', space=smem, size = 0x4, offset = 0x4, fixed_abs, tag = 'smem constant byte address 0x4 - core index']
  #allocation1 [shape = 'u32[144,128]{1,0:T(1,128)}', space=vmem, size = 0x12000, scoped, tag = 'internal scratch']
  %s0 = inlined_call_operand.vmem [shape: bf16[32,288], index: 0, kind: input, shape index: {}]
  %s1 = inlined_call_operand.vmem [shape: bf16[288,16], index: 1, kind: input, shape index: {}]
  %s2 = inlined_call_operand.vmem [shape: bf16[32,16], index: 2, kind: output, shape index: {0}]
  %s3 = inlined_call_operand.vmem [shape: f32[2,16], index: 3, kind: output, shape index: {1}]
  %4 = xla_tuple %s2, %s3
  %s5 = sld [smem:[#allocation0]]
  $region30: #{decoder_forward.15} parent=0
    _
  %s7 = ssub.s32 1, %s5
  %s8 = scalar_select 0, %s7, %s5
  // Predicated region
  $region2: #{decoder_forward.15} parent=0 // pred_check
    _
  $region3: #{decoder_forward.15} parent=0 // pred_check_branch
    %10 = sbr.rel (0) target = $region5
  $region4: #{decoder_forward.15} parent=0 // pred_region
    _
  $region5: #{decoder_forward.15} parent=0 // pred_fallthru
    _
  // Predicated region
  $region6: #{decoder_forward.15} parent=0 // pred_check
    _
  $region7: #{decoder_forward.15} parent=0 // pred_check_branch
    %12 = sbr.rel (0) target = $region9
  $region8: #{decoder_forward.15} parent=0 // pred_region
    _
  $region9: #{decoder_forward.15} parent=0 // pred_fallthru
    _
  %p14 = scmp.eq.s32.totalorder 0, 0
  // Predicated region
  $region10: #{decoder_forward.15} parent=0 // pred_check
    %p15 = pneg %p14
  $region11: #{decoder_forward.15} parent=0 // pred_check_branch
    %17 = sbr.rel (%p15) target = $region13
  $region12: #{decoder_forward.15} parent=0 // pred_region
    %vm18 = vcmask 123904
    %19 = vst.msk [vmem:[%s3] sm:$0x3] %vm18, 0.0
  $region13: #{decoder_forward.15} parent=0 // pred_fallthru
    _
  %v20 = vld [vmem:[%s0] sm:$0xff]
  %v21 = vld [vmem:[%s0 + $0x8] sm:$0xf]
  %v22 = vld [vmem:[%s0 + $0xc] sm:$0xff]
  %v23 = vld [vmem:[%s0 + $0x14] sm:$0xf]
  %v24 = vld [vmem:[%s0 + $0x18] sm:$0xff]
  %v25 = vld [vmem:[%s0 + $0x20] sm:$0xf]
  %v26 = vld [vmem:[%s0 + $0x24] sm:$0xff]
  %v27 = vld [vmem:[%s0 + $0x2c] sm:$0xf]
  %v28 = vld [vmem:[%s1] sm:$0xf]
  %v29 = vld [vmem:[%s1 + $0x4] sm:$0xf]
  %v30 = vld [vmem:[%s1 + $0x8] sm:$0xf]
  %v31 = vld [vmem:[%s1 + $0xc] sm:$0xf]
  %v32 = vld [vmem:[%s1 + $0x10] sm:$0xf]
  %v33 = vld [vmem:[%s1 + $0x14] sm:$0xf]
  %v34 = vld [vmem:[%s1 + $0x18] sm:$0xf]
  %v35 = vld [vmem:[%s1 + $0x1c] sm:$0xf]
  %v36 = vld [vmem:[%s1 + $0x20] sm:$0xf]
  %v37 = vld [vmem:[%s1 + $0x24] sm:$0xf]
  %v38 = vld [vmem:[%s1 + $0x28] sm:$0xf]
  %v39 = vld [vmem:[%s1 + $0x2c] sm:$0xf]
  %v40 = vld [vmem:[%s1 + $0x30] sm:$0xf]
  %v41 = vld [vmem:[%s1 + $0x34] sm:$0xf]
  %v42 = vld [vmem:[%s1 + $0x38] sm:$0xf]
  %v43 = vld [vmem:[%s1 + $0x3c] sm:$0xf]
  %v44 = vld [vmem:[%s1 + $0x40] sm:$0xf]
  %v45 = vld [vmem:[%s1 + $0x44] sm:$0xf]
  %v46 = vld [vmem:[%s1 + $0x48] sm:$0xf]
  %v47 = vld [vmem:[%s1 + $0x4c] sm:$0xf]
  %v48 = vld [vmem:[%s1 + $0x50] sm:$0xf]
  %v49 = vld [vmem:[%s1 + $0x54] sm:$0xf]
  %v50 = vld [vmem:[%s1 + $0x58] sm:$0xf]
  %v51 = vld [vmem:[%s1 + $0x5c] sm:$0xf]
  %v52 = vld [vmem:[%s1 + $0x60] sm:$0xf]
  %v53 = vld [vmem:[%s1 + $0x64] sm:$0xf]
  %v54 = vld [vmem:[%s1 + $0x68] sm:$0xf]
  %v55 = vld [vmem:[%s1 + $0x6c] sm:$0xf]
  %v56 = vld [vmem:[%s1 + $0x70] sm:$0xf]
  %v57 = vld [vmem:[%s1 + $0x74] sm:$0xf]
  %v58 = vld [vmem:[%s1 + $0x78] sm:$0xf]
  %v59 = vld [vmem:[%s1 + $0x7c] sm:$0xf]
  %v60 = vld [vmem:[%s1 + $0x80] sm:$0xf]
  %v61 = vld [vmem:[%s1 + $0x84] sm:$0xf]
  %v62 = vld [vmem:[%s1 + $0x88] sm:$0xf]
  %v63 = vld [vmem:[%s1 + $0x8c] sm:$0xf]
  %v72 = vunpack.c.l.b16 %v20
  %v73 = vunpack.c.h.b16 %v20
  %v74 = vunpack.c.l.b16 %v21
  %v75 = vunpack.c.l.b16 %v22
  %v76 = vunpack.c.h.b16 %v22
  %v77 = vunpack.c.l.b16 %v23
  %v78 = vunpack.c.l.b16 %v24
  %v79 = vunpack.c.h.b16 %v24
  %v80 = vunpack.c.l.b16 %v25
  %v81 = vunpack.c.l.b16 %v26
  %v82 = vunpack.c.h.b16 %v26
  %v83 = vunpack.c.l.b16 %v27
  %v84 = vpack.c.b16 %v75, %v72
  %v85 = vpack.c.b16 %v76, %v73
  %v86 = vpack.c.b16 %v77, %v74
  %v87 = vpack.c.b16 %v81, %v78
  %v88 = vpack.c.b16 %v82, %v79
  %v89 = vpack.c.b16 %v83, %v80
  %v130 = vunpack.c.l.b16 %v28
  %v131 = vunpack.c.l.b16 %v29
  %v132 = vunpack.c.l.b16 %v30
  %v133 = vunpack.c.l.b16 %v31
  %v134 = vunpack.c.l.b16 %v32
  %v135 = vunpack.c.l.b16 %v33
  %v136 = vunpack.c.l.b16 %v34
  %v137 = vunpack.c.l.b16 %v35
  %v138 = vunpack.c.l.b16 %v36
  %v139 = vunpack.c.l.b16 %v37
  %v140 = vunpack.c.l.b16 %v38
  %v141 = vunpack.c.l.b16 %v39
  %v142 = vunpack.c.l.b16 %v40
  %v143 = vunpack.c.l.b16 %v41
  %v144 = vunpack.c.l.b16 %v42
  %v145 = vunpack.c.l.b16 %v43
  %v146 = vunpack.c.l.b16 %v44
  %v147 = vunpack.c.l.b16 %v45
  %v148 = vunpack.c.l.b16 %v46
  %v149 = vunpack.c.l.b16 %v47
  %v150 = vunpack.c.l.b16 %v48
  %v151 = vunpack.c.l.b16 %v49
  %v152 = vunpack.c.l.b16 %v50
  %v153 = vunpack.c.l.b16 %v51
  %v154 = vunpack.c.l.b16 %v52
  %v155 = vunpack.c.l.b16 %v53
  %v156 = vunpack.c.l.b16 %v54
  %v157 = vunpack.c.l.b16 %v55
  %v158 = vunpack.c.l.b16 %v56
  %v159 = vunpack.c.l.b16 %v57
  %v160 = vunpack.c.l.b16 %v58
  %v161 = vunpack.c.l.b16 %v59
  %v162 = vunpack.c.l.b16 %v60
  %v163 = vunpack.c.l.b16 %v61
  %v164 = vunpack.c.l.b16 %v62
  %v165 = vunpack.c.l.b16 %v63
  %v166 = vpack.c.b16 %v131, %v130
  %v167 = vpack.c.b16 %v133, %v132
  %v168 = vpack.c.b16 %v135, %v134
  %v169 = vpack.c.b16 %v137, %v136
  %v170 = vpack.c.b16 %v139, %v138
  %v171 = vpack.c.b16 %v141, %v140
  %v172 = vpack.c.b16 %v143, %v142
  %v173 = vpack.c.b16 %v145, %v144
  %v174 = vpack.c.b16 %v147, %v146
  %v175 = vpack.c.b16 %v149, %v148
  %v176 = vpack.c.b16 %v151, %v150
  %v177 = vpack.c.b16 %v153, %v152
  %v178 = vpack.c.b16 %v155, %v154
  %v179 = vpack.c.b16 %v157, %v156
  %v180 = vpack.c.b16 %v159, %v158
  %v181 = vpack.c.b16 %v161, %v160
  %v182 = vpack.c.b16 %v163, %v162
  %v183 = vpack.c.b16 %v165, %v164
  %vm202 = vcmask 261120
  %v204 = vsel %vm202, %v86, 0
  %v207 = vsel %vm202, %v89, 0
  %209 = vmatprep.subr.bf16.mxu0 0
  %210 = vmatpush1.bf16.msra.mxu0 %v166
  %211 = vmatprep.subr.bf16.mxu0 0
  %212 = vmatpush1.bf16.msra.mxu0 %v167
  %213 = vmatprep.subr.bf16.mxu0 0
  %214 = vmatpush1.bf16.msra.mxu0 %v168
  %215 = vmatprep.subr.bf16.mxu0 0
  %216 = vmatpush1.bf16.msra.mxu0 %v169
  %217 = vmatprep.subr.bf16.mxu0 0
  %218 = vmatpush1.bf16.msra.mxu0 %v170
  %219 = vmatprep.subr.bf16.mxu0 0
  %220 = vmatpush1.bf16.msra.mxu0 %v171
  %221 = vmatprep.subr.bf16.mxu0 0
  %222 = vmatpush1.bf16.msra.mxu0 %v172
  %223 = vmatprep.subr.bf16.mxu0 0
  %224 = vmatpush1.bf16.msra.mxu0 %v173
  %225 = vmatprep.subr.bf16.mxu0 0
  %226 = vmatpush1.bf16.msra.mxu0 %v174
  %227 = vmatprep.subr.bf16.mxu0 0
  %228 = vmatpush1.bf16.msra.mxu0 %v175
  %229 = vmatprep.subr.bf16.mxu0 0
  %230 = vmatpush1.bf16.msra.mxu0 %v176
  %231 = vmatprep.subr.bf16.mxu0 0
  %232 = vmatpush1.bf16.msra.mxu0 %v177
  %233 = vmatprep.subr.bf16.mxu0 0
  %234 = vmatpush1.bf16.msra.mxu0 %v178
  %235 = vmatprep.subr.bf16.mxu0 0
  %236 = vmatpush1.bf16.msra.mxu0 %v179
  %237 = vmatprep.subr.bf16.mxu0 0
  %238 = vmatpush1.bf16.msra.mxu0 %v180
  %239 = vmatprep.subr.bf16.mxu0 0
  %240 = vmatpush1.bf16.msra.mxu0 %v181
  %241 = vmatprep.mubr.bf16.mxu0 %v85
  %242 = vmatmul.mubr.bf16.gmra.mrb[0].mxu0 %v84
  %v243 = vpop.f32.mrb[0].mxu0
  %v244 = vadd.f32 0.0, %v243
  %v245 = vpop.f32.mrb[0].mxu0
  %v246 = vpop.f32.mrb[0].mxu0
  %v247 = vadd.f32 0.0, %v246
  %v248 = vpop.f32.mrb[0].mxu0
  %249 = vmatprep.mubr.bf16.mxu0 %v88
  %250 = vmatmul.mubr.bf16.gmra.mrb[0].mxu0 %v87
  %v251 = vpop.f32.mrb[0].mxu0
  %v252 = vadd.f32 0.0, %v251
  %v253 = vpop.f32.mrb[0].mxu0
  %v254 = vpop.f32.mrb[0].mxu0
  %v255 = vadd.f32 0.0, %v254
  %v256 = vpop.f32.mrb[0].mxu0
  %257 = vdwg.mxu0
  %258 = vmatprep.subr.bf16.mxu0 0
  %259 = vmatpush1.bf16.msra.mxu0 %v182
  %260 = vmatprep.subr.bf16.mxu0 0
  %261 = vmatpush1.bf16.msra.mxu0 %v183
  %262 = vmatprep.subr.bf16.mxu0 0
  %263 = vmatpush1.bf16.msra.mxu0 0
  %264 = vmatprep.subr.bf16.mxu0 0
  %265 = vmatpush1.bf16.msra.mxu0 0
  %266 = vmatprep.subr.bf16.mxu0 0
  %267 = vmatpush1.bf16.msra.mxu0 0
  %268 = vmatprep.subr.bf16.mxu0 0
  %269 = vmatpush1.bf16.msra.mxu0 0
  %270 = vmatprep.subr.bf16.mxu0 0
  %271 = vmatpush1.bf16.msra.mxu0 0
  %272 = vmatprep.subr.bf16.mxu0 0
  %273 = vmatpush1.bf16.msra.mxu0 0
  %274 = vmatprep.subr.bf16.mxu0 0
  %275 = vmatpush1.bf16.msra.mxu0 0
  %276 = vmatprep.subr.bf16.mxu0 0
  %277 = vmatpush1.bf16.msra.mxu0 0
  %278 = vmatprep.subr.bf16.mxu0 0
  %279 = vmatpush1.bf16.msra.mxu0 0
  %280 = vmatprep.subr.bf16.mxu0 0
  %281 = vmatpush1.bf16.msra.mxu0 0
  %282 = vmatprep.subr.bf16.mxu0 0
  %283 = vmatpush1.bf16.msra.mxu0 0
  %284 = vmatprep.subr.bf16.mxu0 0
  %285 = vmatpush1.bf16.msra.mxu0 0
  %286 = vmatprep.subr.bf16.mxu0 0
  %287 = vmatpush1.bf16.msra.mxu0 0
  %288 = vmatprep.subr.bf16.mxu0 0
  %289 = vmatpush1.bf16.msra.mxu0 0
  %290 = vmatprep.mubr.bf16.mxu0 0
  %291 = vmatmul.mubr.bf16.gmra.mrb[0].mxu0 %v204
  %v292 = vpop.f32.mrb[0].mxu0
  %v293 = vadd.f32 %v244, %v292
  %v294 = vpop.f32.mrb[0].mxu0
  %v295 = vpop.f32.mrb[0].mxu0
  %v296 = vadd.f32 %v247, %v295
  %v297 = vpop.f32.mrb[0].mxu0
  %298 = vmatprep.mubr.bf16.mxu0 0
  %299 = vmatmul.mubr.bf16.gmra.mrb[0].mxu0 %v207
  %v300 = vpop.f32.mrb[0].mxu0
  %v301 = vadd.f32 %v252, %v300
  %v302 = vpop.f32.mrb[0].mxu0
  %v303 = vpop.f32.mrb[0].mxu0
  %v304 = vadd.f32 %v255, %v303
  %v305 = vpop.f32.mrb[0].mxu0
  %306 = vdwg.mxu0
  %v307 = vpack.c.bf16 %v296, %v293
  %v308 = vpack.c.bf16 %v304, %v301
  %v311 = vunpack.c.l.b16 %v307
  %v312 = vunpack.c.h.b16 %v307
  %v313 = vunpack.c.l.b16 %v308
  %v314 = vunpack.c.h.b16 %v308
  %v315 = vpack.c.b16 %v311, %v311
  %v316 = vpack.c.b16 %v312, %v312
  %v317 = vpack.c.b16 %v313, %v313
  %v318 = vpack.c.b16 %v314, %v314
  %vm323 = vcmask 125952
  %324 = vst.msk [vmem:[%s2] sm:$0xf] %vm323, %v315
  %325 = vst.msk [vmem:[%s2 + $0x4] sm:$0xf] %vm323, %v316
  %326 = vst.msk [vmem:[%s2 + $0x8] sm:$0xf] %vm323, %v317
  %327 = vst.msk [vmem:[%s2 + $0xc] sm:$0xf] %vm323, %v318
  %vm328 = vcmask 130048
  %v329 = vsel %vm328, %v293, 0.0
  %v330 = vsel %vm328, %v296, 0.0
  %v331 = vadd.f32 %v329, %v330
  %v332 = vsel %vm328, %v301, 0.0
  %v333 = vadd.f32 %v331, %v332
  %v334 = vsel %vm328, %v304, 0.0
  %v335 = vadd.f32 %v333, %v334
  %v336 = vrot.slane %v335, 4
  %v337 = vadd.f32 %v335, %v336
  %v338 = vrot.slane %v337, 2
  %v339 = vadd.f32 %v337, %v338
  %v340 = vrot.slane %v339, 1
  %v341 = vadd.f32 %v339, %v340
  %v342 = vmul.f32 %v293, %v293
  %v343 = vmul.f32 %v296, %v296
  %v344 = vmul.f32 %v301, %v301
  %v345 = vmul.f32 %v304, %v304
  %v346 = vsel %vm328, %v342, 0.0
  %v347 = vsel %vm328, %v343, 0.0
  %v348 = vadd.f32 %v346, %v347
  %v349 = vsel %vm328, %v344, 0.0
  %v350 = vadd.f32 %v348, %v349
  %v351 = vsel %vm328, %v345, 0.0
  %v352 = vadd.f32 %v350, %v351
  %v353 = vrot.slane %v352, 4
  %v354 = vadd.f32 %v352, %v353
  %v355 = vrot.slane %v354, 2
  %v356 = vadd.f32 %v354, %v355
  %v357 = vrot.slane %v356, 1
  %v358 = vadd.f32 %v356, %v357
  %v359 = vld [vmem:[%s3] sm:$0x3]
  %vm360 = vcmask 1040384
  %v361 = vsel %vm360, %v341, %v358
  %v362 = vadd.f32 %v359, %v361
  %vm363 = vcmask 123904
  %364 = vst.msk [vmem:[%s3] sm:$0x3] %vm363, %v362
  // Predicated region
  $region14: #{decoder_forward.15} parent=0 // pred_check
    _
  $region15: #{decoder_forward.15} parent=0 // pred_check_branch
    %366 = sbr.rel (0) target = $region17
  $region16: #{decoder_forward.15} parent=0 // pred_region
    _
  $region17: #{decoder_forward.15} parent=0 // pred_fallthru
    _
  // Predicated region
  $region18: #{decoder_forward.15} parent=0 // pred_check
    _
  $region19: #{decoder_forward.15} parent=0 // pred_check_branch
    %368 = sbr.rel (0) target = $region21
  $region20: #{decoder_forward.15} parent=0 // pred_region
    _
  $region21: #{decoder_forward.15} parent=0 // pred_fallthru
    _
  // Predicated region
  $region22: #{decoder_forward.15} parent=0 // pred_check
    _
  $region23: #{decoder_forward.15} parent=0 // pred_check_branch
    %370 = sbr.rel (0) target = $region25
  $region24: #{decoder_forward.15} parent=0 // pred_region
    _
  $region25: #{decoder_forward.15} parent=0 // pred_fallthru
    _
  // Predicated region
  $region26: #{decoder_forward.15} parent=0 // pred_check
    _
  $region27: #{decoder_forward.15} parent=0 // pred_check_branch
    %372 = sbr.rel (0) target = $region29
  $region28: #{decoder_forward.15} parent=0 // pred_region
    _
  $region29: #{decoder_forward.15} parent=0 // pred_fallthru
    _

// kernel: decoder_forward.19
$region0: #{decoder_forward.19}
  #allocation0 [shape = 'u32[]', space=smem, size = 0x4, offset = 0x4, fixed_abs, tag = 'smem constant byte address 0x4 - core index']
  #allocation1 [shape = 'u32[144,128]{1,0:T(1,128)}', space=vmem, size = 0x12000, scoped, tag = 'internal scratch']
  %s0 = inlined_call_operand.vmem [shape: bf16[32,16], index: 0, kind: input, shape index: {}]
  %s1 = inlined_call_operand.vmem [shape: bf16[16,64], index: 1, kind: input, shape index: {}]
  %s2 = inlined_call_operand.vmem [shape: f32[1,64], index: 2, kind: input, shape index: {}]
  %s3 = inlined_call_operand.vmem [shape: bf16[32,64], index: 3, kind: output, shape index: {}]
  %s4 = sld [smem:[#allocation0]]
  $region22: #{decoder_forward.19} parent=0
    _
  %s6 = ssub.s32 1, %s4
  %s7 = scalar_select 0, %s6, %s4
  // Predicated region
  $region2: #{decoder_forward.19} parent=0 // pred_check
    _
  $region3: #{decoder_forward.19} parent=0 // pred_check_branch
    %9 = sbr.rel (0) target = $region5
  $region4: #{decoder_forward.19} parent=0 // pred_region
    _
  $region5: #{decoder_forward.19} parent=0 // pred_fallthru
    _
  // Predicated region
  $region6: #{decoder_forward.19} parent=0 // pred_check
    _
  $region7: #{decoder_forward.19} parent=0 // pred_check_branch
    %11 = sbr.rel (0) target = $region9
  $region8: #{decoder_forward.19} parent=0 // pred_region
    _
  $region9: #{decoder_forward.19} parent=0 // pred_fallthru
    _
  // Predicated region
  $region10: #{decoder_forward.19} parent=0 // pred_check
    _
  $region11: #{decoder_forward.19} parent=0 // pred_check_branch
    %13 = sbr.rel (0) target = $region13
  $region12: #{decoder_forward.19} parent=0 // pred_region
    _
  $region13: #{decoder_forward.19} parent=0 // pred_fallthru
    _
  %v15 = vld [vmem:[%s0] sm:$0xf]
  %v16 = vld [vmem:[%s0 + $0x4] sm:$0xf]
  %v17 = vld [vmem:[%s0 + $0x8] sm:$0xf]
  %v18 = vld [vmem:[%s0 + $0xc] sm:$0xf]
  %v19 = vld [vmem:[%s1] sm:$0xf]
  %v20 = vld [vmem:[%s1 + $0x4] sm:$0xf]
  %v21 = vld [vmem:[%s2] sm:$0x1]
  %v23 = vlaneseq
  %v24 = vshrl.u32 %v23, 7
  %v25 = vsub.s32 0, %v24
  %v26 = vrot.slane %v21, %v25
  %v32 = vunpack.c.l.b16 %v15
  %v33 = vunpack.c.l.b16 %v16
  %v34 = vunpack.c.l.b16 %v17
  %v35 = vunpack.c.l.b16 %v18
  %v36 = vpack.c.b16 %v33, %v32
  %v37 = vpack.c.b16 %v35, %v34
  %v40 = vunpack.c.l.b16 %v19
  %v41 = vunpack.c.l.b16 %v20
  %v42 = vpack.c.b16 %v41, %v40
  %vm44 = vcmask 130048
  %v46 = vsel %vm44, %v36, 0
  %v49 = vsel %vm44, %v37, 0
  %51 = vmatprep.subr.bf16.mxu0 0
  %52 = vmatpush1.bf16.msra.mxu0 %v42
  %53 = vmatprep.subr.bf16.mxu0 0
  %54 = vmatpush1.bf16.msra.mxu0 0
  %55 = vmatprep.subr.bf16.mxu0 0
  %56 = vmatpush1.bf16.msra.mxu0 0
  %57 = vmatprep.subr.bf16.mxu0 0
  %58 = vmatpush1.bf16.msra.mxu0 0
  %59 = vmatprep.subr.bf16.mxu0 0
  %60 = vmatpush1.bf16.msra.mxu0 0
  %61 = vmatprep.subr.bf16.mxu0 0
  %62 = vmatpush1.bf16.msra.mxu0 0
  %63 = vmatprep.subr.bf16.mxu0 0
  %64 = vmatpush1.bf16.msra.mxu0 0
  %65 = vmatprep.subr.bf16.mxu0 0
  %66 = vmatpush1.bf16.msra.mxu0 0
  %67 = vmatprep.subr.bf16.mxu0 0
  %68 = vmatpush1.bf16.msra.mxu0 0
  %69 = vmatprep.subr.bf16.mxu0 0
  %70 = vmatpush1.bf16.msra.mxu0 0
  %71 = vmatprep.subr.bf16.mxu0 0
  %72 = vmatpush1.bf16.msra.mxu0 0
  %73 = vmatprep.subr.bf16.mxu0 0
  %74 = vmatpush1.bf16.msra.mxu0 0
  %75 = vmatprep.subr.bf16.mxu0 0
  %76 = vmatpush1.bf16.msra.mxu0 0
  %77 = vmatprep.subr.bf16.mxu0 0
  %78 = vmatpush1.bf16.msra.mxu0 0
  %79 = vmatprep.subr.bf16.mxu0 0
  %80 = vmatpush1.bf16.msra.mxu0 0
  %81 = vmatprep.subr.bf16.mxu0 0
  %82 = vmatpush1.bf16.msra.mxu0 0
  %83 = vmatprep.mubr.bf16.mxu0 0
  %84 = vmatmul.mubr.bf16.gmra.mrb[0].mxu0 %v46
  %v85 = vpop.f32.mrb[0].mxu0
  %v86 = vadd.f32 %v26, %v85
  %v87 = vpop.f32.mrb[0].mxu0
  %v88 = vpop.f32.mrb[0].mxu0
  %v89 = vadd.f32 %v26, %v88
  %v90 = vpop.f32.mrb[0].mxu0
  %91 = vmatprep.mubr.bf16.mxu0 0
  %92 = vmatmul.mubr.bf16.gmra.mrb[0].mxu0 %v49
  %v93 = vpop.f32.mrb[0].mxu0
  %v94 = vadd.f32 %v26, %v93
  %v95 = vpop.f32.mrb[0].mxu0
  %v96 = vpop.f32.mrb[0].mxu0
  %v97 = vadd.f32 %v26, %v96
  %v98 = vpop.f32.mrb[0].mxu0
  %99 = vdwg.mxu0
  %vm100 = vcmp.gt.f32.partialorder %v86, 0.0
  %vm101 = vcmp.gt.f32.partialorder %v89, 0.0
  %vm102 = vcmp.gt.f32.partialorder %v94, 0.0
  %vm103 = vcmp.gt.f32.partialorder %v97, 0.0
  %v104 = vmul.f32 %v86, 0.01
  %v105 = vmul.f32 %v89, 0.01
  %v106 = vmul.f32 %v94, 0.01
  %v107 = vmul.f32 %v97, 0.01
  %v108 = vsel %vm100, %v86, %v104
  %v109 = vsel %vm101, %v89, %v105
  %v110 = vsel %vm102, %v94, %v106
  %v111 = vsel %vm103, %v97, %v107
  %v112 = vpack.c.bf16 %v109, %v108
  %v113 = vpack.c.bf16 %v111, %v110
  %v116 = vunpack.c.l.b16 %v112
  %v117 = vunpack.c.h.b16 %v112
  %v118 = vunpack.c.l.b16 %v113
  %v119 = vunpack.c.h.b16 %v113
  %v120 = vpack.c.b16 %v116, %v116
  %v121 = vpack.c.b16 %v117, %v117
  %v122 = vpack.c.b16 %v118, %v118
  %v123 = vpack.c.b16 %v119, %v119
  %vm128 = vcmask 519168
  %129 = vst.msk [vmem:[%s3] sm:$0xf] %vm128, %v120
  %130 = vst.msk [vmem:[%s3 + $0x4] sm:$0xf] %vm128, %v121
  %131 = vst.msk [vmem:[%s3 + $0x8] sm:$0xf] %vm128, %v122
  %132 = vst.msk [vmem:[%s3 + $0xc] sm:$0xf] %vm128, %v123
  // Predicated region
  $region14: #{decoder_forward.19} parent=0 // pred_check
    _
  $region15: #{decoder_forward.19} parent=0 // pred_check_branch
    %134 = sbr.rel (0) target = $region17
  $region16: #{decoder_forward.19} parent=0 // pred_region
    _
  $region17: #{decoder_forward.19} parent=0 // pred_fallthru
    _
  // Predicated region
  $region18: #{decoder_forward.19} parent=0 // pred_check
    _
  $region19: #{decoder_forward.19} parent=0 // pred_check_branch
    %136 = sbr.rel (0) target = $region21
  $region20: #{decoder_forward.19} parent=0 // pred_region
    _
  $region21: #{decoder_forward.19} parent=0 // pred_fallthru
    _

// kernel: decoder_forward.17
$region0: #{decoder_forward.17}
  #allocation0 [shape = 'u32[]', space=smem, size = 0x4, offset = 0x4, fixed_abs, tag = 'smem constant byte address 0x4 - core index']
  #allocation1 [shape = 'u32[144,128]{1,0:T(1,128)}', space=vmem, size = 0x12000, scoped, tag = 'internal scratch']
  %s0 = inlined_call_operand.vmem [shape: bf16[32,144], index: 0, kind: input, shape index: {}]
  %s1 = inlined_call_operand.vmem [shape: bf16[144,16], index: 1, kind: input, shape index: {}]
  %s2 = inlined_call_operand.vmem [shape: bf16[32,16], index: 2, kind: output, shape index: {0}]
  %s3 = inlined_call_operand.vmem [shape: f32[2,16], index: 3, kind: output, shape index: {1}]
  %4 = xla_tuple %s2, %s3
  %s5 = sld [smem:[#allocation0]]
  $region30: #{decoder_forward.17} parent=0
    _
  %s7 = ssub.s32 1, %s5
  %s8 = scalar_select 0, %s7, %s5
  // Predicated region
  $region2: #{decoder_forward.17} parent=0 // pred_check
    _
  $region3: #{decoder_forward.17} parent=0 // pred_check_branch
    %10 = sbr.rel (0) target = $region5
  $region4: #{decoder_forward.17} parent=0 // pred_region
    _
  $region5: #{decoder_forward.17} parent=0 // pred_fallthru
    _
  // Predicated region
  $region6: #{decoder_forward.17} parent=0 // pred_check
    _
  $region7: #{decoder_forward.17} parent=0 // pred_check_branch
    %12 = sbr.rel (0) target = $region9
  $region8: #{decoder_forward.17} parent=0 // pred_region
    _
  $region9: #{decoder_forward.17} parent=0 // pred_fallthru
    _
  %p14 = scmp.eq.s32.totalorder 0, 0
  // Predicated region
  $region10: #{decoder_forward.17} parent=0 // pred_check
    %p15 = pneg %p14
  $region11: #{decoder_forward.17} parent=0 // pred_check_branch
    %17 = sbr.rel (%p15) target = $region13
  $region12: #{decoder_forward.17} parent=0 // pred_region
    %vm18 = vcmask 123904
    %19 = vst.msk [vmem:[%s3] sm:$0x3] %vm18, 0.0
  $region13: #{decoder_forward.17} parent=0 // pred_fallthru
    _
  %v20 = vld [vmem:[%s0] sm:$0xff]
  %v21 = vld [vmem:[%s0 + $0x8] sm:$0xff]
  %v22 = vld [vmem:[%s0 + $0x10] sm:$0xff]
  %v23 = vld [vmem:[%s0 + $0x18] sm:$0xff]
  %v24 = vld [vmem:[%s1] sm:$0xf]
  %v25 = vld [vmem:[%s1 + $0x4] sm:$0xf]
  %v26 = vld [vmem:[%s1 + $0x8] sm:$0xf]
  %v27 = vld [vmem:[%s1 + $0xc] sm:$0xf]
  %v28 = vld [vmem:[%s1 + $0x10] sm:$0xf]
  %v29 = vld [vmem:[%s1 + $0x14] sm:$0xf]
  %v30 = vld [vmem:[%s1 + $0x18] sm:$0xf]
  %v31 = vld [vmem:[%s1 + $0x1c] sm:$0xf]
  %v32 = vld [vmem:[%s1 + $0x20] sm:$0xf]
  %v33 = vld [vmem:[%s1 + $0x24] sm:$0xf]
  %v34 = vld [vmem:[%s1 + $0x28] sm:$0xf]
  %v35 = vld [vmem:[%s1 + $0x2c] sm:$0xf]
  %v36 = vld [vmem:[%s1 + $0x30] sm:$0xf]
  %v37 = vld [vmem:[%s1 + $0x34] sm:$0xf]
  %v38 = vld [vmem:[%s1 + $0x38] sm:$0xf]
  %v39 = vld [vmem:[%s1 + $0x3c] sm:$0xf]
  %v40 = vld [vmem:[%s1 + $0x40] sm:$0xf]
  %v41 = vld [vmem:[%s1 + $0x44] sm:$0xf]
  %v46 = vunpack.c.l.b16 %v20
  %v47 = vunpack.c.h.b16 %v20
  %v48 = vunpack.c.l.b16 %v21
  %v49 = vunpack.c.h.b16 %v21
  %v50 = vunpack.c.l.b16 %v22
  %v51 = vunpack.c.h.b16 %v22
  %v52 = vunpack.c.l.b16 %v23
  %v53 = vunpack.c.h.b16 %v23
  %v54 = vpack.c.b16 %v48, %v46
  %v55 = vpack.c.b16 %v49, %v47
  %v56 = vpack.c.b16 %v52, %v50
  %v57 = vpack.c.b16 %v53, %v51
  %v78 = vunpack.c.l.b16 %v24
  %v79 = vunpack.c.l.b16 %v25
  %v80 = vunpack.c.l.b16 %v26
  %v81 = vunpack.c.l.b16 %v27
  %v82 = vunpack.c.l.b16 %v28
  %v83 = vunpack.c.l.b16 %v29
  %v84 = vunpack.c.l.b16 %v30
  %v85 = vunpack.c.l.b16 %v31
  %v86 = vunpack.c.l.b16 %v32
  %v87 = vunpack.c.l.b16 %v33
  %v88 = vunpack.c.l.b16 %v34
  %v89 = vunpack.c.l.b16 %v35
  %v90 = vunpack.c.l.b16 %v36
  %v91 = vunpack.c.l.b16 %v37
  %v92 = vunpack.c.l.b16 %v38
  %v93 = vunpack.c.l.b16 %v39
  %v94 = vunpack.c.l.b16 %v40
  %v95 = vunpack.c.l.b16 %v41
  %v96 = vpack.c.b16 %v79, %v78
  %v97 = vpack.c.b16 %v81, %v80
  %v98 = vpack.c.b16 %v83, %v82
  %v99 = vpack.c.b16 %v85, %v84
  %v100 = vpack.c.b16 %v87, %v86
  %v101 = vpack.c.b16 %v89, %v88
  %v102 = vpack.c.b16 %v91, %v90
  %v103 = vpack.c.b16 %v93, %v92
  %v104 = vpack.c.b16 %v95, %v94
  %vm114 = vcmask 130048
  %v116 = vsel %vm114, %v55, 0
  %v119 = vsel %vm114, %v57, 0
  %121 = vmatprep.subr.bf16.mxu0 0
  %122 = vmatpush1.bf16.msra.mxu0 %v96
  %123 = vmatprep.subr.bf16.mxu0 0
  %124 = vmatpush1.bf16.msra.mxu0 %v97
  %125 = vmatprep.subr.bf16.mxu0 0
  %126 = vmatpush1.bf16.msra.mxu0 %v98
  %127 = vmatprep.subr.bf16.mxu0 0
  %128 = vmatpush1.bf16.msra.mxu0 %v99
  %129 = vmatprep.subr.bf16.mxu0 0
  %130 = vmatpush1.bf16.msra.mxu0 %v100
  %131 = vmatprep.subr.bf16.mxu0 0
  %132 = vmatpush1.bf16.msra.mxu0 %v101
  %133 = vmatprep.subr.bf16.mxu0 0
  %134 = vmatpush1.bf16.msra.mxu0 %v102
  %135 = vmatprep.subr.bf16.mxu0 0
  %136 = vmatpush1.bf16.msra.mxu0 %v103
  %137 = vmatprep.subr.bf16.mxu0 0
  %138 = vmatpush1.bf16.msra.mxu0 %v104
  %139 = vmatprep.subr.bf16.mxu0 0
  %140 = vmatpush1.bf16.msra.mxu0 0
  %141 = vmatprep.subr.bf16.mxu0 0
  %142 = vmatpush1.bf16.msra.mxu0 0
  %143 = vmatprep.subr.bf16.mxu0 0
  %144 = vmatpush1.bf16.msra.mxu0 0
  %145 = vmatprep.subr.bf16.mxu0 0
  %146 = vmatpush1.bf16.msra.mxu0 0
  %147 = vmatprep.subr.bf16.mxu0 0
  %148 = vmatpush1.bf16.msra.mxu0 0
  %149 = vmatprep.subr.bf16.mxu0 0
  %150 = vmatpush1.bf16.msra.mxu0 0
  %151 = vmatprep.subr.bf16.mxu0 0
  %152 = vmatpush1.bf16.msra.mxu0 0
  %153 = vmatprep.mubr.bf16.mxu0 %v116
  %154 = vmatmul.mubr.bf16.gmra.mrb[0].mxu0 %v54
  %v155 = vpop.f32.mrb[0].mxu0
  %v156 = vadd.f32 0.0, %v155
  %v157 = vpop.f32.mrb[0].mxu0
  %v158 = vpop.f32.mrb[0].mxu0
  %v159 = vadd.f32 0.0, %v158
  %v160 = vpop.f32.mrb[0].mxu0
  %161 = vmatprep.mubr.bf16.mxu0 %v119
  %162 = vmatmul.mubr.bf16.gmra.mrb[0].mxu0 %v56
  %v163 = vpop.f32.mrb[0].mxu0
  %v164 = vadd.f32 0.0, %v163
  %v165 = vpop.f32.mrb[0].mxu0
  %v166 = vpop.f32.mrb[0].mxu0
  %v167 = vadd.f32 0.0, %v166
  %v168 = vpop.f32.mrb[0].mxu0
  %169 = vdwg.mxu0
  %v170 = vpack.c.bf16 %v159, %v156
  %v171 = vpack.c.bf16 %v167, %v164
  %v174 = vunpack.c.l.b16 %v170
  %v175 = vunpack.c.h.b16 %v170
  %v176 = vunpack.c.l.b16 %v171
  %v177 = vunpack.c.h.b16 %v171
  %v178 = vpack.c.b16 %v174, %v174
  %v179 = vpack.c.b16 %v175, %v175
  %v180 = vpack.c.b16 %v176, %v176
  %v181 = vpack.c.b16 %v177, %v177
  %vm186 = vcmask 125952
  %187 = vst.msk [vmem:[%s2] sm:$0xf] %vm186, %v178
  %188 = vst.msk [vmem:[%s2 + $0x4] sm:$0xf] %vm186, %v179
  %189 = vst.msk [vmem:[%s2 + $0x8] sm:$0xf] %vm186, %v180
  %190 = vst.msk [vmem:[%s2 + $0xc] sm:$0xf] %vm186, %v181
  %v191 = vsel %vm114, %v156, 0.0
  %v192 = vsel %vm114, %v159, 0.0
  %v193 = vadd.f32 %v191, %v192
  %v194 = vsel %vm114, %v164, 0.0
  %v195 = vadd.f32 %v193, %v194
  %v196 = vsel %vm114, %v167, 0.0
  %v197 = vadd.f32 %v195, %v196
  %v198 = vrot.slane %v197, 4
  %v199 = vadd.f32 %v197, %v198
  %v200 = vrot.slane %v199, 2
  %v201 = vadd.f32 %v199, %v200
  %v202 = vrot.slane %v201, 1
  %v203 = vadd.f32 %v201, %v202
  %v204 = vmul.f32 %v156, %v156
  %v205 = vmul.f32 %v159, %v159
  %v206 = vmul.f32 %v164, %v164
  %v207 = vmul.f32 %v167, %v167
  %v208 = vsel %vm114, %v204, 0.0
  %v209 = vsel %vm114, %v205, 0.0
  %v210 = vadd.f32 %v208, %v209
  %v211 = vsel %vm114, %v206, 0.0
  %v212 = vadd.f32 %v210, %v211
  %v213 = vsel %vm114, %v207, 0.0
  %v214 = vadd.f32 %v212, %v213
  %v215 = vrot.slane %v214, 4
  %v216 = vadd.f32 %v214, %v215
  %v217 = vrot.slane %v216, 2
  %v218 = vadd.f32 %v216, %v217
  %v219 = vrot.slane %v218, 1
  %v220 = vadd.f32 %v218, %v219
  %v221 = vld [vmem:[%s3] sm:$0x3]
  %vm222 = vcmask 1040384
  %v223 = vsel %vm222, %v203, %v220
  %v224 = vadd.f32 %v221, %v223
  %vm225 = vcmask 123904
  %226 = vst.msk [vmem:[%s3] sm:$0x3] %vm225, %v224
  // Predicated region
  $region14: #{decoder_forward.17} parent=0 // pred_check
    _
  $region15: #{decoder_forward.17} parent=0 // pred_check_branch
    %228 = sbr.rel (0) target = $region17
  $region16: #{decoder_forward.17} parent=0 // pred_region
    _
  $region17: #{decoder_forward.17} parent=0 // pred_fallthru
    _
  // Predicated region
  $region18: #{decoder_forward.17} parent=0 // pred_check
    _
  $region19: #{decoder_forward.17} parent=0 // pred_check_branch
    %230 = sbr.rel (0) target = $region21
  $region20: #{decoder_forward.17} parent=0 // pred_region
    _
  $region21: #{decoder_forward.17} parent=0 // pred_fallthru
    _
  // Predicated region
  $region22: #{decoder_forward.17} parent=0 // pred_check
    _
  $region23: #{decoder_forward.17} parent=0 // pred_check_branch
    %232 = sbr.rel (0) target = $region25
  $region24: #{decoder_forward.17} parent=0 // pred_region
    _
  $region25: #{decoder_forward.17} parent=0 // pred_fallthru
    _
  // Predicated region
  $region26: #{decoder_forward.17} parent=0 // pred_check
    _
  $region27: #{decoder_forward.17} parent=0 // pred_check_branch
    %234 = sbr.rel (0) target = $region29
  $region28: #{decoder_forward.17} parent=0 // pred_region
    _
  $region29: #{decoder_forward.17} parent=0 // pred_fallthru
    _

// kernel: decoder_forward.21
$region0: #{decoder_forward.21}
  #allocation0 [shape = 'u32[]', space=smem, size = 0x4, offset = 0x4, fixed_abs, tag = 'smem constant byte address 0x4 - core index']
  #allocation1 [shape = 'u32[144,128]{1,0:T(1,128)}', space=vmem, size = 0x12000, scoped, tag = 'internal scratch']
  %s0 = inlined_call_operand.vmem [shape: bf16[128,8], index: 0, kind: input, shape index: {}]
  %s1 = inlined_call_operand.vmem [shape: f32[2,8], index: 1, kind: input, shape index: {}]
  %s2 = inlined_call_operand.vmem [shape: f32[1,8], index: 2, kind: input, shape index: {}]
  %s3 = inlined_call_operand.vmem [shape: f32[1,8], index: 3, kind: input, shape index: {}]
  %s4 = inlined_call_operand.vmem [shape: bf16[128,8], index: 4, kind: output, shape index: {}]
  %s5 = sld [smem:[#allocation0]]
  $region26: #{decoder_forward.21} parent=0
    _
  %s7 = ssub.s32 1, %s5
  %s8 = scalar_select 0, %s7, %s5
  // Predicated region
  $region2: #{decoder_forward.21} parent=0 // pred_check
    _
  $region3: #{decoder_forward.21} parent=0 // pred_check_branch
    %10 = sbr.rel (0) target = $region5
  $region4: #{decoder_forward.21} parent=0 // pred_region
    _
  $region5: #{decoder_forward.21} parent=0 // pred_fallthru
    _
  // Predicated region
  $region6: #{decoder_forward.21} parent=0 // pred_check
    _
  $region7: #{decoder_forward.21} parent=0 // pred_check_branch
    %12 = sbr.rel (0) target = $region9
  $region8: #{decoder_forward.21} parent=0 // pred_region
    _
  $region9: #{decoder_forward.21} parent=0 // pred_fallthru
    _
  // Predicated region
  $region10: #{decoder_forward.21} parent=0 // pred_check
    _
  $region11: #{decoder_forward.21} parent=0 // pred_check_branch
    %14 = sbr.rel (0) target = $region13
  $region12: #{decoder_forward.21} parent=0 // pred_region
    _
  $region13: #{decoder_forward.21} parent=0 // pred_fallthru
    _
  // Predicated region
  $region14: #{decoder_forward.21} parent=0 // pred_check
    _
  $region15: #{decoder_forward.21} parent=0 // pred_check_branch
    %16 = sbr.rel (0) target = $region17
  $region16: #{decoder_forward.21} parent=0 // pred_region
    _
  $region17: #{decoder_forward.21} parent=0 // pred_fallthru
    _
  %v17 = vld [vmem:[%s1] sm:$0x3]
  %v18 = vmul.f32 %v17, 0.0078125
  %v19 = vmul.f32 %v18, %v18
  %v21 = vrot.slane %v19, 7
  %v23 = vsub.f32 %v18, %v21
  %v24 = vmax.f32 %v23, 0.0
  %v25 = vadd.f32 %v24, 1e-05
  %v26 = vrsqrt.pop %v25
  %v27 = vld [vmem:[%s2] sm:$0x1]
  %v29 = vlaneseq
  %v30 = vshrl.u32 %v29, 7
  %v31 = vsub.s32 0, %v30
  %v32 = vrot.slane %v27, %v31
  %v34 = vmul.f32 %v26, %v32
  %v35 = vld [vmem:[%s3] sm:$0x1]
  %v37 = vrot.slane %v34, 1
  %v39 = vmul.f32 %v18, %v37
  %v40 = vsub.f32 %v35, %v39
  %v41 = vld [vmem:[%s0] sm:$0xf]
  %v42 = vld [vmem:[%s0 + $0x4] sm:$0xf]
  %v43 = vld [vmem:[%s0 + $0x8] sm:$0xf]
  %v44 = vld [vmem:[%s0 + $0xc] sm:$0xf]
  %v45 = vld [vmem:[%s0 + $0x10] sm:$0xf]
  %v46 = vld [vmem:[%s0 + $0x14] sm:$0xf]
  %v47 = vld [vmem:[%s0 + $0x18] sm:$0xf]
  %v48 = vld [vmem:[%s0 + $0x1c] sm:$0xf]
  %v49 = vld [vmem:[%s0 + $0x20] sm:$0xf]
  %v50 = vld [vmem:[%s0 + $0x24] sm:$0xf]
  %v51 = vld [vmem:[%s0 + $0x28] sm:$0xf]
  %v52 = vld [vmem:[%s0 + $0x2c] sm:$0xf]
  %v53 = vld [vmem:[%s0 + $0x30] sm:$0xf]
  %v54 = vld [vmem:[%s0 + $0x34] sm:$0xf]
  %v55 = vld [vmem:[%s0 + $0x38] sm:$0xf]
  %v56 = vld [vmem:[%s0 + $0x3c] sm:$0xf]
  %v57 = vunpack.c.l.bf16 %v41
  %v58 = vunpack.c.l.bf16 %v42
  %v59 = vunpack.c.l.bf16 %v43
  %v60 = vunpack.c.l.bf16 %v44
  %v61 = vunpack.c.l.bf16 %v45
  %v62 = vunpack.c.l.bf16 %v46
  %v63 = vunpack.c.l.bf16 %v47
  %v64 = vunpack.c.l.bf16 %v48
  %v65 = vunpack.c.l.bf16 %v49
  %v66 = vunpack.c.l.bf16 %v50
  %v67 = vunpack.c.l.bf16 %v51
  %v68 = vunpack.c.l.bf16 %v52
  %v69 = vunpack.c.l.bf16 %v53
  %v70 = vunpack.c.l.bf16 %v54
  %v71 = vunpack.c.l.bf16 %v55
  %v72 = vunpack.c.l.bf16 %v56
  %v73 = vlaneseq
  %v74 = vshrl.u32 %v73, 7
  %v75 = vsub.s32 1, %v74
  %v76 = vrot.slane %v34, %v75
  %v77 = vmul.f32 %v57, %v76
  %v78 = vmul.f32 %v58, %v76
  %v79 = vmul.f32 %v59, %v76
  %v80 = vmul.f32 %v60, %v76
  %v81 = vmul.f32 %v61, %v76
  %v82 = vmul.f32 %v62, %v76
  %v83 = vmul.f32 %v63, %v76
  %v84 = vmul.f32 %v64, %v76
  %v85 = vmul.f32 %v65, %v76
  %v86 = vmul.f32 %v66, %v76
  %v87 = vmul.f32 %v67, %v76
  %v88 = vmul.f32 %v68, %v76
  %v89 = vmul.f32 %v69, %v76
  %v90 = vmul.f32 %v70, %v76
  %v91 = vmul.f32 %v71, %v76
  %v92 = vmul.f32 %v72, %v76
  %v94 = vlaneseq
  %v95 = vshrl.u32 %v94, 7
  %v96 = vsub.s32 0, %v95
  %v97 = vrot.slane %v40, %v96
  %v99 = vadd.f32 %v77, %v97
  %v100 = vadd.f32 %v78, %v97
  %v101 = vadd.f32 %v79, %v97
  %v102 = vadd.f32 %v80, %v97
  %v103 = vadd.f32 %v81, %v97
  %v104 = vadd.f32 %v82, %v97
  %v105 = vadd.f32 %v83, %v97
  %v106 = vadd.f32 %v84, %v97
  %v107 = vadd.f32 %v85, %v97
  %v108 = vadd.f32 %v86, %v97
  %v109 = vadd.f32 %v87, %v97
  %v110 = vadd.f32 %v88, %v97
  %v111 = vadd.f32 %v89, %v97
  %v112 = vadd.f32 %v90, %v97
  %v113 = vadd.f32 %v91, %v97
  %v114 = vadd.f32 %v92, %v97
  %vm115 = vcmp.gt.f32.partialorder %v99, 0.0
  %vm116 = vcmp.gt.f32.partialorder %v100, 0.0
  %vm117 = vcmp.gt.f32.partialorder %v101, 0.0
  %vm118 = vcmp.gt.f32.partialorder %v102, 0.0
  %vm119 = vcmp.gt.f32.partialorder %v103, 0.0
  %vm120 = vcmp.gt.f32.partialorder %v104, 0.0
  %vm121 = vcmp.gt.f32.partialorder %v105, 0.0
  %vm122 = vcmp.gt.f32.partialorder %v106, 0.0
  %vm123 = vcmp.gt.f32.partialorder %v107, 0.0
  %vm124 = vcmp.gt.f32.partialorder %v108, 0.0
  %vm125 = vcmp.gt.f32.partialorder %v109, 0.0
  %vm126 = vcmp.gt.f32.partialorder %v110, 0.0
  %vm127 = vcmp.gt.f32.partialorder %v111, 0.0
  %vm128 = vcmp.gt.f32.partialorder %v112, 0.0
  %vm129 = vcmp.gt.f32.partialorder %v113, 0.0
  %vm130 = vcmp.gt.f32.partialorder %v114, 0.0
  %v131 = vmul.f32 %v99, 0.01
  %v132 = vmul.f32 %v100, 0.01
  %v133 = vmul.f32 %v101, 0.01
  %v134 = vmul.f32 %v102, 0.01
  %v135 = vmul.f32 %v103, 0.01
  %v136 = vmul.f32 %v104, 0.01
  %v137 = vmul.f32 %v105, 0.01
  %v138 = vmul.f32 %v106, 0.01
  %v139 = vmul.f32 %v107, 0.01
  %v140 = vmul.f32 %v108, 0.01
  %v141 = vmul.f32 %v109, 0.01
  %v142 = vmul.f32 %v110, 0.01
  %v143 = vmul.f32 %v111, 0.01
  %v144 = vmul.f32 %v112, 0.01
  %v145 = vmul.f32 %v113, 0.01
  %v146 = vmul.f32 %v114, 0.01
  %v147 = vsel %vm115, %v99, %v131
  %v148 = vsel %vm116, %v100, %v132
  %v149 = vsel %vm117, %v101, %v133
  %v150 = vsel %vm118, %v102, %v134
  %v151 = vsel %vm119, %v103, %v135
  %v152 = vsel %vm120, %v104, %v136
  %v153 = vsel %vm121, %v105, %v137
  %v154 = vsel %vm122, %v106, %v138
  %v155 = vsel %vm123, %v107, %v139
  %v156 = vsel %vm124, %v108, %v140
  %v157 = vsel %vm125, %v109, %v141
  %v158 = vsel %vm126, %v110, %v142
  %v159 = vsel %vm127, %v111, %v143
  %v160 = vsel %vm128, %v112, %v144
  %v161 = vsel %vm129, %v113, %v145
  %v162 = vsel %vm130, %v114, %v146
  %v163 = vpack.c.bf16 %v148, %v147
  %v164 = vpack.c.bf16 %v150, %v149
  %v165 = vpack.c.bf16 %v152, %v151
  %v166 = vpack.c.bf16 %v154, %v153
  %v167 = vpack.c.bf16 %v156, %v155
  %v168 = vpack.c.bf16 %v158, %v157
  %v169 = vpack.c.bf16 %v160, %v159
  %v170 = vpack.c.bf16 %v162, %v161
  %v179 = vunpack.c.l.b16 %v163
  %v180 = vunpack.c.h.b16 %v163
  %v181 = vunpack.c.l.b16 %v164
  %v182 = vunpack.c.h.b16 %v164
  %v183 = vunpack.c.l.b16 %v165
  %v184 = vunpack.c.h.b16 %v165
  %v185 = vunpack.c.l.b16 %v166
  %v186 = vunpack.c.h.b16 %v166
  %v187 = vunpack.c.l.b16 %v167
  %v188 = vunpack.c.h.b16 %v167
  %v189 = vunpack.c.l.b16 %v168
  %v190 = vunpack.c.h.b16 %v168
  %v191 = vunpack.c.l.b16 %v169
  %v192 = vunpack.c.h.b16 %v169
  %v193 = vunpack.c.l.b16 %v170
  %v194 = vunpack.c.h.b16 %v170
  %v195 = vpack.c.b16 %v179, %v179
  %v196 = vpack.c.b16 %v180, %v180
  %v197 = vpack.c.b16 %v181, %v181
  %v198 = vpack.c.b16 %v182, %v182
  %v199 = vpack.c.b16 %v183, %v183
  %v200 = vpack.c.b16 %v184, %v184
  %v201 = vpack.c.b16 %v185, %v185
  %v202 = vpack.c.b16 %v186, %v186
  %v203 = vpack.c.b16 %v187, %v187
  %v204 = vpack.c.b16 %v188, %v188
  %v205 = vpack.c.b16 %v189, %v189
  %v206 = vpack.c.b16 %v190, %v190
  %v207 = vpack.c.b16 %v191, %v191
  %v208 = vpack.c.b16 %v192, %v192
  %v209 = vpack.c.b16 %v193, %v193
  %v210 = vpack.c.b16 %v194, %v194
  %vm227 = vcmask 60416
  %228 = vst.msk [vmem:[%s4] sm:$0xf] %vm227, %v195
  %229 = vst.msk [vmem:[%s4 + $0x4] sm:$0xf] %vm227, %v196
  %230 = vst.msk [vmem:[%s4 + $0x8] sm:$0xf] %vm227, %v197
  %231 = vst.msk [vmem:[%s4 + $0xc] sm:$0xf] %vm227, %v198
  %232 = vst.msk [vmem:[%s4 + $0x10] sm:$0xf] %vm227, %v199
  %233 = vst.msk [vmem:[%s4 + $0x14] sm:$0xf] %vm227, %v200
  %234 = vst.msk [vmem:[%s4 + $0x18] sm:$0xf] %vm227, %v201
  %235 = vst.msk [vmem:[%s4 + $0x1c] sm:$0xf] %vm227, %v202
  %236 = vst.msk [vmem:[%s4 + $0x20] sm:$0xf] %vm227, %v203
  %237 = vst.msk [vmem:[%s4 + $0x24] sm:$0xf] %vm227, %v204
  %238 = vst.msk [vmem:[%s4 + $0x28] sm:$0xf] %vm227, %v205
  %239 = vst.msk [vmem:[%s4 + $0x2c] sm:$0xf] %vm227, %v206
  %240 = vst.msk [vmem:[%s4 + $0x30] sm:$0xf] %vm227, %v207
  %241 = vst.msk [vmem:[%s4 + $0x34] sm:$0xf] %vm227, %v208
  %242 = vst.msk [vmem:[%s4 + $0x38] sm:$0xf] %vm227, %v209
  %243 = vst.msk [vmem:[%s4 + $0x3c] sm:$0xf] %vm227, %v210
  // Predicated region
  $region18: #{decoder_forward.21} parent=0 // pred_check
    _
  $region19: #{decoder_forward.21} parent=0 // pred_check_branch
    %245 = sbr.rel (0) target = $region21
  $region20: #{decoder_forward.21} parent=0 // pred_region
    _
  $region21: #{decoder_forward.21} parent=0 // pred_fallthru
    _
  // Predicated region
  $region22: #{decoder_forward.21} parent=0 // pred_check
    _
  $region23: #{decoder_forward.21} parent=0 // pred_check_branch
    %247 = sbr.rel (0) target = $region25
  $region24: #{decoder_forward.21} parent=0 // pred_region
    _
  $region25: #{decoder_forward.21} parent=0 // pred_fallthru
    _

// kernel: decoder_forward.20
$region0: #{decoder_forward.20}
  #allocation0 [shape = 'u32[]', space=smem, size = 0x4, offset = 0x4, fixed_abs, tag = 'smem constant byte address 0x4 - core index']
  #allocation1 [shape = 'u32[144,128]{1,0:T(1,128)}', space=vmem, size = 0x12000, scoped, tag = 'internal scratch']
  %s0 = inlined_call_operand.vmem [shape: bf16[128,144], index: 0, kind: input, shape index: {}]
  %s1 = inlined_call_operand.vmem [shape: bf16[144,8], index: 1, kind: input, shape index: {}]
  %s2 = inlined_call_operand.vmem [shape: bf16[128,8], index: 2, kind: output, shape index: {0}]
  %s3 = inlined_call_operand.vmem [shape: f32[2,8], index: 3, kind: output, shape index: {1}]
  %4 = xla_tuple %s2, %s3
  %s5 = sld [smem:[#allocation0]]
  $region30: #{decoder_forward.20} parent=0
    _
  %s7 = ssub.s32 1, %s5
  %s8 = scalar_select 0, %s7, %s5
  // Predicated region
  $region2: #{decoder_forward.20} parent=0 // pred_check
    _
  $region3: #{decoder_forward.20} parent=0 // pred_check_branch
    %10 = sbr.rel (0) target = $region5
  $region4: #{decoder_forward.20} parent=0 // pred_region
    _
  $region5: #{decoder_forward.20} parent=0 // pred_fallthru
    _
  // Predicated region
  $region6: #{decoder_forward.20} parent=0 // pred_check
    _
  $region7: #{decoder_forward.20} parent=0 // pred_check_branch
    %12 = sbr.rel (0) target = $region9
  $region8: #{decoder_forward.20} parent=0 // pred_region
    _
  $region9: #{decoder_forward.20} parent=0 // pred_fallthru
    _
  %p14 = scmp.eq.s32.totalorder 0, 0
  // Predicated region
  $region10: #{decoder_forward.20} parent=0 // pred_check
    %p15 = pneg %p14
  $region11: #{decoder_forward.20} parent=0 // pred_check_branch
    %17 = sbr.rel (%p15) target = $region13
  $region12: #{decoder_forward.20} parent=0 // pred_region
    %vm18 = vcmask 58368
    %19 = vst.msk [vmem:[%s3] sm:$0x3] %vm18, 0.0
  $region13: #{decoder_forward.20} parent=0 // pred_fallthru
    _
  %v20 = vld [vmem:[%s0] sm:$0xff]
  %v21 = vld [vmem:[%s0 + $0x8] sm:$0xff]
  %v22 = vld [vmem:[%s0 + $0x10] sm:$0xff]
  %v23 = vld [vmem:[%s0 + $0x18] sm:$0xff]
  %v24 = vld [vmem:[%s0 + $0x20] sm:$0xff]
  %v25 = vld [vmem:[%s0 + $0x28] sm:$0xff]
  %v26 = vld [vmem:[%s0 + $0x30] sm:$0xff]
  %v27 = vld [vmem:[%s0 + $0x38] sm:$0xff]
  %v28 = vld [vmem:[%s0 + $0x40] sm:$0xff]
  %v29 = vld [vmem:[%s0 + $0x48] sm:$0xff]
  %v30 = vld [vmem:[%s0 + $0x50] sm:$0xff]
  %v31 = vld [vmem:[%s0 + $0x58] sm:$0xff]
  %v32 = vld [vmem:[%s0 + $0x60] sm:$0xff]
  %v33 = vld [vmem:[%s0 + $0x68] sm:$0xff]
  %v34 = vld [vmem:[%s0 + $0x70] sm:$0xff]
  %v35 = vld [vmem:[%s0 + $0x78] sm:$0xff]
  %v36 = vld [vmem:[%s1] sm:$0xf]
  %v37 = vld [vmem:[%s1 + $0x4] sm:$0xf]
  %v38 = vld [vmem:[%s1 + $0x8] sm:$0xf]
  %v39 = vld [vmem:[%s1 + $0xc] sm:$0xf]
  %v40 = vld [vmem:[%s1 + $0x10] sm:$0xf]
  %v41 = vld [vmem:[%s1 + $0x14] sm:$0xf]
  %v42 = vld [vmem:[%s1 + $0x18] sm:$0xf]
  %v43 = vld [vmem:[%s1 + $0x1c] sm:$0xf]
  %v44 = vld [vmem:[%s1 + $0x20] sm:$0xf]
  %v45 = vld [vmem:[%s1 + $0x24] sm:$0xf]
  %v46 = vld [vmem:[%s1 + $0x28] sm:$0xf]
  %v47 = vld [vmem:[%s1 + $0x2c] sm:$0xf]
  %v48 = vld [vmem:[%s1 + $0x30] sm:$0xf]
  %v49 = vld [vmem:[%s1 + $0x34] sm:$0xf]
  %v50 = vld [vmem:[%s1 + $0x38] sm:$0xf]
  %v51 = vld [vmem:[%s1 + $0x3c] sm:$0xf]
  %v52 = vld [vmem:[%s1 + $0x40] sm:$0xf]
  %v53 = vld [vmem:[%s1 + $0x44] sm:$0xf]
  %v70 = vunpack.c.l.b16 %v20
  %v71 = vunpack.c.h.b16 %v20
  %v72 = vunpack.c.l.b16 %v21
  %v73 = vunpack.c.h.b16 %v21
  %v74 = vunpack.c.l.b16 %v22
  %v75 = vunpack.c.h.b16 %v22
  %v76 = vunpack.c.l.b16 %v23
  %v77 = vunpack.c.h.b16 %v23
  %v78 = vunpack.c.l.b16 %v24
  %v79 = vunpack.c.h.b16 %v24
  %v80 = vunpack.c.l.b16 %v25
  %v81 = vunpack.c.h.b16 %v25
  %v82 = vunpack.c.l.b16 %v26
  %v83 = vunpack.c.h.b16 %v26
  %v84 = vunpack.c.l.b16 %v27
  %v85 = vunpack.c.h.b16 %v27
  %v86 = vunpack.c.l.b16 %v28
  %v87 = vunpack.c.h.b16 %v28
  %v88 = vunpack.c.l.b16 %v29
  %v89 = vunpack.c.h.b16 %v29
  %v90 = vunpack.c.l.b16 %v30
  %v91 = vunpack.c.h.b16 %v30
  %v92 = vunpack.c.l.b16 %v31
  %v93 = vunpack.c.h.b16 %v31
  %v94 = vunpack.c.l.b16 %v32
  %v95 = vunpack.c.h.b16 %v32
  %v96 = vunpack.c.l.b16 %v33
  %v97 = vunpack.c.h.b16 %v33
  %v98 = vunpack.c.l.b16 %v34
  %v99 = vunpack.c.h.b16 %v34
  %v100 = vunpack.c.l.b16 %v35
  %v101 = vunpack.c.h.b16 %v35
  %v102 = vpack.c.b16 %v72, %v70
  %v103 = vpack.c.b16 %v73, %v71
  %v104 = vpack.c.b16 %v76, %v74
  %v105 = vpack.c.b16 %v77, %v75
  %v106 = vpack.c.b16 %v80, %v78
  %v107 = vpack.c.b16 %v81, %v79
  %v108 = vpack.c.b16 %v84, %v82
  %v109 = vpack.c.b16 %v85, %v83
  %v110 = vpack.c.b16 %v88, %v86
  %v111 = vpack.c.b16 %v89, %v87
  %v112 = vpack.c.b16 %v92, %v90
  %v113 = vpack.c.b16 %v93, %v91
  %v114 = vpack.c.b16 %v96, %v94
  %v115 = vpack.c.b16 %v97, %v95
  %v116 = vpack.c.b16 %v100, %v98
  %v117 = vpack.c.b16 %v101, %v99
  %v144 = vunpack.c.l.b16 %v36
  %v145 = vunpack.c.l.b16 %v37
  %v146 = vunpack.c.l.b16 %v38
  %v147 = vunpack.c.l.b16 %v39
  %v148 = vunpack.c.l.b16 %v40
  %v149 = vunpack.c.l.b16 %v41
  %v150 = vunpack.c.l.b16 %v42
  %v151 = vunpack.c.l.b16 %v43
  %v152 = vunpack.c.l.b16 %v44
  %v153 = vunpack.c.l.b16 %v45
  %v154 = vunpack.c.l.b16 %v46
  %v155 = vunpack.c.l.b16 %v47
  %v156 = vunpack.c.l.b16 %v48
  %v157 = vunpack.c.l.b16 %v49
  %v158 = vunpack.c.l.b16 %v50
  %v159 = vunpack.c.l.b16 %v51
  %v160 = vunpack.c.l.b16 %v52
  %v161 = vunpack.c.l.b16 %v53
  %v162 = vpack.c.b16 %v145, %v144
  %v163 = vpack.c.b16 %v147, %v146
  %v164 = vpack.c.b16 %v149, %v148
  %v165 = vpack.c.b16 %v151, %v150
  %v166 = vpack.c.b16 %v153, %v152
  %v167 = vpack.c.b16 %v155, %v154
  %v168 = vpack.c.b16 %v157, %v156
  %v169 = vpack.c.b16 %v159, %v158
  %v170 = vpack.c.b16 %v161, %v160
  %vm180 = vcmask 130048
  %v182 = vsel %vm180, %v103, 0
  %v185 = vsel %vm180, %v105, 0
  %v188 = vsel %vm180, %v107, 0
  %v191 = vsel %vm180, %v109, 0
  %v194 = vsel %vm180, %v111, 0
  %v197 = vsel %vm180, %v113, 0
  %v200 = vsel %vm180, %v115, 0
  %v203 = vsel %vm180, %v117, 0
  %205 = vmatprep.subr.bf16.mxu0 0
  %206 = vmatpush1.bf16.msra.mxu0 %v162
  %207 = vmatprep.subr.bf16.mxu0 0
  %208 = vmatpush1.bf16.msra.mxu0 %v163
  %209 = vmatprep.subr.bf16.mxu0 0
  %210 = vmatpush1.bf16.msra.mxu0 %v164
  %211 = vmatprep.subr.bf16.mxu0 0
  %212 = vmatpush1.bf16.msra.mxu0 %v165
  %213 = vmatprep.subr.bf16.mxu0 0
  %214 = vmatpush1.bf16.msra.mxu0 %v166
  %215 = vmatprep.subr.bf16.mxu0 0
  %216 = vmatpush1.bf16.msra.mxu0 %v167
  %217 = vmatprep.subr.bf16.mxu0 0
  %218 = vmatpush1.bf16.msra.mxu0 %v168
  %219 = vmatprep.subr.bf16.mxu0 0
  %220 = vmatpush1.bf16.msra.mxu0 %v169
  %221 = vmatprep.subr.bf16.mxu0 0
  %222 = vmatpush1.bf16.msra.mxu0 %v170
  %223 = vmatprep.subr.bf16.mxu0 0
  %224 = vmatpush1.bf16.msra.mxu0 0
  %225 = vmatprep.subr.bf16.mxu0 0
  %226 = vmatpush1.bf16.msra.mxu0 0
  %227 = vmatprep.subr.bf16.mxu0 0
  %228 = vmatpush1.bf16.msra.mxu0 0
  %229 = vmatprep.subr.bf16.mxu0 0
  %230 = vmatpush1.bf16.msra.mxu0 0
  %231 = vmatprep.subr.bf16.mxu0 0
  %232 = vmatpush1.bf16.msra.mxu0 0
  %233 = vmatprep.subr.bf16.mxu0 0
  %234 = vmatpush1.bf16.msra.mxu0 0
  %235 = vmatprep.subr.bf16.mxu0 0
  %236 = vmatpush1.bf16.msra.mxu0 0
  %237 = vmatprep.mubr.bf16.mxu0 %v182
  %238 = vmatmul.mubr.bf16.gmra.mrb[0].mxu0 %v102
  %v239 = vpop.f32.mrb[0].mxu0
  %v240 = vadd.f32 0.0, %v239
  %v241 = vpop.f32.mrb[0].mxu0
  %v242 = vpop.f32.mrb[0].mxu0
  %v243 = vadd.f32 0.0, %v242
  %v244 = vpop.f32.mrb[0].mxu0
  %245 = vmatprep.mubr.bf16.mxu0 %v185
  %246 = vmatmul.mubr.bf16.gmra.mrb[0].mxu0 %v104
  %v247 = vpop.f32.mrb[0].mxu0
  %v248 = vadd.f32 0.0, %v247
  %v249 = vpop.f32.mrb[0].mxu0
  %v250 = vpop.f32.mrb[0].mxu0
  %v251 = vadd.f32 0.0, %v250
  %v252 = vpop.f32.mrb[0].mxu0
  %253 = vmatprep.mubr.bf16.mxu0 %v188
  %254 = vmatmul.mubr.bf16.gmra.mrb[0].mxu0 %v106
  %v255 = vpop.f32.mrb[0].mxu0
  %v256 = vadd.f32 0.0, %v255
  %v257 = vpop.f32.mrb[0].mxu0
  %v258 = vpop.f32.mrb[0].mxu0
  %v259 = vadd.f32 0.0, %v258
  %v260 = vpop.f32.mrb[0].mxu0
  %261 = vmatprep.mubr.bf16.mxu0 %v191
  %262 = vmatmul.mubr.bf16.gmra.mrb[0].mxu0 %v108
  %v263 = vpop.f32.mrb[0].mxu0
  %v264 = vadd.f32 0.0, %v263
  %v265 = vpop.f32.mrb[0].mxu0
  %v266 = vpop.f32.mrb[0].mxu0
  %v267 = vadd.f32 0.0, %v266
  %v268 = vpop.f32.mrb[0].mxu0
  %269 = vmatprep.mubr.bf16.mxu0 %v194
  %270 = vmatmul.mubr.bf16.gmra.mrb[0].mxu0 %v110
  %v271 = vpop.f32.mrb[0].mxu0
  %v272 = vadd.f32 0.0, %v271
  %v273 = vpop.f32.mrb[0].mxu0
  %v274 = vpop.f32.mrb[0].mxu0
  %v275 = vadd.f32 0.0, %v274
  %v276 = vpop.f32.mrb[0].mxu0
  %277 = vmatprep.mubr.bf16.mxu0 %v197
  %278 = vmatmul.mubr.bf16.gmra.mrb[0].mxu0 %v112
  %v279 = vpop.f32.mrb[0].mxu0
  %v280 = vadd.f32 0.0, %v279
  %v281 = vpop.f32.mrb[0].mxu0
  %v282 = vpop.f32.mrb[0].mxu0
  %v283 = vadd.f32 0.0, %v282
  %v284 = vpop.f32.mrb[0].mxu0
  %285 = vmatprep.mubr.bf16.mxu0 %v200
  %286 = vmatmul.mubr.bf16.gmra.mrb[0].mxu0 %v114
  %v287 = vpop.f32.mrb[0].mxu0
  %v288 = vadd.f32 0.0, %v287
  %v289 = vpop.f32.mrb[0].mxu0
  %v290 = vpop.f32.mrb[0].mxu0
  %v291 = vadd.f32 0.0, %v290
  %v292 = vpop.f32.mrb[0].mxu0
  %293 = vmatprep.mubr.bf16.mxu0 %v203
  %294 = vmatmul.mubr.bf16.gmra.mrb[0].mxu0 %v116
  %v295 = vpop.f32.mrb[0].mxu0
  %v296 = vadd.f32 0.0, %v295
  %v297 = vpop.f32.mrb[0].mxu0
  %v298 = vpop.f32.mrb[0].mxu0
  %v299 = vadd.f32 0.0, %v298
  %v300 = vpop.f32.mrb[0].mxu0
  %301 = vdwg.mxu0
  %v302 = vpack.c.bf16 %v243, %v240
  %v303 = vpack.c.bf16 %v251, %v248
  %v304 = vpack.c.bf16 %v259, %v256
  %v305 = vpack.c.bf16 %v267, %v264
  %v306 = vpack.c.bf16 %v275, %v272
  %v307 = vpack.c.bf16 %v283, %v280
  %v308 = vpack.c.bf16 %v291, %v288
  %v309 = vpack.c.bf16 %v299, %v296
  %v318 = vunpack.c.l.b16 %v302
  %v319 = vunpack.c.h.b16 %v302
  %v320 = vunpack.c.l.b16 %v303
  %v321 = vunpack.c.h.b16 %v303
  %v322 = vunpack.c.l.b16 %v304
  %v323 = vunpack.c.h.b16 %v304
  %v324 = vunpack.c.l.b16 %v305
  %v325 = vunpack.c.h.b16 %v305
  %v326 = vunpack.c.l.b16 %v306
  %v327 = vunpack.c.h.b16 %v306
  %v328 = vunpack.c.l.b16 %v307
  %v329 = vunpack.c.h.b16 %v307
  %v330 = vunpack.c.l.b16 %v308
  %v331 = vunpack.c.h.b16 %v308
  %v332 = vunpack.c.l.b16 %v309
  %v333 = vunpack.c.h.b16 %v309
  %v334 = vpack.c.b16 %v318, %v318
  %v335 = vpack.c.b16 %v319, %v319
  %v336 = vpack.c.b16 %v320, %v320
  %v337 = vpack.c.b16 %v321, %v321
  %v338 = vpack.c.b16 %v322, %v322
  %v339 = vpack.c.b16 %v323, %v323
  %v340 = vpack.c.b16 %v324, %v324
  %v341 = vpack.c.b16 %v325, %v325
  %v342 = vpack.c.b16 %v326, %v326
  %v343 = vpack.c.b16 %v327, %v327
  %v344 = vpack.c.b16 %v328, %v328
  %v345 = vpack.c.b16 %v329, %v329
  %v346 = vpack.c.b16 %v330, %v330
  %v347 = vpack.c.b16 %v331, %v331
  %v348 = vpack.c.b16 %v332, %v332
  %v349 = vpack.c.b16 %v333, %v333
  %vm366 = vcmask 60416
  %367 = vst.msk [vmem:[%s2] sm:$0xf] %vm366, %v334
  %368 = vst.msk [vmem:[%s2 + $0x4] sm:$0xf] %vm366, %v335
  %369 = vst.msk [vmem:[%s2 + $0x8] sm:$0xf] %vm366, %v336
  %370 = vst.msk [vmem:[%s2 + $0xc] sm:$0xf] %vm366, %v337
  %371 = vst.msk [vmem:[%s2 + $0x10] sm:$0xf] %vm366, %v338
  %372 = vst.msk [vmem:[%s2 + $0x14] sm:$0xf] %vm366, %v339
  %373 = vst.msk [vmem:[%s2 + $0x18] sm:$0xf] %vm366, %v340
  %374 = vst.msk [vmem:[%s2 + $0x1c] sm:$0xf] %vm366, %v341
  %375 = vst.msk [vmem:[%s2 + $0x20] sm:$0xf] %vm366, %v342
  %376 = vst.msk [vmem:[%s2 + $0x24] sm:$0xf] %vm366, %v343
  %377 = vst.msk [vmem:[%s2 + $0x28] sm:$0xf] %vm366, %v344
  %378 = vst.msk [vmem:[%s2 + $0x2c] sm:$0xf] %vm366, %v345
  %379 = vst.msk [vmem:[%s2 + $0x30] sm:$0xf] %vm366, %v346
  %380 = vst.msk [vmem:[%s2 + $0x34] sm:$0xf] %vm366, %v347
  %381 = vst.msk [vmem:[%s2 + $0x38] sm:$0xf] %vm366, %v348
  %382 = vst.msk [vmem:[%s2 + $0x3c] sm:$0xf] %vm366, %v349
  %vm383 = vcmask 64512
  %v384 = vsel %vm383, %v240, 0.0
  %v385 = vsel %vm383, %v243, 0.0
  %v386 = vadd.f32 %v384, %v385
  %v387 = vsel %vm383, %v248, 0.0
  %v388 = vadd.f32 %v386, %v387
  %v389 = vsel %vm383, %v251, 0.0
  %v390 = vadd.f32 %v388, %v389
  %v391 = vsel %vm383, %v256, 0.0
  %v392 = vadd.f32 %v390, %v391
  %v393 = vsel %vm383, %v259, 0.0
  %v394 = vadd.f32 %v392, %v393
  %v395 = vsel %vm383, %v264, 0.0
  %v396 = vadd.f32 %v394, %v395
  %v397 = vsel %vm383, %v267, 0.0
  %v398 = vadd.f32 %v396, %v397
  %v399 = vsel %vm383, %v272, 0.0
  %v400 = vadd.f32 %v398, %v399
  %v401 = vsel %vm383, %v275, 0.0
  %v402 = vadd.f32 %v400, %v401
  %v403 = vsel %vm383, %v280, 0.0
  %v404 = vadd.f32 %v402, %v403
  %v405 = vsel %vm383, %v283, 0.0
  %v406 = vadd.f32 %v404, %v405
  %v407 = vsel %vm383, %v288, 0.0
  %v408 = vadd.f32 %v406, %v407
  %v409 = vsel %vm383, %v291, 0.0
  %v410 = vadd.f32 %v408, %v409
  %v411 = vsel %vm383, %v296, 0.0
  %v412 = vadd.f32 %v410, %v411
  %v413 = vsel %vm383, %v299, 0.0
  %v414 = vadd.f32 %v412, %v413
  %v415 = vrot.slane %v414, 4
  %v416 = vadd.f32 %v414, %v415
  %v417 = vrot.slane %v416, 2
  %v418 = vadd.f32 %v416, %v417
  %v419 = vrot.slane %v418, 1
  %v420 = vadd.f32 %v418, %v419
  %v421 = vmul.f32 %v240, %v240
  %v422 = vmul.f32 %v243, %v243
  %v423 = vmul.f32 %v248, %v248
  %v424 = vmul.f32 %v251, %v251
  %v425 = vmul.f32 %v256, %v256
  %v426 = vmul.f32 %v259, %v259
  %v427 = vmul.f32 %v264, %v264
  %v428 = vmul.f32 %v267, %v267
  %v429 = vmul.f32 %v272, %v272
  %v430 = vmul.f32 %v275, %v275
  %v431 = vmul.f32 %v280, %v280
  %v432 = vmul.f32 %v283, %v283
  %v433 = vmul.f32 %v288, %v288
  %v434 = vmul.f32 %v291, %v291
  %v435 = vmul.f32 %v296, %v296
  %v436 = vmul.f32 %v299, %v299
  %v437 = vsel %vm383, %v421, 0.0
  %v438 = vsel %vm383, %v422, 0.0
  %v439 = vadd.f32 %v437, %v438
  %v440 = vsel %vm383, %v423, 0.0
  %v441 = vadd.f32 %v439, %v440
  %v442 = vsel %vm383, %v424, 0.0
  %v443 = vadd.f32 %v441, %v442
  %v444 = vsel %vm383, %v425, 0.0
  %v445 = vadd.f32 %v443, %v444
  %v446 = vsel %vm383, %v426, 0.0
  %v447 = vadd.f32 %v445, %v446
  %v448 = vsel %vm383, %v427, 0.0
  %v449 = vadd.f32 %v447, %v448
  %v450 = vsel %vm383, %v428, 0.0
  %v451 = vadd.f32 %v449, %v450
  %v452 = vsel %vm383, %v429, 0.0
  %v453 = vadd.f32 %v451, %v452
  %v454 = vsel %vm383, %v430, 0.0
  %v455 = vadd.f32 %v453, %v454
  %v456 = vsel %vm383, %v431, 0.0
  %v457 = vadd.f32 %v455, %v456
  %v458 = vsel %vm383, %v432, 0.0
  %v459 = vadd.f32 %v457, %v458
  %v460 = vsel %vm383, %v433, 0.0
  %v461 = vadd.f32 %v459, %v460
  %v462 = vsel %vm383, %v434, 0.0
  %v463 = vadd.f32 %v461, %v462
  %v464 = vsel %vm383, %v435, 0.0
  %v465 = vadd.f32 %v463, %v464
  %v466 = vsel %vm383, %v436, 0.0
  %v467 = vadd.f32 %v465, %v466
  %v468 = vrot.slane %v467, 4
  %v469 = vadd.f32 %v467, %v468
  %v470 = vrot.slane %v469, 2
  %v471 = vadd.f32 %v469, %v470
  %v472 = vrot.slane %v471, 1
  %v473 = vadd.f32 %v471, %v472
  %v474 = vld [vmem:[%s3] sm:$0x3]
  %vm475 = vcmask 1040384
  %v476 = vsel %vm475, %v420, %v473
  %v477 = vadd.f32 %v474, %v476
  %vm478 = vcmask 58368
  %479 = vst.msk [vmem:[%s3] sm:$0x3] %vm478, %v477
  // Predicated region
  $region14: #{decoder_forward.20} parent=0 // pred_check
    _
  $region15: #{decoder_forward.20} parent=0 // pred_check_branch
    %481 = sbr.rel (0) target = $region17
  $region16: #{decoder_forward.20} parent=0 // pred_region
    _
  $region17: #{decoder_forward.20} parent=0 // pred_fallthru
    _
  // Predicated region
  $region18: #{decoder_forward.20} parent=0 // pred_check
    _
  $region19: #{decoder_forward.20} parent=0 // pred_check_branch
    %483 = sbr.rel (0) target = $region21
  $region20: #{decoder_forward.20} parent=0 // pred_region
    _
  $region21: #{decoder_forward.20} parent=0 // pred_fallthru
    _
  // Predicated region
  $region22: #{decoder_forward.20} parent=0 // pred_check
    _
  $region23: #{decoder_forward.20} parent=0 // pred_check_branch
    %485 = sbr.rel (0) target = $region25
  $region24: #{decoder_forward.20} parent=0 // pred_region
    _
  $region25: #{decoder_forward.20} parent=0 // pred_fallthru
    _
  // Predicated region
  $region26: #{decoder_forward.20} parent=0 // pred_check
    _
  $region27: #{decoder_forward.20} parent=0 // pred_check_branch
    %487 = sbr.rel (0) target = $region29
  $region28: #{decoder_forward.20} parent=0 // pred_region
    _
  $region29: #{decoder_forward.20} parent=0 // pred_fallthru
    _

// kernel: decoder_forward.22
$region0: #{decoder_forward.22}
  #allocation0 [shape = 'u32[]', space=smem, size = 0x4, offset = 0x4, fixed_abs, tag = 'smem constant byte address 0x4 - core index']
  #allocation1 [shape = 'u32[144,128]{1,0:T(1,128)}', space=vmem, size = 0x12000, scoped, tag = 'internal scratch']
  %s0 = inlined_call_operand.vmem [shape: bf16[128,72], index: 0, kind: input, shape index: {}]
  %s1 = inlined_call_operand.vmem [shape: bf16[72,8], index: 1, kind: input, shape index: {}]
  %s2 = inlined_call_operand.vmem [shape: bf16[128,8], index: 2, kind: output, shape index: {0}]
  %s3 = inlined_call_operand.vmem [shape: f32[2,8], index: 3, kind: output, shape index: {1}]
  %4 = xla_tuple %s2, %s3
  %s5 = sld [smem:[#allocation0]]
  $region30: #{decoder_forward.22} parent=0
    _
  %s7 = ssub.s32 1, %s5
  %s8 = scalar_select 0, %s7, %s5
  // Predicated region
  $region2: #{decoder_forward.22} parent=0 // pred_check
    _
  $region3: #{decoder_forward.22} parent=0 // pred_check_branch
    %10 = sbr.rel (0) target = $region5
  $region4: #{decoder_forward.22} parent=0 // pred_region
    _
  $region5: #{decoder_forward.22} parent=0 // pred_fallthru
    _
  // Predicated region
  $region6: #{decoder_forward.22} parent=0 // pred_check
    _
  $region7: #{decoder_forward.22} parent=0 // pred_check_branch
    %12 = sbr.rel (0) target = $region9
  $region8: #{decoder_forward.22} parent=0 // pred_region
    _
  $region9: #{decoder_forward.22} parent=0 // pred_fallthru
    _
  %p14 = scmp.eq.s32.totalorder 0, 0
  // Predicated region
  $region10: #{decoder_forward.22} parent=0 // pred_check
    %p15 = pneg %p14
  $region11: #{decoder_forward.22} parent=0 // pred_check_branch
    %17 = sbr.rel (%p15) target = $region13
  $region12: #{decoder_forward.22} parent=0 // pred_region
    %vm18 = vcmask 58368
    %19 = vst.msk [vmem:[%s3] sm:$0x3] %vm18, 0.0
  $region13: #{decoder_forward.22} parent=0 // pred_fallthru
    _
  %v20 = vld [vmem:[%s0] sm:$0xf]
  %v21 = vld [vmem:[%s0 + $0x4] sm:$0xf]
  %v22 = vld [vmem:[%s0 + $0x8] sm:$0xf]
  %v23 = vld [vmem:[%s0 + $0xc] sm:$0xf]
  %v24 = vld [vmem:[%s0 + $0x10] sm:$0xf]
  %v25 = vld [vmem:[%s0 + $0x14] sm:$0xf]
  %v26 = vld [vmem:[%s0 + $0x18] sm:$0xf]
  %v27 = vld [vmem:[%s0 + $0x1c] sm:$0xf]
  %v28 = vld [vmem:[%s0 + $0x20] sm:$0xf]
  %v29 = vld [vmem:[%s0 + $0x24] sm:$0xf]
  %v30 = vld [vmem:[%s0 + $0x28] sm:$0xf]
  %v31 = vld [vmem:[%s0 + $0x2c] sm:$0xf]
  %v32 = vld [vmem:[%s0 + $0x30] sm:$0xf]
  %v33 = vld [vmem:[%s0 + $0x34] sm:$0xf]
  %v34 = vld [vmem:[%s0 + $0x38] sm:$0xf]
  %v35 = vld [vmem:[%s0 + $0x3c] sm:$0xf]
  %v36 = vld [vmem:[%s1] sm:$0xf]
  %v37 = vld [vmem:[%s1 + $0x4] sm:$0xf]
  %v38 = vld [vmem:[%s1 + $0x8] sm:$0xf]
  %v39 = vld [vmem:[%s1 + $0xc] sm:$0xf]
  %v40 = vld [vmem:[%s1 + $0x10] sm:$0xf]
  %v41 = vld [vmem:[%s1 + $0x14] sm:$0xf]
  %v42 = vld [vmem:[%s1 + $0x18] sm:$0xf]
  %v43 = vld [vmem:[%s1 + $0x1c] sm:$0xf]
  %v44 = vld [vmem:[%s1 + $0x20] sm:$0xf]
  %v61 = vunpack.c.l.b16 %v20
  %v62 = vunpack.c.l.b16 %v21
  %v63 = vunpack.c.l.b16 %v22
  %v64 = vunpack.c.l.b16 %v23
  %v65 = vunpack.c.l.b16 %v24
  %v66 = vunpack.c.l.b16 %v25
  %v67 = vunpack.c.l.b16 %v26
  %v68 = vunpack.c.l.b16 %v27
  %v69 = vunpack.c.l.b16 %v28
  %v70 = vunpack.c.l.b16 %v29
  %v71 = vunpack.c.l.b16 %v30
  %v72 = vunpack.c.l.b16 %v31
  %v73 = vunpack.c.l.b16 %v32
  %v74 = vunpack.c.l.b16 %v33
  %v75 = vunpack.c.l.b16 %v34
  %v76 = vunpack.c.l.b16 %v35
  %v77 = vpack.c.b16 %v62, %v61
  %v78 = vpack.c.b16 %v64, %v63
  %v79 = vpack.c.b16 %v66, %v65
  %v80 = vpack.c.b16 %v68, %v67
  %v81 = vpack.c.b16 %v70, %v69
  %v82 = vpack.c.b16 %v72, %v71
  %v83 = vpack.c.b16 %v74, %v73
  %v84 = vpack.c.b16 %v76, %v75
  %v94 = vunpack.c.l.b16 %v36
  %v95 = vunpack.c.l.b16 %v37
  %v96 = vunpack.c.l.b16 %v38
  %v97 = vunpack.c.l.b16 %v39
  %v98 = vunpack.c.l.b16 %v40
  %v99 = vunpack.c.l.b16 %v41
  %v100 = vunpack.c.l.b16 %v42
  %v101 = vunpack.c.l.b16 %v43
  %v102 = vunpack.c.l.b16 %v44
  %v103 = vpack.c.b16 %v95, %v94
  %v104 = vpack.c.b16 %v97, %v96
  %v105 = vpack.c.b16 %v99, %v98
  %v106 = vpack.c.b16 %v101, %v100
  %v107 = vpack.c.b16 %v102, %v102
  %vm112 = vcmask 588800
  %v114 = vsel %vm112, %v77, 0
  %v117 = vsel %vm112, %v78, 0
  %v120 = vsel %vm112, %v79, 0
  %v123 = vsel %vm112, %v80, 0
  %v126 = vsel %vm112, %v81, 0
  %v129 = vsel %vm112, %v82, 0
  %v132 = vsel %vm112, %v83, 0
  %v135 = vsel %vm112, %v84, 0
  %vm137 = vcmask 1043456
  %v139 = vsel %vm137, %v107, 0
  %141 = vmatprep.subr.bf16.mxu0 0
  %142 = vmatpush1.bf16.msra.mxu0 %v103
  %143 = vmatprep.subr.bf16.mxu0 0
  %144 = vmatpush1.bf16.msra.mxu0 %v104
  %145 = vmatprep.subr.bf16.mxu0 0
  %146 = vmatpush1.bf16.msra.mxu0 %v105
  %147 = vmatprep.subr.bf16.mxu0 0
  %148 = vmatpush1.bf16.msra.mxu0 %v106
  %149 = vmatprep.subr.bf16.mxu0 0
  %150 = vmatpush1.bf16.msra.mxu0 %v139
  %151 = vmatprep.subr.bf16.mxu0 0
  %152 = vmatpush1.bf16.msra.mxu0 0
  %153 = vmatprep.subr.bf16.mxu0 0
  %154 = vmatpush1.bf16.msra.mxu0 0
  %155 = vmatprep.subr.bf16.mxu0 0
  %156 = vmatpush1.bf16.msra.mxu0 0
  %157 = vmatprep.subr.bf16.mxu0 0
  %158 = vmatpush1.bf16.msra.mxu0 0
  %159 = vmatprep.subr.bf16.mxu0 0
  %160 = vmatpush1.bf16.msra.mxu0 0
  %161 = vmatprep.subr.bf16.mxu0 0
  %162 = vmatpush1.bf16.msra.mxu0 0
  %163 = vmatprep.subr.bf16.mxu0 0
  %164 = vmatpush1.bf16.msra.mxu0 0
  %165 = vmatprep.subr.bf16.mxu0 0
  %166 = vmatpush1.bf16.msra.mxu0 0
  %167 = vmatprep.subr.bf16.mxu0 0
  %168 = vmatpush1.bf16.msra.mxu0 0
  %169 = vmatprep.subr.bf16.mxu0 0
  %170 = vmatpush1.bf16.msra.mxu0 0
  %171 = vmatprep.subr.bf16.mxu0 0
  %172 = vmatpush1.bf16.msra.mxu0 0
  %173 = vmatprep.mubr.bf16.mxu0 0
  %174 = vmatmul.mubr.bf16.gmra.mrb[0].mxu0 %v114
  %v175 = vpop.f32.mrb[0].mxu0
  %v176 = vadd.f32 0.0, %v175
  %v177 = vpop.f32.mrb[0].mxu0
  %v178 = vpop.f32.mrb[0].mxu0
  %v179 = vadd.f32 0.0, %v178
  %v180 = vpop.f32.mrb[0].mxu0
  %181 = vmatprep.mubr.bf16.mxu0 0
  %182 = vmatmul.mubr.bf16.gmra.mrb[0].mxu0 %v117
  %v183 = vpop.f32.mrb[0].mxu0
  %v184 = vadd.f32 0.0, %v183
  %v185 = vpop.f32.mrb[0].mxu0
  %v186 = vpop.f32.mrb[0].mxu0
  %v187 = vadd.f32 0.0, %v186
  %v188 = vpop.f32.mrb[0].mxu0
  %189 = vmatprep.mubr.bf16.mxu0 0
  %190 = vmatmul.mubr.bf16.gmra.mrb[0].mxu0 %v120
  %v191 = vpop.f32.mrb[0].mxu0
  %v192 = vadd.f32 0.0, %v191
  %v193 = vpop.f32.mrb[0].mxu0
  %v194 = vpop.f32.mrb[0].mxu0
  %v195 = vadd.f32 0.0, %v194
  %v196 = vpop.f32.mrb[0].mxu0
  %197 = vmatprep.mubr.bf16.mxu0 0
  %198 = vmatmul.mubr.bf16.gmra.mrb[0].mxu0 %v123
  %v199 = vpop.f32.mrb[0].mxu0
  %v200 = vadd.f32 0.0, %v199
  %v201 = vpop.f32.mrb[0].mxu0
  %v202 = vpop.f32.mrb[0].mxu0
  %v203 = vadd.f32 0.0, %v202
  %v204 = vpop.f32.mrb[0].mxu0
  %205 = vmatprep.mubr.bf16.mxu0 0
  %206 = vmatmul.mubr.bf16.gmra.mrb[0].mxu0 %v126
  %v207 = vpop.f32.mrb[0].mxu0
  %v208 = vadd.f32 0.0, %v207
  %v209 = vpop.f32.mrb[0].mxu0
  %v210 = vpop.f32.mrb[0].mxu0
  %v211 = vadd.f32 0.0, %v210
  %v212 = vpop.f32.mrb[0].mxu0
  %213 = vmatprep.mubr.bf16.mxu0 0
  %214 = vmatmul.mubr.bf16.gmra.mrb[0].mxu0 %v129
  %v215 = vpop.f32.mrb[0].mxu0
  %v216 = vadd.f32 0.0, %v215
  %v217 = vpop.f32.mrb[0].mxu0
  %v218 = vpop.f32.mrb[0].mxu0
  %v219 = vadd.f32 0.0, %v218
  %v220 = vpop.f32.mrb[0].mxu0
  %221 = vmatprep.mubr.bf16.mxu0 0
  %222 = vmatmul.mubr.bf16.gmra.mrb[0].mxu0 %v132
  %v223 = vpop.f32.mrb[0].mxu0
  %v224 = vadd.f32 0.0, %v223
  %v225 = vpop.f32.mrb[0].mxu0
  %v226 = vpop.f32.mrb[0].mxu0
  %v227 = vadd.f32 0.0, %v226
  %v228 = vpop.f32.mrb[0].mxu0
  %229 = vmatprep.mubr.bf16.mxu0 0
  %230 = vmatmul.mubr.bf16.gmra.mrb[0].mxu0 %v135
  %v231 = vpop.f32.mrb[0].mxu0
  %v232 = vadd.f32 0.0, %v231
  %v233 = vpop.f32.mrb[0].mxu0
  %v234 = vpop.f32.mrb[0].mxu0
  %v235 = vadd.f32 0.0, %v234
  %v236 = vpop.f32.mrb[0].mxu0
  %237 = vdwg.mxu0
  %v238 = vpack.c.bf16 %v179, %v176
  %v239 = vpack.c.bf16 %v187, %v184
  %v240 = vpack.c.bf16 %v195, %v192
  %v241 = vpack.c.bf16 %v203, %v200
  %v242 = vpack.c.bf16 %v211, %v208
  %v243 = vpack.c.bf16 %v219, %v216
  %v244 = vpack.c.bf16 %v227, %v224
  %v245 = vpack.c.bf16 %v235, %v232
  %v254 = vunpack.c.l.b16 %v238
  %v255 = vunpack.c.h.b16 %v238
  %v256 = vunpack.c.l.b16 %v239
  %v257 = vunpack.c.h.b16 %v239
  %v258 = vunpack.c.l.b16 %v240
  %v259 = vunpack.c.h.b16 %v240
  %v260 = vunpack.c.l.b16 %v241
  %v261 = vunpack.c.h.b16 %v241
  %v262 = vunpack.c.l.b16 %v242
  %v263 = vunpack.c.h.b16 %v242
  %v264 = vunpack.c.l.b16 %v243
  %v265 = vunpack.c.h.b16 %v243
  %v266 = vunpack.c.l.b16 %v244
  %v267 = vunpack.c.h.b16 %v244
  %v268 = vunpack.c.l.b16 %v245
  %v269 = vunpack.c.h.b16 %v245
  %v270 = vpack.c.b16 %v254, %v254
  %v271 = vpack.c.b16 %v255, %v255
  %v272 = vpack.c.b16 %v256, %v256
  %v273 = vpack.c.b16 %v257, %v257
  %v274 = vpack.c.b16 %v258, %v258
  %v275 = vpack.c.b16 %v259, %v259
  %v276 = vpack.c.b16 %v260, %v260
  %v277 = vpack.c.b16 %v261, %v261
  %v278 = vpack.c.b16 %v262, %v262
  %v279 = vpack.c.b16 %v263, %v263
  %v280 = vpack.c.b16 %v264, %v264
  %v281 = vpack.c.b16 %v265, %v265
  %v282 = vpack.c.b16 %v266, %v266
  %v283 = vpack.c.b16 %v267, %v267
  %v284 = vpack.c.b16 %v268, %v268
  %v285 = vpack.c.b16 %v269, %v269
  %vm302 = vcmask 60416
  %303 = vst.msk [vmem:[%s2] sm:$0xf] %vm302, %v270
  %304 = vst.msk [vmem:[%s2 + $0x4] sm:$0xf] %vm302, %v271
  %305 = vst.msk [vmem:[%s2 + $0x8] sm:$0xf] %vm302, %v272
  %306 = vst.msk [vmem:[%s2 + $0xc] sm:$0xf] %vm302, %v273
  %307 = vst.msk [vmem:[%s2 + $0x10] sm:$0xf] %vm302, %v274
  %308 = vst.msk [vmem:[%s2 + $0x14] sm:$0xf] %vm302, %v275
  %309 = vst.msk [vmem:[%s2 + $0x18] sm:$0xf] %vm302, %v276
  %310 = vst.msk [vmem:[%s2 + $0x1c] sm:$0xf] %vm302, %v277
  %311 = vst.msk [vmem:[%s2 + $0x20] sm:$0xf] %vm302, %v278
  %312 = vst.msk [vmem:[%s2 + $0x24] sm:$0xf] %vm302, %v279
  %313 = vst.msk [vmem:[%s2 + $0x28] sm:$0xf] %vm302, %v280
  %314 = vst.msk [vmem:[%s2 + $0x2c] sm:$0xf] %vm302, %v281
  %315 = vst.msk [vmem:[%s2 + $0x30] sm:$0xf] %vm302, %v282
  %316 = vst.msk [vmem:[%s2 + $0x34] sm:$0xf] %vm302, %v283
  %317 = vst.msk [vmem:[%s2 + $0x38] sm:$0xf] %vm302, %v284
  %318 = vst.msk [vmem:[%s2 + $0x3c] sm:$0xf] %vm302, %v285
  %vm319 = vcmask 64512
  %v320 = vsel %vm319, %v176, 0.0
  %v321 = vsel %vm319, %v179, 0.0
  %v322 = vadd.f32 %v320, %v321
  %v323 = vsel %vm319, %v184, 0.0
  %v324 = vadd.f32 %v322, %v323
  %v325 = vsel %vm319, %v187, 0.0
  %v326 = vadd.f32 %v324, %v325
  %v327 = vsel %vm319, %v192, 0.0
  %v328 = vadd.f32 %v326, %v327
  %v329 = vsel %vm319, %v195, 0.0
  %v330 = vadd.f32 %v328, %v329
  %v331 = vsel %vm319, %v200, 0.0
  %v332 = vadd.f32 %v330, %v331
  %v333 = vsel %vm319, %v203, 0.0
  %v334 = vadd.f32 %v332, %v333
  %v335 = vsel %vm319, %v208, 0.0
  %v336 = vadd.f32 %v334, %v335
  %v337 = vsel %vm319, %v211, 0.0
  %v338 = vadd.f32 %v336, %v337
  %v339 = vsel %vm319, %v216, 0.0
  %v340 = vadd.f32 %v338, %v339
  %v341 = vsel %vm319, %v219, 0.0
  %v342 = vadd.f32 %v340, %v341
  %v343 = vsel %vm319, %v224, 0.0
  %v344 = vadd.f32 %v342, %v343
  %v345 = vsel %vm319, %v227, 0.0
  %v346 = vadd.f32 %v344, %v345
  %v347 = vsel %vm319, %v232, 0.0
  %v348 = vadd.f32 %v346, %v347
  %v349 = vsel %vm319, %v235, 0.0
  %v350 = vadd.f32 %v348, %v349
  %v351 = vrot.slane %v350, 4
  %v352 = vadd.f32 %v350, %v351
  %v353 = vrot.slane %v352, 2
  %v354 = vadd.f32 %v352, %v353
  %v355 = vrot.slane %v354, 1
  %v356 = vadd.f32 %v354, %v355
  %v357 = vmul.f32 %v176, %v176
  %v358 = vmul.f32 %v179, %v179
  %v359 = vmul.f32 %v184, %v184
  %v360 = vmul.f32 %v187, %v187
  %v361 = vmul.f32 %v192, %v192
  %v362 = vmul.f32 %v195, %v195
  %v363 = vmul.f32 %v200, %v200
  %v364 = vmul.f32 %v203, %v203
  %v365 = vmul.f32 %v208, %v208
  %v366 = vmul.f32 %v211, %v211
  %v367 = vmul.f32 %v216, %v216
  %v368 = vmul.f32 %v219, %v219
  %v369 = vmul.f32 %v224, %v224
  %v370 = vmul.f32 %v227, %v227
  %v371 = vmul.f32 %v232, %v232
  %v372 = vmul.f32 %v235, %v235
  %v373 = vsel %vm319, %v357, 0.0
  %v374 = vsel %vm319, %v358, 0.0
  %v375 = vadd.f32 %v373, %v374
  %v376 = vsel %vm319, %v359, 0.0
  %v377 = vadd.f32 %v375, %v376
  %v378 = vsel %vm319, %v360, 0.0
  %v379 = vadd.f32 %v377, %v378
  %v380 = vsel %vm319, %v361, 0.0
  %v381 = vadd.f32 %v379, %v380
  %v382 = vsel %vm319, %v362, 0.0
  %v383 = vadd.f32 %v381, %v382
  %v384 = vsel %vm319, %v363, 0.0
  %v385 = vadd.f32 %v383, %v384
  %v386 = vsel %vm319, %v364, 0.0
  %v387 = vadd.f32 %v385, %v386
  %v388 = vsel %vm319, %v365, 0.0
  %v389 = vadd.f32 %v387, %v388
  %v390 = vsel %vm319, %v366, 0.0
  %v391 = vadd.f32 %v389, %v390
  %v392 = vsel %vm319, %v367, 0.0
  %v393 = vadd.f32 %v391, %v392
  %v394 = vsel %vm319, %v368, 0.0
  %v395 = vadd.f32 %v393, %v394
  %v396 = vsel %vm319, %v369, 0.0
  %v397 = vadd.f32 %v395, %v396
  %v398 = vsel %vm319, %v370, 0.0
  %v399 = vadd.f32 %v397, %v398
  %v400 = vsel %vm319, %v371, 0.0
  %v401 = vadd.f32 %v399, %v400
  %v402 = vsel %vm319, %v372, 0.0
  %v403 = vadd.f32 %v401, %v402
  %v404 = vrot.slane %v403, 4
  %v405 = vadd.f32 %v403, %v404
  %v406 = vrot.slane %v405, 2
  %v407 = vadd.f32 %v405, %v406
  %v408 = vrot.slane %v407, 1
  %v409 = vadd.f32 %v407, %v408
  %v410 = vld [vmem:[%s3] sm:$0x3]
  %vm411 = vcmask 1040384
  %v412 = vsel %vm411, %v356, %v409
  %v413 = vadd.f32 %v410, %v412
  %vm414 = vcmask 58368
  %415 = vst.msk [vmem:[%s3] sm:$0x3] %vm414, %v413
  // Predicated region
  $region14: #{decoder_forward.22} parent=0 // pred_check
    _
  $region15: #{decoder_forward.22} parent=0 // pred_check_branch
    %417 = sbr.rel (0) target = $region17
  $region16: #{decoder_forward.22} parent=0 // pred_region
    _
  $region17: #{decoder_forward.22} parent=0 // pred_fallthru
    _
  // Predicated region
  $region18: #{decoder_forward.22} parent=0 // pred_check
    _
  $region19: #{decoder_forward.22} parent=0 // pred_check_branch
    %419 = sbr.rel (0) target = $region21
  $region20: #{decoder_forward.22} parent=0 // pred_region
    _
  $region21: #{decoder_forward.22} parent=0 // pred_fallthru
    _
  // Predicated region
  $region22: #{decoder_forward.22} parent=0 // pred_check
    _
  $region23: #{decoder_forward.22} parent=0 // pred_check_branch
    %421 = sbr.rel (0) target = $region25
  $region24: #{decoder_forward.22} parent=0 // pred_region
    _
  $region25: #{decoder_forward.22} parent=0 // pred_fallthru
    _
  // Predicated region
  $region26: #{decoder_forward.22} parent=0 // pred_check
    _
  $region27: #{decoder_forward.22} parent=0 // pred_check_branch
    %423 = sbr.rel (0) target = $region29
  $region28: #{decoder_forward.22} parent=0 // pred_region
    _
  $region29: #{decoder_forward.22} parent=0 // pred_fallthru
    _

// kernel: decoder_forward.24
$region0: #{decoder_forward.24}
  #allocation0 [shape = 'u32[]', space=smem, size = 0x4, offset = 0x4, fixed_abs, tag = 'smem constant byte address 0x4 - core index']
  #allocation1 [shape = 'u32[144,128]{1,0:T(1,128)}', space=vmem, size = 0x12000, scoped, tag = 'internal scratch']
  %s0 = inlined_call_operand.vmem [shape: bf16[128,8], index: 0, kind: input, shape index: {}]
  %s1 = inlined_call_operand.vmem [shape: bf16[8,32], index: 1, kind: input, shape index: {}]
  %s2 = inlined_call_operand.vmem [shape: f32[1,32], index: 2, kind: input, shape index: {}]
  %s3 = inlined_call_operand.vmem [shape: bf16[128,32], index: 3, kind: output, shape index: {}]
  %s4 = sld [smem:[#allocation0]]
  $region22: #{decoder_forward.24} parent=0
    _
  %s6 = ssub.s32 1, %s4
  %s7 = scalar_select 0, %s6, %s4
  // Predicated region
  $region2: #{decoder_forward.24} parent=0 // pred_check
    _
  $region3: #{decoder_forward.24} parent=0 // pred_check_branch
    %9 = sbr.rel (0) target = $region5
  $region4: #{decoder_forward.24} parent=0 // pred_region
    _
  $region5: #{decoder_forward.24} parent=0 // pred_fallthru
    _
  // Predicated region
  $region6: #{decoder_forward.24} parent=0 // pred_check
    _
  $region7: #{decoder_forward.24} parent=0 // pred_check_branch
    %11 = sbr.rel (0) target = $region9
  $region8: #{decoder_forward.24} parent=0 // pred_region
    _
  $region9: #{decoder_forward.24} parent=0 // pred_fallthru
    _
  // Predicated region
  $region10: #{decoder_forward.24} parent=0 // pred_check
    _
  $region11: #{decoder_forward.24} parent=0 // pred_check_branch
    %13 = sbr.rel (0) target = $region13
  $region12: #{decoder_forward.24} parent=0 // pred_region
    _
  $region13: #{decoder_forward.24} parent=0 // pred_fallthru
    _
  %v15 = vld [vmem:[%s0] sm:$0xf]
  %v16 = vld [vmem:[%s0 + $0x4] sm:$0xf]
  %v17 = vld [vmem:[%s0 + $0x8] sm:$0xf]
  %v18 = vld [vmem:[%s0 + $0xc] sm:$0xf]
  %v19 = vld [vmem:[%s0 + $0x10] sm:$0xf]
  %v20 = vld [vmem:[%s0 + $0x14] sm:$0xf]
  %v21 = vld [vmem:[%s0 + $0x18] sm:$0xf]
  %v22 = vld [vmem:[%s0 + $0x1c] sm:$0xf]
  %v23 = vld [vmem:[%s0 + $0x20] sm:$0xf]
  %v24 = vld [vmem:[%s0 + $0x24] sm:$0xf]
  %v25 = vld [vmem:[%s0 + $0x28] sm:$0xf]
  %v26 = vld [vmem:[%s0 + $0x2c] sm:$0xf]
  %v27 = vld [vmem:[%s0 + $0x30] sm:$0xf]
  %v28 = vld [vmem:[%s0 + $0x34] sm:$0xf]
  %v29 = vld [vmem:[%s0 + $0x38] sm:$0xf]
  %v30 = vld [vmem:[%s0 + $0x3c] sm:$0xf]
  %v31 = vld [vmem:[%s1] sm:$0xf]
  %v32 = vld [vmem:[%s2] sm:$0x1]
  %v34 = vlaneseq
  %v35 = vshrl.u32 %v34, 7
  %v36 = vsub.s32 0, %v35
  %v37 = vrot.slane %v32, %v36
  %v55 = vunpack.c.l.b16 %v15
  %v56 = vunpack.c.l.b16 %v16
  %v57 = vunpack.c.l.b16 %v17
  %v58 = vunpack.c.l.b16 %v18
  %v59 = vunpack.c.l.b16 %v19
  %v60 = vunpack.c.l.b16 %v20
  %v61 = vunpack.c.l.b16 %v21
  %v62 = vunpack.c.l.b16 %v22
  %v63 = vunpack.c.l.b16 %v23
  %v64 = vunpack.c.l.b16 %v24
  %v65 = vunpack.c.l.b16 %v25
  %v66 = vunpack.c.l.b16 %v26
  %v67 = vunpack.c.l.b16 %v27
  %v68 = vunpack.c.l.b16 %v28
  %v69 = vunpack.c.l.b16 %v29
  %v70 = vunpack.c.l.b16 %v30
  %v71 = vpack.c.b16 %v56, %v55
  %v72 = vpack.c.b16 %v58, %v57
  %v73 = vpack.c.b16 %v60, %v59
  %v74 = vpack.c.b16 %v62, %v61
  %v75 = vpack.c.b16 %v64, %v63
  %v76 = vpack.c.b16 %v66, %v65
  %v77 = vpack.c.b16 %v68, %v67
  %v78 = vpack.c.b16 %v70, %v69
  %vm79 = vcmask 64512
  %v81 = vsel %vm79, %v71, 0
  %v84 = vsel %vm79, %v72, 0
  %v87 = vsel %vm79, %v73, 0
  %v90 = vsel %vm79, %v74, 0
  %v93 = vsel %vm79, %v75, 0
  %v96 = vsel %vm79, %v76, 0
  %v99 = vsel %vm79, %v77, 0
  %v102 = vsel %vm79, %v78, 0
  %vm104 = vcmask 1043456
  %v106 = vsel %vm104, %v31, 0
  %108 = vmatprep.subr.bf16.mxu0 0
  %109 = vmatpush1.bf16.msra.mxu0 %v106
  %110 = vmatprep.subr.bf16.mxu0 0
  %111 = vmatpush1.bf16.msra.mxu0 0
  %112 = vmatprep.subr.bf16.mxu0 0
  %113 = vmatpush1.bf16.msra.mxu0 0
  %114 = vmatprep.subr.bf16.mxu0 0
  %115 = vmatpush1.bf16.msra.mxu0 0
  %116 = vmatprep.subr.bf16.mxu0 0
  %117 = vmatpush1.bf16.msra.mxu0 0
  %118 = vmatprep.subr.bf16.mxu0 0
  %119 = vmatpush1.bf16.msra.mxu0 0
  %120 = vmatprep.subr.bf16.mxu0 0
  %121 = vmatpush1.bf16.msra.mxu0 0
  %122 = vmatprep.subr.bf16.mxu0 0
  %123 = vmatpush1.bf16.msra.mxu0 0
  %124 = vmatprep.subr.bf16.mxu0 0
  %125 = vmatpush1.bf16.msra.mxu0 0
  %126 = vmatprep.subr.bf16.mxu0 0
  %127 = vmatpush1.bf16.msra.mxu0 0
  %128 = vmatprep.subr.bf16.mxu0 0
  %129 = vmatpush1.bf16.msra.mxu0 0
  %130 = vmatprep.subr.bf16.mxu0 0
  %131 = vmatpush1.bf16.msra.mxu0 0
  %132 = vmatprep.subr.bf16.mxu0 0
  %133 = vmatpush1.bf16.msra.mxu0 0
  %134 = vmatprep.subr.bf16.mxu0 0
  %135 = vmatpush1.bf16.msra.mxu0 0
  %136 = vmatprep.subr.bf16.mxu0 0
  %137 = vmatpush1.bf16.msra.mxu0 0
  %138 = vmatprep.subr.bf16.mxu0 0
  %139 = vmatpush1.bf16.msra.mxu0 0
  %140 = vmatprep.mubr.bf16.mxu0 0
  %141 = vmatmul.mubr.bf16.gmra.mrb[0].mxu0 %v81
  %v142 = vpop.f32.mrb[0].mxu0
  %v143 = vadd.f32 %v37, %v142
  %v144 = vpop.f32.mrb[0].mxu0
  %v145 = vpop.f32.mrb[0].mxu0
  %v146 = vadd.f32 %v37, %v145
  %v147 = vpop.f32.mrb[0].mxu0
  %148 = vmatprep.mubr.bf16.mxu0 0
  %149 = vmatmul.mubr.bf16.gmra.mrb[0].mxu0 %v84
  %v150 = vpop.f32.mrb[0].mxu0
  %v151 = vadd.f32 %v37, %v150
  %v152 = vpop.f32.mrb[0].mxu0
  %v153 = vpop.f32.mrb[0].mxu0
  %v154 = vadd.f32 %v37, %v153
  %v155 = vpop.f32.mrb[0].mxu0
  %156 = vmatprep.mubr.bf16.mxu0 0
  %157 = vmatmul.mubr.bf16.gmra.mrb[0].mxu0 %v87
  %v158 = vpop.f32.mrb[0].mxu0
  %v159 = vadd.f32 %v37, %v158
  %v160 = vpop.f32.mrb[0].mxu0
  %v161 = vpop.f32.mrb[0].mxu0
  %v162 = vadd.f32 %v37, %v161
  %v163 = vpop.f32.mrb[0].mxu0
  %164 = vmatprep.mubr.bf16.mxu0 0
  %165 = vmatmul.mubr.bf16.gmra.mrb[0].mxu0 %v90
  %v166 = vpop.f32.mrb[0].mxu0
  %v167 = vadd.f32 %v37, %v166
  %v168 = vpop.f32.mrb[0].mxu0
  %v169 = vpop.f32.mrb[0].mxu0
  %v170 = vadd.f32 %v37, %v169
  %v171 = vpop.f32.mrb[0].mxu0
  %172 = vmatprep.mubr.bf16.mxu0 0
  %173 = vmatmul.mubr.bf16.gmra.mrb[0].mxu0 %v93
  %v174 = vpop.f32.mrb[0].mxu0
  %v175 = vadd.f32 %v37, %v174
  %v176 = vpop.f32.mrb[0].mxu0
  %v177 = vpop.f32.mrb[0].mxu0
  %v178 = vadd.f32 %v37, %v177
  %v179 = vpop.f32.mrb[0].mxu0
  %180 = vmatprep.mubr.bf16.mxu0 0
  %181 = vmatmul.mubr.bf16.gmra.mrb[0].mxu0 %v96
  %v182 = vpop.f32.mrb[0].mxu0
  %v183 = vadd.f32 %v37, %v182
  %v184 = vpop.f32.mrb[0].mxu0
  %v185 = vpop.f32.mrb[0].mxu0
  %v186 = vadd.f32 %v37, %v185
  %v187 = vpop.f32.mrb[0].mxu0
  %188 = vmatprep.mubr.bf16.mxu0 0
  %189 = vmatmul.mubr.bf16.gmra.mrb[0].mxu0 %v99
  %v190 = vpop.f32.mrb[0].mxu0
  %v191 = vadd.f32 %v37, %v190
  %v192 = vpop.f32.mrb[0].mxu0
  %v193 = vpop.f32.mrb[0].mxu0
  %v194 = vadd.f32 %v37, %v193
  %v195 = vpop.f32.mrb[0].mxu0
  %196 = vmatprep.mubr.bf16.mxu0 0
  %197 = vmatmul.mubr.bf16.gmra.mrb[0].mxu0 %v102
  %v198 = vpop.f32.mrb[0].mxu0
  %v199 = vadd.f32 %v37, %v198
  %v200 = vpop.f32.mrb[0].mxu0
  %v201 = vpop.f32.mrb[0].mxu0
  %v202 = vadd.f32 %v37, %v201
  %v203 = vpop.f32.mrb[0].mxu0
  %204 = vdwg.mxu0
  %vm205 = vcmp.gt.f32.partialorder %v143, 0.0
  %vm206 = vcmp.gt.f32.partialorder %v146, 0.0
  %vm207 = vcmp.gt.f32.partialorder %v151, 0.0
  %vm208 = vcmp.gt.f32.partialorder %v154, 0.0
  %vm209 = vcmp.gt.f32.partialorder %v159, 0.0
  %vm210 = vcmp.gt.f32.partialorder %v162, 0.0
  %vm211 = vcmp.gt.f32.partialorder %v167, 0.0
  %vm212 = vcmp.gt.f32.partialorder %v170, 0.0
  %vm213 = vcmp.gt.f32.partialorder %v175, 0.0
  %vm214 = vcmp.gt.f32.partialorder %v178, 0.0
  %vm215 = vcmp.gt.f32.partialorder %v183, 0.0
  %vm216 = vcmp.gt.f32.partialorder %v186, 0.0
  %vm217 = vcmp.gt.f32.partialorder %v191, 0.0
  %vm218 = vcmp.gt.f32.partialorder %v194, 0.0
  %vm219 = vcmp.gt.f32.partialorder %v199, 0.0
  %vm220 = vcmp.gt.f32.partialorder %v202, 0.0
  %v221 = vmul.f32 %v143, 0.01
  %v222 = vmul.f32 %v146, 0.01
  %v223 = vmul.f32 %v151, 0.01
  %v224 = vmul.f32 %v154, 0.01
  %v225 = vmul.f32 %v159, 0.01
  %v226 = vmul.f32 %v162, 0.01
  %v227 = vmul.f32 %v167, 0.01
  %v228 = vmul.f32 %v170, 0.01
  %v229 = vmul.f32 %v175, 0.01
  %v230 = vmul.f32 %v178, 0.01
  %v231 = vmul.f32 %v183, 0.01
  %v232 = vmul.f32 %v186, 0.01
  %v233 = vmul.f32 %v191, 0.01
  %v234 = vmul.f32 %v194, 0.01
  %v235 = vmul.f32 %v199, 0.01
  %v236 = vmul.f32 %v202, 0.01
  %v237 = vsel %vm205, %v143, %v221
  %v238 = vsel %vm206, %v146, %v222
  %v239 = vsel %vm207, %v151, %v223
  %v240 = vsel %vm208, %v154, %v224
  %v241 = vsel %vm209, %v159, %v225
  %v242 = vsel %vm210, %v162, %v226
  %v243 = vsel %vm211, %v167, %v227
  %v244 = vsel %vm212, %v170, %v228
  %v245 = vsel %vm213, %v175, %v229
  %v246 = vsel %vm214, %v178, %v230
  %v247 = vsel %vm215, %v183, %v231
  %v248 = vsel %vm216, %v186, %v232
  %v249 = vsel %vm217, %v191, %v233
  %v250 = vsel %vm218, %v194, %v234
  %v251 = vsel %vm219, %v199, %v235
  %v252 = vsel %vm220, %v202, %v236
  %v253 = vpack.c.bf16 %v238, %v237
  %v254 = vpack.c.bf16 %v240, %v239
  %v255 = vpack.c.bf16 %v242, %v241
  %v256 = vpack.c.bf16 %v244, %v243
  %v257 = vpack.c.bf16 %v246, %v245
  %v258 = vpack.c.bf16 %v248, %v247
  %v259 = vpack.c.bf16 %v250, %v249
  %v260 = vpack.c.bf16 %v252, %v251
  %v269 = vunpack.c.l.b16 %v253
  %v270 = vunpack.c.h.b16 %v253
  %v271 = vunpack.c.l.b16 %v254
  %v272 = vunpack.c.h.b16 %v254
  %v273 = vunpack.c.l.b16 %v255
  %v274 = vunpack.c.h.b16 %v255
  %v275 = vunpack.c.l.b16 %v256
  %v276 = vunpack.c.h.b16 %v256
  %v277 = vunpack.c.l.b16 %v257
  %v278 = vunpack.c.h.b16 %v257
  %v279 = vunpack.c.l.b16 %v258
  %v280 = vunpack.c.h.b16 %v258
  %v281 = vunpack.c.l.b16 %v259
  %v282 = vunpack.c.h.b16 %v259
  %v283 = vunpack.c.l.b16 %v260
  %v284 = vunpack.c.h.b16 %v260
  %v285 = vpack.c.b16 %v269, %v269
  %v286 = vpack.c.b16 %v270, %v270
  %v287 = vpack.c.b16 %v271, %v271
  %v288 = vpack.c.b16 %v272, %v272
  %v289 = vpack.c.b16 %v273, %v273
  %v290 = vpack.c.b16 %v274, %v274
  %v291 = vpack.c.b16 %v275, %v275
  %v292 = vpack.c.b16 %v276, %v276
  %v293 = vpack.c.b16 %v277, %v277
  %v294 = vpack.c.b16 %v278, %v278
  %v295 = vpack.c.b16 %v279, %v279
  %v296 = vpack.c.b16 %v280, %v280
  %v297 = vpack.c.b16 %v281, %v281
  %v298 = vpack.c.b16 %v282, %v282
  %v299 = vpack.c.b16 %v283, %v283
  %v300 = vpack.c.b16 %v284, %v284
  %vm317 = vcmask 257024
  %318 = vst.msk [vmem:[%s3] sm:$0xf] %vm317, %v285
  %319 = vst.msk [vmem:[%s3 + $0x4] sm:$0xf] %vm317, %v286
  %320 = vst.msk [vmem:[%s3 + $0x8] sm:$0xf] %vm317, %v287
  %321 = vst.msk [vmem:[%s3 + $0xc] sm:$0xf] %vm317, %v288
  %322 = vst.msk [vmem:[%s3 + $0x10] sm:$0xf] %vm317, %v289
  %323 = vst.msk [vmem:[%s3 + $0x14] sm:$0xf] %vm317, %v290
  %324 = vst.msk [vmem:[%s3 + $0x18] sm:$0xf] %vm317, %v291
  %325 = vst.msk [vmem:[%s3 + $0x1c] sm:$0xf] %vm317, %v292
  %326 = vst.msk [vmem:[%s3 + $0x20] sm:$0xf] %vm317, %v293
  %327 = vst.msk [vmem:[%s3 + $0x24] sm:$0xf] %vm317, %v294
  %328 = vst.msk [vmem:[%s3 + $0x28] sm:$0xf] %vm317, %v295
  %329 = vst.msk [vmem:[%s3 + $0x2c] sm:$0xf] %vm317, %v296
  %330 = vst.msk [vmem:[%s3 + $0x30] sm:$0xf] %vm317, %v297
  %331 = vst.msk [vmem:[%s3 + $0x34] sm:$0xf] %vm317, %v298
  %332 = vst.msk [vmem:[%s3 + $0x38] sm:$0xf] %vm317, %v299
  %333 = vst.msk [vmem:[%s3 + $0x3c] sm:$0xf] %vm317, %v300
  // Predicated region
  $region14: #{decoder_forward.24} parent=0 // pred_check
    _
  $region15: #{decoder_forward.24} parent=0 // pred_check_branch
    %335 = sbr.rel (0) target = $region17
  $region16: #{decoder_forward.24} parent=0 // pred_region
    _
  $region17: #{decoder_forward.24} parent=0 // pred_fallthru
    _
  // Predicated region
  $region18: #{decoder_forward.24} parent=0 // pred_check
    _
  $region19: #{decoder_forward.24} parent=0 // pred_check_branch
    %337 = sbr.rel (0) target = $region21
  $region20: #{decoder_forward.24} parent=0 // pred_region
    _
  $region21: #{decoder_forward.24} parent=0 // pred_fallthru
    _

// kernel: decoder_forward.25
$region0: #{decoder_forward.25}
  #allocation0 [shape = 'u32[]', space=smem, size = 0x4, offset = 0x4, fixed_abs, tag = 'smem constant byte address 0x4 - core index']
  #allocation1 [shape = 'u32[144,128]{1,0:T(1,128)}', space=vmem, size = 0x12000, scoped, tag = 'internal scratch']
  #allocation2 [shape = 'f32[1,1]{1,0:T(1,128)S(1)}', space=vmem, size = 0x200, scoped, tag = 'scoped memory for decoder_forward.25']
  %s0 = inlined_call_operand.vmem [shape: bf16[512,8], index: 0, kind: input, shape index: {}]
  %s1 = inlined_call_operand.vmem [shape: bf16[8,1], index: 1, kind: input, shape index: {}]
  %s2 = inlined_call_operand.<no memory space> [shape: f32[1,1], index: 2, kind: input, shape index: {}]
  %s3 = inlined_call_operand.vmem [shape: f32[512,1], index: 3, kind: output, shape index: {}]
  %s4 = sld [smem:[#allocation0]]
  $region22: #{decoder_forward.25} parent=0
    _
  %s6 = ssub.s32 1, %s4
  %s7 = scalar_select 0, %s6, %s4
  %v8 = vstv %s2
  %9 = vst [vmem:[#allocation2] sm:$0x1] %v8
  // Predicated region
  $region2: #{decoder_forward.25} parent=0 // pred_check
    _
  $region3: #{decoder_forward.25} parent=0 // pred_check_branch
    %11 = sbr.rel (0) target = $region5
  $region4: #{decoder_forward.25} parent=0 // pred_region
    _
  $region5: #{decoder_forward.25} parent=0 // pred_fallthru
    _
  // Predicated region
  $region6: #{decoder_forward.25} parent=0 // pred_check
    _
  $region7: #{decoder_forward.25} parent=0 // pred_check_branch
    %13 = sbr.rel (0) target = $region9
  $region8: #{decoder_forward.25} parent=0 // pred_region
    _
  $region9: #{decoder_forward.25} parent=0 // pred_fallthru
    _
  // Predicated region
  $region10: #{decoder_forward.25} parent=0 // pred_check
    _
  $region11: #{decoder_forward.25} parent=0 // pred_check_branch
    %15 = sbr.rel (0) target = $region13
  $region12: #{decoder_forward.25} parent=0 // pred_region
    _
  $region13: #{decoder_forward.25} parent=0 // pred_fallthru
    _
  %v17 = vld [vmem:[%s0] sm:$0xf]
  %v18 = vld [vmem:[%s0 + $0x4] sm:$0xf]
  %v19 = vld [vmem:[%s0 + $0x8] sm:$0xf]
  %v20 = vld [vmem:[%s0 + $0xc] sm:$0xf]
  %v21 = vld [vmem:[%s0 + $0x10] sm:$0xf]
  %v22 = vld [vmem:[%s0 + $0x14] sm:$0xf]
  %v23 = vld [vmem:[%s0 + $0x18] sm:$0xf]
  %v24 = vld [vmem:[%s0 + $0x1c] sm:$0xf]
  %v25 = vld [vmem:[%s0 + $0x20] sm:$0xf]
  %v26 = vld [vmem:[%s0 + $0x24] sm:$0xf]
  %v27 = vld [vmem:[%s0 + $0x28] sm:$0xf]
  %v28 = vld [vmem:[%s0 + $0x2c] sm:$0xf]
  %v29 = vld [vmem:[%s0 + $0x30] sm:$0xf]
  %v30 = vld [vmem:[%s0 + $0x34] sm:$0xf]
  %v31 = vld [vmem:[%s0 + $0x38] sm:$0xf]
  %v32 = vld [vmem:[%s0 + $0x3c] sm:$0xf]
  %v33 = vld [vmem:[%s0 + $0x40] sm:$0xf]
  %v34 = vld [vmem:[%s0 + $0x44] sm:$0xf]
  %v35 = vld [vmem:[%s0 + $0x48] sm:$0xf]
  %v36 = vld [vmem:[%s0 + $0x4c] sm:$0xf]
  %v37 = vld [vmem:[%s0 + $0x50] sm:$0xf]
  %v38 = vld [vmem:[%s0 + $0x54] sm:$0xf]
  %v39 = vld [vmem:[%s0 + $0x58] sm:$0xf]
  %v40 = vld [vmem:[%s0 + $0x5c] sm:$0xf]
  %v41 = vld [vmem:[%s0 + $0x60] sm:$0xf]
  %v42 = vld [vmem:[%s0 + $0x64] sm:$0xf]
  %v43 = vld [vmem:[%s0 + $0x68] sm:$0xf]
  %v44 = vld [vmem:[%s0 + $0x6c] sm:$0xf]
  %v45 = vld [vmem:[%s0 + $0x70] sm:$0xf]
  %v46 = vld [vmem:[%s0 + $0x74] sm:$0xf]
  %v47 = vld [vmem:[%s0 + $0x78] sm:$0xf]
  %v48 = vld [vmem:[%s0 + $0x7c] sm:$0xf]
  %v49 = vld [vmem:[%s0 + $0x80] sm:$0xf]
  %v50 = vld [vmem:[%s0 + $0x84] sm:$0xf]
  %v51 = vld [vmem:[%s0 + $0x88] sm:$0xf]
  %v52 = vld [vmem:[%s0 + $0x8c] sm:$0xf]
  %v53 = vld [vmem:[%s0 + $0x90] sm:$0xf]
  %v54 = vld [vmem:[%s0 + $0x94] sm:$0xf]
  %v55 = vld [vmem:[%s0 + $0x98] sm:$0xf]
  %v56 = vld [vmem:[%s0 + $0x9c] sm:$0xf]
  %v57 = vld [vmem:[%s0 + $0xa0] sm:$0xf]
  %v58 = vld [vmem:[%s0 + $0xa4] sm:$0xf]
  %v59 = vld [vmem:[%s0 + $0xa8] sm:$0xf]
  %v60 = vld [vmem:[%s0 + $0xac] sm:$0xf]
  %v61 = vld [vmem:[%s0 + $0xb0] sm:$0xf]
  %v62 = vld [vmem:[%s0 + $0xb4] sm:$0xf]
  %v63 = vld [vmem:[%s0 + $0xb8] sm:$0xf]
  %v64 = vld [vmem:[%s0 + $0xbc] sm:$0xf]
  %v65 = vld [vmem:[%s0 + $0xc0] sm:$0xf]
  %v66 = vld [vmem:[%s0 + $0xc4] sm:$0xf]
  %v67 = vld [vmem:[%s0 + $0xc8] sm:$0xf]
  %v68 = vld [vmem:[%s0 + $0xcc] sm:$0xf]
  %v69 = vld [vmem:[%s0 + $0xd0] sm:$0xf]
  %v70 = vld [vmem:[%s0 + $0xd4] sm:$0xf]
  %v71 = vld [vmem:[%s0 + $0xd8] sm:$0xf]
  %v72 = vld [vmem:[%s0 + $0xdc] sm:$0xf]
  %v73 = vld [vmem:[%s0 + $0xe0] sm:$0xf]
  %v74 = vld [vmem:[%s0 + $0xe4] sm:$0xf]
  %v75 = vld [vmem:[%s0 + $0xe8] sm:$0xf]
  %v76 = vld [vmem:[%s0 + $0xec] sm:$0xf]
  %v77 = vld [vmem:[%s0 + $0xf0] sm:$0xf]
  %v78 = vld [vmem:[%s0 + $0xf4] sm:$0xf]
  %v79 = vld [vmem:[%s0 + $0xf8] sm:$0xf]
  %v80 = vld [vmem:[%s0 + $0xfc] sm:$0xf]
  %v81 = vld [vmem:[%s1] sm:$0xf]
  %v82 = vld [vmem:[#allocation2] sm:$0x1]
  %v84 = vlaneseq
  %v85 = vshrl.u32 %v84, 7
  %v86 = vsub.s32 0, %v85
  %v87 = vrot.slane %v82, %v86
  %v153 = vunpack.c.l.b16 %v17
  %v154 = vunpack.c.l.b16 %v18
  %v155 = vunpack.c.l.b16 %v19
  %v156 = vunpack.c.l.b16 %v20
  %v157 = vunpack.c.l.b16 %v21
  %v158 = vunpack.c.l.b16 %v22
  %v159 = vunpack.c.l.b16 %v23
  %v160 = vunpack.c.l.b16 %v24
  %v161 = vunpack.c.l.b16 %v25
  %v162 = vunpack.c.l.b16 %v26
  %v163 = vunpack.c.l.b16 %v27
  %v164 = vunpack.c.l.b16 %v28
  %v165 = vunpack.c.l.b16 %v29
  %v166 = vunpack.c.l.b16 %v30
  %v167 = vunpack.c.l.b16 %v31
  %v168 = vunpack.c.l.b16 %v32
  %v169 = vunpack.c.l.b16 %v33
  %v170 = vunpack.c.l.b16 %v34
  %v171 = vunpack.c.l.b16 %v35
  %v172 = vunpack.c.l.b16 %v36
  %v173 = vunpack.c.l.b16 %v37
  %v174 = vunpack.c.l.b16 %v38
  %v175 = vunpack.c.l.b16 %v39
  %v176 = vunpack.c.l.b16 %v40
  %v177 = vunpack.c.l.b16 %v41
  %v178 = vunpack.c.l.b16 %v42
  %v179 = vunpack.c.l.b16 %v43
  %v180 = vunpack.c.l.b16 %v44
  %v181 = vunpack.c.l.b16 %v45
  %v182 = vunpack.c.l.b16 %v46
  %v183 = vunpack.c.l.b16 %v47
  %v184 = vunpack.c.l.b16 %v48
  %v185 = vunpack.c.l.b16 %v49
  %v186 = vunpack.c.l.b16 %v50
  %v187 = vunpack.c.l.b16 %v51
  %v188 = vunpack.c.l.b16 %v52
  %v189 = vunpack.c.l.b16 %v53
  %v190 = vunpack.c.l.b16 %v54
  %v191 = vunpack.c.l.b16 %v55
  %v192 = vunpack.c.l.b16 %v56
  %v193 = vunpack.c.l.b16 %v57
  %v194 = vunpack.c.l.b16 %v58
  %v195 = vunpack.c.l.b16 %v59
  %v196 = vunpack.c.l.b16 %v60
  %v197 = vunpack.c.l.b16 %v61
  %v198 = vunpack.c.l.b16 %v62
  %v199 = vunpack.c.l.b16 %v63
  %v200 = vunpack.c.l.b16 %v64
  %v201 = vunpack.c.l.b16 %v65
  %v202 = vunpack.c.l.b16 %v66
  %v203 = vunpack.c.l.b16 %v67
  %v204 = vunpack.c.l.b16 %v68
  %v205 = vunpack.c.l.b16 %v69
  %v206 = vunpack.c.l.b16 %v70
  %v207 = vunpack.c.l.b16 %v71
  %v208 = vunpack.c.l.b16 %v72
  %v209 = vunpack.c.l.b16 %v73
  %v210 = vunpack.c.l.b16 %v74
  %v211 = vunpack.c.l.b16 %v75
  %v212 = vunpack.c.l.b16 %v76
  %v213 = vunpack.c.l.b16 %v77
  %v214 = vunpack.c.l.b16 %v78
  %v215 = vunpack.c.l.b16 %v79
  %v216 = vunpack.c.l.b16 %v80
  %v217 = vpack.c.b16 %v154, %v153
  %v218 = vpack.c.b16 %v156, %v155
  %v219 = vpack.c.b16 %v158, %v157
  %v220 = vpack.c.b16 %v160, %v159
  %v221 = vpack.c.b16 %v162, %v161
  %v222 = vpack.c.b16 %v164, %v163
  %v223 = vpack.c.b16 %v166, %v165
  %v224 = vpack.c.b16 %v168, %v167
  %v225 = vpack.c.b16 %v170, %v169
  %v226 = vpack.c.b16 %v172, %v171
  %v227 = vpack.c.b16 %v174, %v173
  %v228 = vpack.c.b16 %v176, %v175
  %v229 = vpack.c.b16 %v178, %v177
  %v230 = vpack.c.b16 %v180, %v179
  %v231 = vpack.c.b16 %v182, %v181
  %v232 = vpack.c.b16 %v184, %v183
  %v233 = vpack.c.b16 %v186, %v185
  %v234 = vpack.c.b16 %v188, %v187
  %v235 = vpack.c.b16 %v190, %v189
  %v236 = vpack.c.b16 %v192, %v191
  %v237 = vpack.c.b16 %v194, %v193
  %v238 = vpack.c.b16 %v196, %v195
  %v239 = vpack.c.b16 %v198, %v197
  %v240 = vpack.c.b16 %v200, %v199
  %v241 = vpack.c.b16 %v202, %v201
  %v242 = vpack.c.b16 %v204, %v203
  %v243 = vpack.c.b16 %v206, %v205
  %v244 = vpack.c.b16 %v208, %v207
  %v245 = vpack.c.b16 %v210, %v209
  %v246 = vpack.c.b16 %v212, %v211
  %v247 = vpack.c.b16 %v214, %v213
  %v248 = vpack.c.b16 %v216, %v215
  %vm249 = vcmask 64512
  %v251 = vsel %vm249, %v217, 0
  %v254 = vsel %vm249, %v218, 0
  %v257 = vsel %vm249, %v219, 0
  %v260 = vsel %vm249, %v220, 0
  %v263 = vsel %vm249, %v221, 0
  %v266 = vsel %vm249, %v222, 0
  %v269 = vsel %vm249, %v223, 0
  %v272 = vsel %vm249, %v224, 0
  %v275 = vsel %vm249, %v225, 0
  %v278 = vsel %vm249, %v226, 0
  %v281 = vsel %vm249, %v227, 0
  %v284 = vsel %vm249, %v228, 0
  %v287 = vsel %vm249, %v229, 0
  %v290 = vsel %vm249, %v230, 0
  %v293 = vsel %vm249, %v231, 0
  %v296 = vsel %vm249, %v232, 0
  %v299 = vsel %vm249, %v233, 0
  %v302 = vsel %vm249, %v234, 0
  %v305 = vsel %vm249, %v235, 0
  %v308 = vsel %vm249, %v236, 0
  %v311 = vsel %vm249, %v237, 0
  %v314 = vsel %vm249, %v238, 0
  %v317 = vsel %vm249, %v239, 0
  %v320 = vsel %vm249, %v240, 0
  %v323 = vsel %vm249, %v241, 0
  %v326 = vsel %vm249, %v242, 0
  %v329 = vsel %vm249, %v243, 0
  %v332 = vsel %vm249, %v244, 0
  %v335 = vsel %vm249, %v245, 0
  %v338 = vsel %vm249, %v246, 0
  %v341 = vsel %vm249, %v247, 0
  %v344 = vsel %vm249, %v248, 0
  %vm346 = vcmask 1043456
  %v348 = vsel %vm346, %v81, 0
  %350 = vmatprep.subr.bf16.mxu0 0
  %351 = vmatpush1.bf16.msra.mxu0 %v348
  %352 = vmatprep.subr.bf16.mxu0 0
  %353 = vmatpush1.bf16.msra.mxu0 0
  %354 = vmatprep.subr.bf16.mxu0 0
  %355 = vmatpush1.bf16.msra.mxu0 0
  %356 = vmatprep.subr.bf16.mxu0 0
  %357 = vmatpush1.bf16.msra.mxu0 0
  %358 = vmatprep.subr.bf16.mxu0 0
  %359 = vmatpush1.bf16.msra.mxu0 0
  %360 = vmatprep.subr.bf16.mxu0 0
  %361 = vmatpush1.bf16.msra.mxu0 0
  %362 = vmatprep.subr.bf16.mxu0 0
  %363 = vmatpush1.bf16.msra.mxu0 0
  %364 = vmatprep.subr.bf16.mxu0 0
  %365 = vmatpush1.bf16.msra.mxu0 0
  %366 = vmatprep.subr.bf16.mxu0 0
  %367 = vmatpush1.bf16.msra.mxu0 0
  %368 = vmatprep.subr.bf16.mxu0 0
  %369 = vmatpush1.bf16.msra.mxu0 0
  %370 = vmatprep.subr.bf16.mxu0 0
  %371 = vmatpush1.bf16.msra.mxu0 0
  %372 = vmatprep.subr.bf16.mxu0 0
  %373 = vmatpush1.bf16.msra.mxu0 0
  %374 = vmatprep.subr.bf16.mxu0 0
  %375 = vmatpush1.bf16.msra.mxu0 0
  %376 = vmatprep.subr.bf16.mxu0 0
  %377 = vmatpush1.bf16.msra.mxu0 0
  %378 = vmatprep.subr.bf16.mxu0 0
  %379 = vmatpush1.bf16.msra.mxu0 0
  %380 = vmatprep.subr.bf16.mxu0 0
  %381 = vmatpush1.bf16.msra.mxu0 0
  %382 = vmatprep.mubr.bf16.mxu0 0
  %383 = vmatmul.mubr.bf16.gmra.mrb[0].mxu0 %v251
  %v384 = vpop.f32.mrb[0].mxu0
  %v385 = vadd.f32 %v87, %v384
  %v386 = vpop.f32.mrb[0].mxu0
  %v387 = vpop.f32.mrb[0].mxu0
  %v388 = vadd.f32 %v87, %v387
  %v389 = vpop.f32.mrb[0].mxu0
  %390 = vmatprep.mubr.bf16.mxu0 0
  %391 = vmatmul.mubr.bf16.gmra.mrb[0].mxu0 %v254
  %v392 = vpop.f32.mrb[0].mxu0
  %v393 = vadd.f32 %v87, %v392
  %v394 = vpop.f32.mrb[0].mxu0
  %v395 = vpop.f32.mrb[0].mxu0
  %v396 = vadd.f32 %v87, %v395
  %v397 = vpop.f32.mrb[0].mxu0
  %398 = vmatprep.mubr.bf16.mxu0 0
  %399 = vmatmul.mubr.bf16.gmra.mrb[0].mxu0 %v257
  %v400 = vpop.f32.mrb[0].mxu0
  %v401 = vadd.f32 %v87, %v400
  %v402 = vpop.f32.mrb[0].mxu0
  %v403 = vpop.f32.mrb[0].mxu0
  %v404 = vadd.f32 %v87, %v403
  %v405 = vpop.f32.mrb[0].mxu0
  %406 = vmatprep.mubr.bf16.mxu0 0
  %407 = vmatmul.mubr.bf16.gmra.mrb[0].mxu0 %v260
  %v408 = vpop.f32.mrb[0].mxu0
  %v409 = vadd.f32 %v87, %v408
  %v410 = vpop.f32.mrb[0].mxu0
  %v411 = vpop.f32.mrb[0].mxu0
  %v412 = vadd.f32 %v87, %v411
  %v413 = vpop.f32.mrb[0].mxu0
  %414 = vmatprep.mubr.bf16.mxu0 0
  %415 = vmatmul.mubr.bf16.gmra.mrb[0].mxu0 %v263
  %v416 = vpop.f32.mrb[0].mxu0
  %v417 = vadd.f32 %v87, %v416
  %v418 = vpop.f32.mrb[0].mxu0
  %v419 = vpop.f32.mrb[0].mxu0
  %v420 = vadd.f32 %v87, %v419
  %v421 = vpop.f32.mrb[0].mxu0
  %422 = vmatprep.mubr.bf16.mxu0 0
  %423 = vmatmul.mubr.bf16.gmra.mrb[0].mxu0 %v266
  %v424 = vpop.f32.mrb[0].mxu0
  %v425 = vadd.f32 %v87, %v424
  %v426 = vpop.f32.mrb[0].mxu0
  %v427 = vpop.f32.mrb[0].mxu0
  %v428 = vadd.f32 %v87, %v427
  %v429 = vpop.f32.mrb[0].mxu0
  %430 = vmatprep.mubr.bf16.mxu0 0
  %431 = vmatmul.mubr.bf16.gmra.mrb[0].mxu0 %v269
  %v432 = vpop.f32.mrb[0].mxu0
  %v433 = vadd.f32 %v87, %v432
  %v434 = vpop.f32.mrb[0].mxu0
  %v435 = vpop.f32.mrb[0].mxu0
  %v436 = vadd.f32 %v87, %v435
  %v437 = vpop.f32.mrb[0].mxu0
  %438 = vmatprep.mubr.bf16.mxu0 0
  %439 = vmatmul.mubr.bf16.gmra.mrb[0].mxu0 %v272
  %v440 = vpop.f32.mrb[0].mxu0
  %v441 = vadd.f32 %v87, %v440
  %v442 = vpop.f32.mrb[0].mxu0
  %v443 = vpop.f32.mrb[0].mxu0
  %v444 = vadd.f32 %v87, %v443
  %v445 = vpop.f32.mrb[0].mxu0
  %446 = vmatprep.mubr.bf16.mxu0 0
  %447 = vmatmul.mubr.bf16.gmra.mrb[0].mxu0 %v275
  %v448 = vpop.f32.mrb[0].mxu0
  %v449 = vadd.f32 %v87, %v448
  %v450 = vpop.f32.mrb[0].mxu0
  %v451 = vpop.f32.mrb[0].mxu0
  %v452 = vadd.f32 %v87, %v451
  %v453 = vpop.f32.mrb[0].mxu0
  %454 = vmatprep.mubr.bf16.mxu0 0
  %455 = vmatmul.mubr.bf16.gmra.mrb[0].mxu0 %v278
  %v456 = vpop.f32.mrb[0].mxu0
  %v457 = vadd.f32 %v87, %v456
  %v458 = vpop.f32.mrb[0].mxu0
  %v459 = vpop.f32.mrb[0].mxu0
  %v460 = vadd.f32 %v87, %v459
  %v461 = vpop.f32.mrb[0].mxu0
  %462 = vmatprep.mubr.bf16.mxu0 0
  %463 = vmatmul.mubr.bf16.gmra.mrb[0].mxu0 %v281
  %v464 = vpop.f32.mrb[0].mxu0
  %v465 = vadd.f32 %v87, %v464
  %v466 = vpop.f32.mrb[0].mxu0
  %v467 = vpop.f32.mrb[0].mxu0
  %v468 = vadd.f32 %v87, %v467
  %v469 = vpop.f32.mrb[0].mxu0
  %470 = vmatprep.mubr.bf16.mxu0 0
  %471 = vmatmul.mubr.bf16.gmra.mrb[0].mxu0 %v284
  %v472 = vpop.f32.mrb[0].mxu0
  %v473 = vadd.f32 %v87, %v472
  %v474 = vpop.f32.mrb[0].mxu0
  %v475 = vpop.f32.mrb[0].mxu0
  %v476 = vadd.f32 %v87, %v475
  %v477 = vpop.f32.mrb[0].mxu0
  %478 = vmatprep.mubr.bf16.mxu0 0
  %479 = vmatmul.mubr.bf16.gmra.mrb[0].mxu0 %v287
  %v480 = vpop.f32.mrb[0].mxu0
  %v481 = vadd.f32 %v87, %v480
  %v482 = vpop.f32.mrb[0].mxu0
  %v483 = vpop.f32.mrb[0].mxu0
  %v484 = vadd.f32 %v87, %v483
  %v485 = vpop.f32.mrb[0].mxu0
  %486 = vmatprep.mubr.bf16.mxu0 0
  %487 = vmatmul.mubr.bf16.gmra.mrb[0].mxu0 %v290
  %v488 = vpop.f32.mrb[0].mxu0
  %v489 = vadd.f32 %v87, %v488
  %v490 = vpop.f32.mrb[0].mxu0
  %v491 = vpop.f32.mrb[0].mxu0
  %v492 = vadd.f32 %v87, %v491
  %v493 = vpop.f32.mrb[0].mxu0
  %494 = vmatprep.mubr.bf16.mxu0 0
  %495 = vmatmul.mubr.bf16.gmra.mrb[0].mxu0 %v293
  %v496 = vpop.f32.mrb[0].mxu0
  %v497 = vadd.f32 %v87, %v496
  %v498 = vpop.f32.mrb[0].mxu0
  %v499 = vpop.f32.mrb[0].mxu0
  %v500 = vadd.f32 %v87, %v499
  %v501 = vpop.f32.mrb[0].mxu0
  %502 = vmatprep.mubr.bf16.mxu0 0
  %503 = vmatmul.mubr.bf16.gmra.mrb[0].mxu0 %v296
  %v504 = vpop.f32.mrb[0].mxu0
  %v505 = vadd.f32 %v87, %v504
  %v506 = vpop.f32.mrb[0].mxu0
  %v507 = vpop.f32.mrb[0].mxu0
  %v508 = vadd.f32 %v87, %v507
  %v509 = vpop.f32.mrb[0].mxu0
  %510 = vmatprep.mubr.bf16.mxu0 0
  %511 = vmatmul.mubr.bf16.gmra.mrb[0].mxu0 %v299
  %v512 = vpop.f32.mrb[0].mxu0
  %v513 = vadd.f32 %v87, %v512
  %v514 = vpop.f32.mrb[0].mxu0
  %v515 = vpop.f32.mrb[0].mxu0
  %v516 = vadd.f32 %v87, %v515
  %v517 = vpop.f32.mrb[0].mxu0
  %518 = vmatprep.mubr.bf16.mxu0 0
  %519 = vmatmul.mubr.bf16.gmra.mrb[0].mxu0 %v302
  %v520 = vpop.f32.mrb[0].mxu0
  %v521 = vadd.f32 %v87, %v520
  %v522 = vpop.f32.mrb[0].mxu0
  %v523 = vpop.f32.mrb[0].mxu0
  %v524 = vadd.f32 %v87, %v523
  %v525 = vpop.f32.mrb[0].mxu0
  %526 = vmatprep.mubr.bf16.mxu0 0
  %527 = vmatmul.mubr.bf16.gmra.mrb[0].mxu0 %v305
  %v528 = vpop.f32.mrb[0].mxu0
  %v529 = vadd.f32 %v87, %v528
  %v530 = vpop.f32.mrb[0].mxu0
  %v531 = vpop.f32.mrb[0].mxu0
  %v532 = vadd.f32 %v87, %v531
  %v533 = vpop.f32.mrb[0].mxu0
  %534 = vmatprep.mubr.bf16.mxu0 0
  %535 = vmatmul.mubr.bf16.gmra.mrb[0].mxu0 %v308
  %v536 = vpop.f32.mrb[0].mxu0
  %v537 = vadd.f32 %v87, %v536
  %v538 = vpop.f32.mrb[0].mxu0
  %v539 = vpop.f32.mrb[0].mxu0
  %v540 = vadd.f32 %v87, %v539
  %v541 = vpop.f32.mrb[0].mxu0
  %542 = vmatprep.mubr.bf16.mxu0 0
  %543 = vmatmul.mubr.bf16.gmra.mrb[0].mxu0 %v311
  %v544 = vpop.f32.mrb[0].mxu0
  %v545 = vadd.f32 %v87, %v544
  %v546 = vpop.f32.mrb[0].mxu0
  %v547 = vpop.f32.mrb[0].mxu0
  %v548 = vadd.f32 %v87, %v547
  %v549 = vpop.f32.mrb[0].mxu0
  %550 = vmatprep.mubr.bf16.mxu0 0
  %551 = vmatmul.mubr.bf16.gmra.mrb[0].mxu0 %v314
  %v552 = vpop.f32.mrb[0].mxu0
  %v553 = vadd.f32 %v87, %v552
  %v554 = vpop.f32.mrb[0].mxu0
  %v555 = vpop.f32.mrb[0].mxu0
  %v556 = vadd.f32 %v87, %v555
  %v557 = vpop.f32.mrb[0].mxu0
  %558 = vmatprep.mubr.bf16.mxu0 0
  %559 = vmatmul.mubr.bf16.gmra.mrb[0].mxu0 %v317
  %v560 = vpop.f32.mrb[0].mxu0
  %v561 = vadd.f32 %v87, %v560
  %v562 = vpop.f32.mrb[0].mxu0
  %v563 = vpop.f32.mrb[0].mxu0
  %v564 = vadd.f32 %v87, %v563
  %v565 = vpop.f32.mrb[0].mxu0
  %566 = vmatprep.mubr.bf16.mxu0 0
  %567 = vmatmul.mubr.bf16.gmra.mrb[0].mxu0 %v320
  %v568 = vpop.f32.mrb[0].mxu0
  %v569 = vadd.f32 %v87, %v568
  %v570 = vpop.f32.mrb[0].mxu0
  %v571 = vpop.f32.mrb[0].mxu0
  %v572 = vadd.f32 %v87, %v571
  %v573 = vpop.f32.mrb[0].mxu0
  %574 = vmatprep.mubr.bf16.mxu0 0
  %575 = vmatmul.mubr.bf16.gmra.mrb[0].mxu0 %v323
  %v576 = vpop.f32.mrb[0].mxu0
  %v577 = vadd.f32 %v87, %v576
  %v578 = vpop.f32.mrb[0].mxu0
  %v579 = vpop.f32.mrb[0].mxu0
  %v580 = vadd.f32 %v87, %v579
  %v581 = vpop.f32.mrb[0].mxu0
  %582 = vmatprep.mubr.bf16.mxu0 0
  %583 = vmatmul.mubr.bf16.gmra.mrb[0].mxu0 %v326
  %v584 = vpop.f32.mrb[0].mxu0
  %v585 = vadd.f32 %v87, %v584
  %v586 = vpop.f32.mrb[0].mxu0
  %v587 = vpop.f32.mrb[0].mxu0
  %v588 = vadd.f32 %v87, %v587
  %v589 = vpop.f32.mrb[0].mxu0
  %590 = vmatprep.mubr.bf16.mxu0 0
  %591 = vmatmul.mubr.bf16.gmra.mrb[0].mxu0 %v329
  %v592 = vpop.f32.mrb[0].mxu0
  %v593 = vadd.f32 %v87, %v592
  %v594 = vpop.f32.mrb[0].mxu0
  %v595 = vpop.f32.mrb[0].mxu0
  %v596 = vadd.f32 %v87, %v595
  %v597 = vpop.f32.mrb[0].mxu0
  %598 = vmatprep.mubr.bf16.mxu0 0
  %599 = vmatmul.mubr.bf16.gmra.mrb[0].mxu0 %v332
  %v600 = vpop.f32.mrb[0].mxu0
  %v601 = vadd.f32 %v87, %v600
  %v602 = vpop.f32.mrb[0].mxu0
  %v603 = vpop.f32.mrb[0].mxu0
  %v604 = vadd.f32 %v87, %v603
  %v605 = vpop.f32.mrb[0].mxu0
  %606 = vmatprep.mubr.bf16.mxu0 0
  %607 = vmatmul.mubr.bf16.gmra.mrb[0].mxu0 %v335
  %v608 = vpop.f32.mrb[0].mxu0
  %v609 = vadd.f32 %v87, %v608
  %v610 = vpop.f32.mrb[0].mxu0
  %v611 = vpop.f32.mrb[0].mxu0
  %v612 = vadd.f32 %v87, %v611
  %v613 = vpop.f32.mrb[0].mxu0
  %614 = vmatprep.mubr.bf16.mxu0 0
  %615 = vmatmul.mubr.bf16.gmra.mrb[0].mxu0 %v338
  %v616 = vpop.f32.mrb[0].mxu0
  %v617 = vadd.f32 %v87, %v616
  %v618 = vpop.f32.mrb[0].mxu0
  %v619 = vpop.f32.mrb[0].mxu0
  %v620 = vadd.f32 %v87, %v619
  %v621 = vpop.f32.mrb[0].mxu0
  %622 = vmatprep.mubr.bf16.mxu0 0
  %623 = vmatmul.mubr.bf16.gmra.mrb[0].mxu0 %v341
  %v624 = vpop.f32.mrb[0].mxu0
  %v625 = vadd.f32 %v87, %v624
  %v626 = vpop.f32.mrb[0].mxu0
  %v627 = vpop.f32.mrb[0].mxu0
  %v628 = vadd.f32 %v87, %v627
  %v629 = vpop.f32.mrb[0].mxu0
  %630 = vmatprep.mubr.bf16.mxu0 0
  %631 = vmatmul.mubr.bf16.gmra.mrb[0].mxu0 %v344
  %v632 = vpop.f32.mrb[0].mxu0
  %v633 = vadd.f32 %v87, %v632
  %v634 = vpop.f32.mrb[0].mxu0
  %v635 = vpop.f32.mrb[0].mxu0
  %v636 = vadd.f32 %v87, %v635
  %v637 = vpop.f32.mrb[0].mxu0
  %638 = vdwg.mxu0
  %vm639 = vcmask 7168
  %640 = vst.msk [vmem:[%s3] sm:$0xff] %vm639, %v385
  %641 = vst.msk [vmem:[%s3 + $0x8] sm:$0xff] %vm639, %v388
  %642 = vst.msk [vmem:[%s3 + $0x10] sm:$0xff] %vm639, %v393
  %643 = vst.msk [vmem:[%s3 + $0x18] sm:$0xff] %vm639, %v396
  %644 = vst.msk [vmem:[%s3 + $0x20] sm:$0xff] %vm639, %v401
  %645 = vst.msk [vmem:[%s3 + $0x28] sm:$0xff] %vm639, %v404
  %646 = vst.msk [vmem:[%s3 + $0x30] sm:$0xff] %vm639, %v409
  %647 = vst.msk [vmem:[%s3 + $0x38] sm:$0xff] %vm639, %v412
  %648 = vst.msk [vmem:[%s3 + $0x40] sm:$0xff] %vm639, %v417
  %649 = vst.msk [vmem:[%s3 + $0x48] sm:$0xff] %vm639, %v420
  %650 = vst.msk [vmem:[%s3 + $0x50] sm:$0xff] %vm639, %v425
  %651 = vst.msk [vmem:[%s3 + $0x58] sm:$0xff] %vm639, %v428
  %652 = vst.msk [vmem:[%s3 + $0x60] sm:$0xff] %vm639, %v433
  %653 = vst.msk [vmem:[%s3 + $0x68] sm:$0xff] %vm639, %v436
  %654 = vst.msk [vmem:[%s3 + $0x70] sm:$0xff] %vm639, %v441
  %655 = vst.msk [vmem:[%s3 + $0x78] sm:$0xff] %vm639, %v444
  %656 = vst.msk [vmem:[%s3 + $0x80] sm:$0xff] %vm639, %v449
  %657 = vst.msk [vmem:[%s3 + $0x88] sm:$0xff] %vm639, %v452
  %658 = vst.msk [vmem:[%s3 + $0x90] sm:$0xff] %vm639, %v457
  %659 = vst.msk [vmem:[%s3 + $0x98] sm:$0xff] %vm639, %v460
  %660 = vst.msk [vmem:[%s3 + $0xa0] sm:$0xff] %vm639, %v465
  %661 = vst.msk [vmem:[%s3 + $0xa8] sm:$0xff] %vm639, %v468
  %662 = vst.msk [vmem:[%s3 + $0xb0] sm:$0xff] %vm639, %v473
  %663 = vst.msk [vmem:[%s3 + $0xb8] sm:$0xff] %vm639, %v476
  %664 = vst.msk [vmem:[%s3 + $0xc0] sm:$0xff] %vm639, %v481
  %665 = vst.msk [vmem:[%s3 + $0xc8] sm:$0xff] %vm639, %v484
  %666 = vst.msk [vmem:[%s3 + $0xd0] sm:$0xff] %vm639, %v489
  %667 = vst.msk [vmem:[%s3 + $0xd8] sm:$0xff] %vm639, %v492
  %668 = vst.msk [vmem:[%s3 + $0xe0] sm:$0xff] %vm639, %v497
  %669 = vst.msk [vmem:[%s3 + $0xe8] sm:$0xff] %vm639, %v500
  %670 = vst.msk [vmem:[%s3 + $0xf0] sm:$0xff] %vm639, %v505
  %671 = vst.msk [vmem:[%s3 + $0xf8] sm:$0xff] %vm639, %v508
  %672 = vst.msk [vmem:[%s3 + $0x100] sm:$0xff] %vm639, %v513
  %673 = vst.msk [vmem:[%s3 + $0x108] sm:$0xff] %vm639, %v516
  %674 = vst.msk [vmem:[%s3 + $0x110] sm:$0xff] %vm639, %v521
  %675 = vst.msk [vmem:[%s3 + $0x118] sm:$0xff] %vm639, %v524
  %676 = vst.msk [vmem:[%s3 + $0x120] sm:$0xff] %vm639, %v529
  %677 = vst.msk [vmem:[%s3 + $0x128] sm:$0xff] %vm639, %v532
  %678 = vst.msk [vmem:[%s3 + $0x130] sm:$0xff] %vm639, %v537
  %679 = vst.msk [vmem:[%s3 + $0x138] sm:$0xff] %vm639, %v540
  %680 = vst.msk [vmem:[%s3 + $0x140] sm:$0xff] %vm639, %v545
  %681 = vst.msk [vmem:[%s3 + $0x148] sm:$0xff] %vm639, %v548
  %682 = vst.msk [vmem:[%s3 + $0x150] sm:$0xff] %vm639, %v553
  %683 = vst.msk [vmem:[%s3 + $0x158] sm:$0xff] %vm639, %v556
  %684 = vst.msk [vmem:[%s3 + $0x160] sm:$0xff] %vm639, %v561
  %685 = vst.msk [vmem:[%s3 + $0x168] sm:$0xff] %vm639, %v564
  %686 = vst.msk [vmem:[%s3 + $0x170] sm:$0xff] %vm639, %v569
  %687 = vst.msk [vmem:[%s3 + $0x178] sm:$0xff] %vm639, %v572
  %688 = vst.msk [vmem:[%s3 + $0x180] sm:$0xff] %vm639, %v577
  %689 = vst.msk [vmem:[%s3 + $0x188] sm:$0xff] %vm639, %v580
  %690 = vst.msk [vmem:[%s3 + $0x190] sm:$0xff] %vm639, %v585
  %691 = vst.msk [vmem:[%s3 + $0x198] sm:$0xff] %vm639, %v588
  %692 = vst.msk [vmem:[%s3 + $0x1a0] sm:$0xff] %vm639, %v593
  %693 = vst.msk [vmem:[%s3 + $0x1a8] sm:$0xff] %vm639, %v596
  %694 = vst.msk [vmem:[%s3 + $0x1b0] sm:$0xff] %vm639, %v601
  %695 = vst.msk [vmem:[%s3 + $0x1b8] sm:$0xff] %vm639, %v604
  %696 = vst.msk [vmem:[%s3 + $0x1c0] sm:$0xff] %vm639, %v609
  %697 = vst.msk [vmem:[%s3 + $0x1c8] sm:$0xff] %vm639, %v612
  %698 = vst.msk [vmem:[%s3 + $0x1d0] sm:$0xff] %vm639, %v617
  %699 = vst.msk [vmem:[%s3 + $0x1d8] sm:$0xff] %vm639, %v620
  %700 = vst.msk [vmem:[%s3 + $0x1e0] sm:$0xff] %vm639, %v625
  %701 = vst.msk [vmem:[%s3 + $0x1e8] sm:$0xff] %vm639, %v628
  %702 = vst.msk [vmem:[%s3 + $0x1f0] sm:$0xff] %vm639, %v633
  %703 = vst.msk [vmem:[%s3 + $0x1f8] sm:$0xff] %vm639, %v636
  // Predicated region
  $region14: #{decoder_forward.25} parent=0 // pred_check
    _
  $region15: #{decoder_forward.25} parent=0 // pred_check_branch
    %705 = sbr.rel (0) target = $region17
  $region16: #{decoder_forward.25} parent=0 // pred_region
    _
  $region17: #{decoder_forward.25} parent=0 // pred_fallthru
    _
  // Predicated region
  $region18: #{decoder_forward.25} parent=0 // pred_check
    _
  $region19: #{decoder_forward.25} parent=0 // pred_check_branch
    %707 = sbr.rel (0) target = $region21
  $region20: #{decoder_forward.25} parent=0 // pred_region
    _
  $region21: #{decoder_forward.25} parent=0 // pred_fallthru
    _

</llo_original>
